<compile_context>
chip_gen: v7x
topology: tpu7x:2x2x1
jax: 0.10.0
libtpu: 0.0.40
codegen_flags: <defaults>
</compile_context>

<pallas_src>
import functools

import jax
import jax.numpy as jnp
from jax.experimental import pallas as pl
from jax.experimental.pallas import tpu as pltpu


_VMEM_LIMIT_BYTES = 48 * 1024 * 1024     # safe on v5e/v6e (128 MiB) and v7x (64 MiB)
_VMEM_BLOCK_BUDGET = 24 * 1024 * 1024    # padded bytes for double-buffered blocks


def _round_up(n, m):
    return (n + m - 1) // m * m


def _divisors(n):
    return [d for d in range(1, n + 1) if n % d == 0]


def _sublane(dtype):
    # Native sublane tile: 8 rows for 4-byte, 16 for 2-byte, 32 for 1-byte.
    return max(8, 32 // jnp.dtype(dtype).itemsize)


def _padded_bytes(rows, cols, dtype):
    # Physical VMEM footprint of a (rows, cols) tile with (sublane, 128) padding.
    d = jnp.dtype(dtype)
    return _round_up(rows, _sublane(d)) * _round_up(cols, 128) * d.itemsize


def _choose_hb(h, w, s):
    # Smallest divisor of H whose flattened row-group gives >=128 output lanes.
    for hb in _divisors(h):
        if hb * w * s * s >= 128:
            return hb
    return h


def _choose_tr(r, hg, kin):
    # Row-block: multiple of Hg (whole depth slices), second-to-last-dim
    # friendly (multiple of 8 or the full extent), bounded so the f32
    # accumulator and the unrolled store loop stay small.
    cands = [t for t in _divisors(r) if t % hg == 0 and (t % 8 == 0 or t == r)]
    good = [t for t in cands if t // hg <= 32 and t * kin <= 4096]
    return max(good) if good else min(cands)


def _choose_tc(c_total, td, in_unit, out_unit, p_bytes):
    tc = 1
    for d in _divisors(c_total):
        if d > 8 or d * td > 64:          # bound unrolled code size
            continue
        if 2 * d * (in_unit + out_unit) + 2 * p_bytes <= _VMEM_BLOCK_BUDGET:
            tc = d
    return tc


def _interleave_matrices(s, hb, w, dtype):
    # P[sh*s+sw][ht*W + w, (ht*s+sh)*(W*s) + w*s + sw] = 1
    kin = hb * w
    lout = kin * s * s
    k = jnp.arange(kin)
    ht = k // w
    ww = k % w
    cols = jnp.arange(lout)[None, :]
    mats = []
    for sh in range(s):
        for sw in range(s):
            tgt = (ht * s + sh) * (w * s) + ww * s + sw
            mats.append((cols == tgt[:, None]).astype(dtype))
    return jnp.stack(mats, axis=0)                 # (s^2, kin, lout)


def _pixel_shuffle3d_kernel(x_ref, p_ref, o_ref, *, scale, hg):
    # x_ref: (tc, s^3, tr, kin)          input block (batch dim squeezed)
    # p_ref: (s^2, kin, kin*s^2)         one-hot in-plane interleave matrices
    # o_ref: (tc, tr*s, kin*s^2)         output block (lane-dense row groups)
    s = scale
    tc, _, tr, _ = x_ref.shape
    s2 = s * s
    td = tr // hg

    # Tiny constant operand; hoist its s^2 slices out of all loops.
    p = [p_ref[j] for j in range(s2)]

    for c in range(tc):                            # unrolled, tc <= 8
        for sd in range(s):
            acc = None
            for j in range(s2):                    # j = sh * s + sw
                ci = sd * s2 + j
                lhs = x_ref[c, ci]                 # (tr, kin), input dtype
                if lhs.dtype != p[j].dtype:
                    lhs = lhs.astype(p[j].dtype)
                part = jnp.dot(lhs, p[j], preferred_element_type=jnp.float32)
                acc = part if acc is None else acc + part
            accd = acc.astype(o_ref.dtype)         # (tr, lout); cast is exact
            # Depth-phase interleave = addressing only: store each contiguous
            # (hg, lout) slab once at rows (dl*s + sd)*hg .. +hg.
            for dl in range(td):
                row = (dl * s + sd) * hg
                o_ref[c, row:row + hg, :] = accd[dl * hg:(dl + 1) * hg, :]


@functools.partial(jax.jit, static_argnames=("scale",))
def pixel_shuffle3d(x, scale):
    s = int(scale)
    if s == 1:
        return x
    b, cin, d, h, w = x.shape
    if cin % (s ** 3) != 0:
        raise ValueError(f"channels {cin} not divisible by scale^3 = {s ** 3}")
    c = cin // s ** 3

    hb = _choose_hb(h, w, s)        # rows per flattened row-group
    hg = h // hb                    # row-groups per plane
    kin = hb * w                    # input lanes  (matmul contraction dim)
    lout = kin * s * s              # output lanes (>= 128 when possible)
    r = d * hg                      # fused (depth, row-group) axis

    p_dtype = x.dtype if jnp.issubdtype(x.dtype, jnp.floating) else jnp.float32

    # Free contiguous views: no data movement outside the kernel.
    x6 = x.reshape(b, c, s ** 3, r, kin)
    pmats = _interleave_matrices(s, hb, w, p_dtype)

    # Tile sizes from padded-VMEM accounting.
    tr = _choose_tr(r, hg, kin)
    td = tr // hg
    in_unit = (s ** 3) * _padded_bytes(tr, kin, x.dtype)
    out_unit = _padded_bytes(tr * s, lout, x.dtype)
    p_bytes = (s * s) * _padded_bytes(kin, lout, p_dtype)
    tc = _choose_tc(c, td, in_unit, out_unit, p_bytes)

    # v7x has 2 TensorCores: keep at least two grid steps when possible.
    if b * (c // tc) * (r // tr) < 2:
        smaller = [t for t in _divisors(c) if t < tc]
        if smaller:
            tc = max(smaller)

    kernel = functools.partial(_pixel_shuffle3d_kernel, scale=s, hg=hg)
    y = pl.pallas_call(
        kernel,
        out_shape=jax.ShapeDtypeStruct((b, c, r * s, lout), x.dtype),
        grid_spec=pltpu.PrefetchScalarGridSpec(
            num_scalar_prefetch=0,
            grid=(b, c // tc, r // tr),
            in_specs=[
                pl.BlockSpec((None, tc, s ** 3, tr, kin),
                             lambda bi, ci, ri: (bi, ci, 0, ri, 0)),
                pl.BlockSpec((s * s, kin, lout),
                             lambda bi, ci, ri: (0, 0, 0)),
            ],
            out_specs=pl.BlockSpec((None, tc, tr * s, lout),
                                   lambda bi, ci, ri: (bi, ci, ri, 0)),
        ),
        compiler_params=pltpu.CompilerParams(
            dimension_semantics=("parallel", "parallel", "parallel"),
            vmem_limit_bytes=_VMEM_LIMIT_BYTES,
        ),
    )(x6, pmats)
    return y.reshape(b, c, d * s, h * s, w * s)


class PixelShuffle3D:
    """JAX/Pallas port of the PyTorch PixelShuffle3D module."""

    def __init__(self, scale):
        self.scale = int(scale)

    def __call__(self, x):
        return pixel_shuffle3d(x, self.scale)


def _reference_pixel_shuffle3d(x, s):
    # Pure-JAX mirror of the PyTorch view/permute/view chain.
    b, cin, d, h, w = x.shape
    c = cin // (s ** 3)
    xv = x.reshape(b, c, s, s, s, d, h, w)
    xv = jnp.transpose(xv, (0, 1, 5, 2, 6, 3, 7, 4))
    return xv.reshape(b, c, d * s, h * s, w * s)


if __name__ == "__main__":
    key = jax.random.PRNGKey(0)
    k1, k2 = jax.random.split(key)

    scale = 2
    ps = PixelShuffle3D(scale)

    # (B, C*s^3, D, H, W) = (2, 32, 4, 8, 8) -> (2, 4, 8, 16, 16), f32
    x = jax.random.normal(k1, (2, 4 * scale ** 3, 4, 8, 8), jnp.float32)
    y = jax.block_until_ready(ps(x))
    y_ref = _reference_pixel_shuffle3d(x, scale)
    assert y.shape == (2, 4, 8, 16, 16), y.shape
    assert jnp.allclose(y, y_ref, atol=1e-6, rtol=1e-6)

    # bf16 path, different spatial shape: (1, 16, 2, 8, 16) -> (1, 2, 4, 16, 32)
    xb = jax.random.normal(k2, (1, 2 * scale ** 3, 2, 8, 16), jnp.bfloat16)
    yb = jax.block_until_ready(ps(xb))
    yb_ref = _reference_pixel_shuffle3d(xb, scale)
    assert yb.shape == (1, 2, 4, 16, 32), yb.shape
    assert jnp.allclose(yb.astype(jnp.float32), yb_ref.astype(jnp.float32),
                        atol=1e-6, rtol=1e-6)

    print("KERNEL_OK")
</pallas_src>

<mosaic_0001>
module attributes {stable_mosaic.version = 11 : i64} {
  func.func @_pixel_shuffle3d_kernel(%arg0: i32, %arg1: i32, %arg2: i32, %arg3: memref<1x4x8x8x32xf32, #tpu.memory_space<vmem>>, %arg4: memref<4x32x128xf32, #tpu.memory_space<vmem>>, %arg5: memref<1x4x16x128xf32, #tpu.memory_space<vmem>>) attributes {dimension_semantics = [#tpu.dimension_semantics<parallel>, #tpu.dimension_semantics<parallel>, #tpu.dimension_semantics<parallel>], iteration_bounds = array<i64: 2, 1, 1>, scalar_prefetch = 0 : i64, scratch_operands = 0 : i64, tpu.core_type = #tpu.core_type<tc>, window_params = [{transform_indices = @transform_0, window_bounds = array<i64: 1, 4, 8, 8, 32>}, {pipeline_mode = #tpu.pipeline_mode<synchronous>, transform_indices = @transform_1, window_bounds = array<i64: 4, 32, 128>}, {transform_indices = @transform_2, window_bounds = array<i64: 1, 4, 16, 128>}]} {
    %c0 = arith.constant 0 : index
    %c0_0 = arith.constant 0 : index
    %c0_1 = arith.constant 0 : index
    %0 = vector.load %arg4[%c0, %c0_0, %c0_1] : memref<4x32x128xf32, #tpu.memory_space<vmem>>, vector<1x32x128xf32>
    %1 = vector.shape_cast %0 : vector<1x32x128xf32> to vector<32x128xf32>
    %c1 = arith.constant 1 : index
    %c0_2 = arith.constant 0 : index
    %c0_3 = arith.constant 0 : index
    %2 = vector.load %arg4[%c1, %c0_2, %c0_3] : memref<4x32x128xf32, #tpu.memory_space<vmem>>, vector<1x32x128xf32>
    %3 = vector.shape_cast %2 : vector<1x32x128xf32> to vector<32x128xf32>
    %c2 = arith.constant 2 : index
    %c0_4 = arith.constant 0 : index
    %c0_5 = arith.constant 0 : index
    %4 = vector.load %arg4[%c2, %c0_4, %c0_5] : memref<4x32x128xf32, #tpu.memory_space<vmem>>, vector<1x32x128xf32>
    %5 = vector.shape_cast %4 : vector<1x32x128xf32> to vector<32x128xf32>
    %c3 = arith.constant 3 : index
    %c0_6 = arith.constant 0 : index
    %c0_7 = arith.constant 0 : index
    %6 = vector.load %arg4[%c3, %c0_6, %c0_7] : memref<4x32x128xf32, #tpu.memory_space<vmem>>, vector<1x32x128xf32>
    %7 = vector.shape_cast %6 : vector<1x32x128xf32> to vector<32x128xf32>
    %c0_8 = arith.constant 0 : index
    %c0_9 = arith.constant 0 : index
    %c0_10 = arith.constant 0 : index
    %c0_11 = arith.constant 0 : index
    %c0_12 = arith.constant 0 : index
    %8 = vector.load %arg3[%c0_8, %c0_9, %c0_10, %c0_11, %c0_12] : memref<1x4x8x8x32xf32, #tpu.memory_space<vmem>>, vector<1x1x1x8x32xf32>
    %9 = vector.shape_cast %8 : vector<1x1x1x8x32xf32> to vector<8x32xf32>
    %cst = arith.constant dense<0.000000e+00> : vector<8x128xf32>
    %10 = tpu.matmul %9, %1, %cst {dimension_numbers = #tpu.dot_dimension_numbers<[1], [0], [0], [1], [0, 0, 1, 1], [], []>} : vector<8x32xf32>, vector<32x128xf32>, vector<8x128xf32> -> vector<8x128xf32>
    %c0_13 = arith.constant 0 : index
    %c0_14 = arith.constant 0 : index
    %c1_15 = arith.constant 1 : index
    %c0_16 = arith.constant 0 : index
    %c0_17 = arith.constant 0 : index
    %11 = vector.load %arg3[%c0_13, %c0_14, %c1_15, %c0_16, %c0_17] : memref<1x4x8x8x32xf32, #tpu.memory_space<vmem>>, vector<1x1x1x8x32xf32>
    %12 = vector.shape_cast %11 : vector<1x1x1x8x32xf32> to vector<8x32xf32>
    %cst_18 = arith.constant dense<0.000000e+00> : vector<8x128xf32>
    %13 = tpu.matmul %12, %3, %cst_18 {dimension_numbers = #tpu.dot_dimension_numbers<[1], [0], [0], [1], [0, 0, 1, 1], [], []>} : vector<8x32xf32>, vector<32x128xf32>, vector<8x128xf32> -> vector<8x128xf32>
    %14 = arith.addf %10, %13 : vector<8x128xf32>
    %c0_19 = arith.constant 0 : index
    %c0_20 = arith.constant 0 : index
    %c2_21 = arith.constant 2 : index
    %c0_22 = arith.constant 0 : index
    %c0_23 = arith.constant 0 : index
    %15 = vector.load %arg3[%c0_19, %c0_20, %c2_21, %c0_22, %c0_23] : memref<1x4x8x8x32xf32, #tpu.memory_space<vmem>>, vector<1x1x1x8x32xf32>
    %16 = vector.shape_cast %15 : vector<1x1x1x8x32xf32> to vector<8x32xf32>
    %cst_24 = arith.constant dense<0.000000e+00> : vector<8x128xf32>
    %17 = tpu.matmul %16, %5, %cst_24 {dimension_numbers = #tpu.dot_dimension_numbers<[1], [0], [0], [1], [0, 0, 1, 1], [], []>} : vector<8x32xf32>, vector<32x128xf32>, vector<8x128xf32> -> vector<8x128xf32>
    %18 = arith.addf %14, %17 : vector<8x128xf32>
    %c0_25 = arith.constant 0 : index
    %c0_26 = arith.constant 0 : index
    %c3_27 = arith.constant 3 : index
    %c0_28 = arith.constant 0 : index
    %c0_29 = arith.constant 0 : index
    %19 = vector.load %arg3[%c0_25, %c0_26, %c3_27, %c0_28, %c0_29] : memref<1x4x8x8x32xf32, #tpu.memory_space<vmem>>, vector<1x1x1x8x32xf32>
    %20 = vector.shape_cast %19 : vector<1x1x1x8x32xf32> to vector<8x32xf32>
    %cst_30 = arith.constant dense<0.000000e+00> : vector<8x128xf32>
    %21 = tpu.matmul %20, %7, %cst_30 {dimension_numbers = #tpu.dot_dimension_numbers<[1], [0], [0], [1], [0, 0, 1, 1], [], []>} : vector<8x32xf32>, vector<32x128xf32>, vector<8x128xf32> -> vector<8x128xf32>
    %22 = arith.addf %18, %21 : vector<8x128xf32>
    %23 = vector.extract_strided_slice %22 {offsets = [0, 0], sizes = [2, 128], strides = [1, 1]} : vector<8x128xf32> to vector<2x128xf32>
    %c0_31 = arith.constant 0 : index
    %c0_32 = arith.constant 0 : index
    %c0_33 = arith.constant 0 : index
    %c0_34 = arith.constant 0 : index
    %24 = vector.load %arg5[%c0_31, %c0_32, %c0_33, %c0_34] : memref<1x4x16x128xf32, #tpu.memory_space<vmem>>, vector<1x1x2x128xf32>
    %25 = vector.shape_cast %24 : vector<1x1x2x128xf32> to vector<2x128xf32>
    %26 = vector.shape_cast %23 : vector<2x128xf32> to vector<1x1x2x128xf32>
    tpu.vector_store %arg5[%c0_31, %c0_32, %c0_33, %c0_34], %26 {strides = array<i32>} : memref<1x4x16x128xf32, #tpu.memory_space<vmem>>, vector<1x1x2x128xf32>,
    %27 = vector.extract_strided_slice %22 {offsets = [2, 0], sizes = [2, 128], strides = [1, 1]} : vector<8x128xf32> to vector<2x128xf32>
    %c0_35 = arith.constant 0 : index
    %c0_36 = arith.constant 0 : index
    %c4 = arith.constant 4 : index
    %c0_37 = arith.constant 0 : index
    %28 = vector.load %arg5[%c0_35, %c0_36, %c4, %c0_37] : memref<1x4x16x128xf32, #tpu.memory_space<vmem>>, vector<1x1x2x128xf32>
    %29 = vector.shape_cast %28 : vector<1x1x2x128xf32> to vector<2x128xf32>
    %30 = vector.shape_cast %27 : vector<2x128xf32> to vector<1x1x2x128xf32>
    tpu.vector_store %arg5[%c0_35, %c0_36, %c4, %c0_37], %30 {strides = array<i32>} : memref<1x4x16x128xf32, #tpu.memory_space<vmem>>, vector<1x1x2x128xf32>,
    %31 = vector.extract_strided_slice %22 {offsets = [4, 0], sizes = [2, 128], strides = [1, 1]} : vector<8x128xf32> to vector<2x128xf32>
    %c0_38 = arith.constant 0 : index
    %c0_39 = arith.constant 0 : index
    %c8 = arith.constant 8 : index
    %c0_40 = arith.constant 0 : index
    %32 = vector.load %arg5[%c0_38, %c0_39, %c8, %c0_40] : memref<1x4x16x128xf32, #tpu.memory_space<vmem>>, vector<1x1x2x128xf32>
    %33 = vector.shape_cast %32 : vector<1x1x2x128xf32> to vector<2x128xf32>
    %34 = vector.shape_cast %31 : vector<2x128xf32> to vector<1x1x2x128xf32>
    tpu.vector_store %arg5[%c0_38, %c0_39, %c8, %c0_40], %34 {strides = array<i32>} : memref<1x4x16x128xf32, #tpu.memory_space<vmem>>, vector<1x1x2x128xf32>,
    %35 = vector.extract_strided_slice %22 {offsets = [6, 0], sizes = [2, 128], strides = [1, 1]} : vector<8x128xf32> to vector<2x128xf32>
    %c0_41 = arith.constant 0 : index
    %c0_42 = arith.constant 0 : index
    %c12 = arith.constant 12 : index
    %c0_43 = arith.constant 0 : index
    %36 = vector.load %arg5[%c0_41, %c0_42, %c12, %c0_43] : memref<1x4x16x128xf32, #tpu.memory_space<vmem>>, vector<1x1x2x128xf32>
    %37 = vector.shape_cast %36 : vector<1x1x2x128xf32> to vector<2x128xf32>
    %38 = vector.shape_cast %35 : vector<2x128xf32> to vector<1x1x2x128xf32>
    tpu.vector_store %arg5[%c0_41, %c0_42, %c12, %c0_43], %38 {strides = array<i32>} : memref<1x4x16x128xf32, #tpu.memory_space<vmem>>, vector<1x1x2x128xf32>,
    %c0_44 = arith.constant 0 : index
    %c0_45 = arith.constant 0 : index
    %c4_46 = arith.constant 4 : index
    %c0_47 = arith.constant 0 : index
    %c0_48 = arith.constant 0 : index
    %39 = vector.load %arg3[%c0_44, %c0_45, %c4_46, %c0_47, %c0_48] : memref<1x4x8x8x32xf32, #tpu.memory_space<vmem>>, vector<1x1x1x8x32xf32>
    %40 = vector.shape_cast %39 : vector<1x1x1x8x32xf32> to vector<8x32xf32>
    %cst_49 = arith.constant dense<0.000000e+00> : vector<8x128xf32>
    %41 = tpu.matmul %40, %1, %cst_49 {dimension_numbers = #tpu.dot_dimension_numbers<[1], [0], [0], [1], [0, 0, 1, 1], [], []>} : vector<8x32xf32>, vector<32x128xf32>, vector<8x128xf32> -> vector<8x128xf32>
    %c0_50 = arith.constant 0 : index
    %c0_51 = arith.constant 0 : index
    %c5 = arith.constant 5 : index
    %c0_52 = arith.constant 0 : index
    %c0_53 = arith.constant 0 : index
    %42 = vector.load %arg3[%c0_50, %c0_51, %c5, %c0_52, %c0_53] : memref<1x4x8x8x32xf32, #tpu.memory_space<vmem>>, vector<1x1x1x8x32xf32>
    %43 = vector.shape_cast %42 : vector<1x1x1x8x32xf32> to vector<8x32xf32>
    %cst_54 = arith.constant dense<0.000000e+00> : vector<8x128xf32>
    %44 = tpu.matmul %43, %3, %cst_54 {dimension_numbers = #tpu.dot_dimension_numbers<[1], [0], [0], [1], [0, 0, 1, 1], [], []>} : vector<8x32xf32>, vector<32x128xf32>, vector<8x128xf32> -> vector<8x128xf32>
    %45 = arith.addf %41, %44 : vector<8x128xf32>
    %c0_55 = arith.constant 0 : index
    %c0_56 = arith.constant 0 : index
    %c6 = arith.constant 6 : index
    %c0_57 = arith.constant 0 : index
    %c0_58 = arith.constant 0 : index
    %46 = vector.load %arg3[%c0_55, %c0_56, %c6, %c0_57, %c0_58] : memref<1x4x8x8x32xf32, #tpu.memory_space<vmem>>, vector<1x1x1x8x32xf32>
    %47 = vector.shape_cast %46 : vector<1x1x1x8x32xf32> to vector<8x32xf32>
    %cst_59 = arith.constant dense<0.000000e+00> : vector<8x128xf32>
    %48 = tpu.matmul %47, %5, %cst_59 {dimension_numbers = #tpu.dot_dimension_numbers<[1], [0], [0], [1], [0, 0, 1, 1], [], []>} : vector<8x32xf32>, vector<32x128xf32>, vector<8x128xf32> -> vector<8x128xf32>
    %49 = arith.addf %45, %48 : vector<8x128xf32>
    %c0_60 = arith.constant 0 : index
    %c0_61 = arith.constant 0 : index
    %c7 = arith.constant 7 : index
    %c0_62 = arith.constant 0 : index
    %c0_63 = arith.constant 0 : index
    %50 = vector.load %arg3[%c0_60, %c0_61, %c7, %c0_62, %c0_63] : memref<1x4x8x8x32xf32, #tpu.memory_space<vmem>>, vector<1x1x1x8x32xf32>
    %51 = vector.shape_cast %50 : vector<1x1x1x8x32xf32> to vector<8x32xf32>
    %cst_64 = arith.constant dense<0.000000e+00> : vector<8x128xf32>
    %52 = tpu.matmul %51, %7, %cst_64 {dimension_numbers = #tpu.dot_dimension_numbers<[1], [0], [0], [1], [0, 0, 1, 1], [], []>} : vector<8x32xf32>, vector<32x128xf32>, vector<8x128xf32> -> vector<8x128xf32>
    %53 = arith.addf %49, %52 : vector<8x128xf32>
    %54 = vector.extract_strided_slice %53 {offsets = [0, 0], sizes = [2, 128], strides = [1, 1]} : vector<8x128xf32> to vector<2x128xf32>
    %c0_65 = arith.constant 0 : index
    %c0_66 = arith.constant 0 : index
    %c2_67 = arith.constant 2 : index
    %c0_68 = arith.constant 0 : index
    %55 = vector.load %arg5[%c0_65, %c0_66, %c2_67, %c0_68] : memref<1x4x16x128xf32, #tpu.memory_space<vmem>>, vector<1x1x2x128xf32>
    %56 = vector.shape_cast %55 : vector<1x1x2x128xf32> to vector<2x128xf32>
    %57 = vector.shape_cast %54 : vector<2x128xf32> to vector<1x1x2x128xf32>
    tpu.vector_store %arg5[%c0_65, %c0_66, %c2_67, %c0_68], %57 {strides = array<i32>} : memref<1x4x16x128xf32, #tpu.memory_space<vmem>>, vector<1x1x2x128xf32>,
    %58 = vector.extract_strided_slice %53 {offsets = [2, 0], sizes = [2, 128], strides = [1, 1]} : vector<8x128xf32> to vector<2x128xf32>
    %c0_69 = arith.constant 0 : index
    %c0_70 = arith.constant 0 : index
    %c6_71 = arith.constant 6 : index
    %c0_72 = arith.constant 0 : index
    %59 = vector.load %arg5[%c0_69, %c0_70, %c6_71, %c0_72] : memref<1x4x16x128xf32, #tpu.memory_space<vmem>>, vector<1x1x2x128xf32>
    %60 = vector.shape_cast %59 : vector<1x1x2x128xf32> to vector<2x128xf32>
    %61 = vector.shape_cast %58 : vector<2x128xf32> to vector<1x1x2x128xf32>
    tpu.vector_store %arg5[%c0_69, %c0_70, %c6_71, %c0_72], %61 {strides = array<i32>} : memref<1x4x16x128xf32, #tpu.memory_space<vmem>>, vector<1x1x2x128xf32>,
    %62 = vector.extract_strided_slice %53 {offsets = [4, 0], sizes = [2, 128], strides = [1, 1]} : vector<8x128xf32> to vector<2x128xf32>
    %c0_73 = arith.constant 0 : index
    %c0_74 = arith.constant 0 : index
    %c10 = arith.constant 10 : index
    %c0_75 = arith.constant 0 : index
    %63 = vector.load %arg5[%c0_73, %c0_74, %c10, %c0_75] : memref<1x4x16x128xf32, #tpu.memory_space<vmem>>, vector<1x1x2x128xf32>
    %64 = vector.shape_cast %63 : vector<1x1x2x128xf32> to vector<2x128xf32>
    %65 = vector.shape_cast %62 : vector<2x128xf32> to vector<1x1x2x128xf32>
    tpu.vector_store %arg5[%c0_73, %c0_74, %c10, %c0_75], %65 {strides = array<i32>} : memref<1x4x16x128xf32, #tpu.memory_space<vmem>>, vector<1x1x2x128xf32>,
    %66 = vector.extract_strided_slice %53 {offsets = [6, 0], sizes = [2, 128], strides = [1, 1]} : vector<8x128xf32> to vector<2x128xf32>
    %c0_76 = arith.constant 0 : index
    %c0_77 = arith.constant 0 : index
    %c14 = arith.constant 14 : index
    %c0_78 = arith.constant 0 : index
    %67 = vector.load %arg5[%c0_76, %c0_77, %c14, %c0_78] : memref<1x4x16x128xf32, #tpu.memory_space<vmem>>, vector<1x1x2x128xf32>
    %68 = vector.shape_cast %67 : vector<1x1x2x128xf32> to vector<2x128xf32>
    %69 = vector.shape_cast %66 : vector<2x128xf32> to vector<1x1x2x128xf32>
    tpu.vector_store %arg5[%c0_76, %c0_77, %c14, %c0_78], %69 {strides = array<i32>} : memref<1x4x16x128xf32, #tpu.memory_space<vmem>>, vector<1x1x2x128xf32>,
    %c0_79 = arith.constant 0 : index
    %c1_80 = arith.constant 1 : index
    %c0_81 = arith.constant 0 : index
    %c0_82 = arith.constant 0 : index
    %c0_83 = arith.constant 0 : index
    %70 = vector.load %arg3[%c0_79, %c1_80, %c0_81, %c0_82, %c0_83] : memref<1x4x8x8x32xf32, #tpu.memory_space<vmem>>, vector<1x1x1x8x32xf32>
    %71 = vector.shape_cast %70 : vector<1x1x1x8x32xf32> to vector<8x32xf32>
    %cst_84 = arith.constant dense<0.000000e+00> : vector<8x128xf32>
    %72 = tpu.matmul %71, %1, %cst_84 {dimension_numbers = #tpu.dot_dimension_numbers<[1], [0], [0], [1], [0, 0, 1, 1], [], []>} : vector<8x32xf32>, vector<32x128xf32>, vector<8x128xf32> -> vector<8x128xf32>
    %c0_85 = arith.constant 0 : index
    %c1_86 = arith.constant 1 : index
    %c1_87 = arith.constant 1 : index
    %c0_88 = arith.constant 0 : index
    %c0_89 = arith.constant 0 : index
    %73 = vector.load %arg3[%c0_85, %c1_86, %c1_87, %c0_88, %c0_89] : memref<1x4x8x8x32xf32, #tpu.memory_space<vmem>>, vector<1x1x1x8x32xf32>
    %74 = vector.shape_cast %73 : vector<1x1x1x8x32xf32> to vector<8x32xf32>
    %cst_90 = arith.constant dense<0.000000e+00> : vector<8x128xf32>
    %75 = tpu.matmul %74, %3, %cst_90 {dimension_numbers = #tpu.dot_dimension_numbers<[1], [0], [0], [1], [0, 0, 1, 1], [], []>} : vector<8x32xf32>, vector<32x128xf32>, vector<8x128xf32> -> vector<8x128xf32>
    %76 = arith.addf %72, %75 : vector<8x128xf32>
    %c0_91 = arith.constant 0 : index
    %c1_92 = arith.constant 1 : index
    %c2_93 = arith.constant 2 : index
    %c0_94 = arith.constant 0 : index
    %c0_95 = arith.constant 0 : index
    %77 = vector.load %arg3[%c0_91, %c1_92, %c2_93, %c0_94, %c0_95] : memref<1x4x8x8x32xf32, #tpu.memory_space<vmem>>, vector<1x1x1x8x32xf32>
    %78 = vector.shape_cast %77 : vector<1x1x1x8x32xf32> to vector<8x32xf32>
    %cst_96 = arith.constant dense<0.000000e+00> : vector<8x128xf32>
    %79 = tpu.matmul %78, %5, %cst_96 {dimension_numbers = #tpu.dot_dimension_numbers<[1], [0], [0], [1], [0, 0, 1, 1], [], []>} : vector<8x32xf32>, vector<32x128xf32>, vector<8x128xf32> -> vector<8x128xf32>
    %80 = arith.addf %76, %79 : vector<8x128xf32>
    %c0_97 = arith.constant 0 : index
    %c1_98 = arith.constant 1 : index
    %c3_99 = arith.constant 3 : index
    %c0_100 = arith.constant 0 : index
    %c0_101 = arith.constant 0 : index
    %81 = vector.load %arg3[%c0_97, %c1_98, %c3_99, %c0_100, %c0_101] : memref<1x4x8x8x32xf32, #tpu.memory_space<vmem>>, vector<1x1x1x8x32xf32>
    %82 = vector.shape_cast %81 : vector<1x1x1x8x32xf32> to vector<8x32xf32>
    %cst_102 = arith.constant dense<0.000000e+00> : vector<8x128xf32>
    %83 = tpu.matmul %82, %7, %cst_102 {dimension_numbers = #tpu.dot_dimension_numbers<[1], [0], [0], [1], [0, 0, 1, 1], [], []>} : vector<8x32xf32>, vector<32x128xf32>, vector<8x128xf32> -> vector<8x128xf32>
    %84 = arith.addf %80, %83 : vector<8x128xf32>
    %85 = vector.extract_strided_slice %84 {offsets = [0, 0], sizes = [2, 128], strides = [1, 1]} : vector<8x128xf32> to vector<2x128xf32>
    %c0_103 = arith.constant 0 : index
    %c1_104 = arith.constant 1 : index
    %c0_105 = arith.constant 0 : index
    %c0_106 = arith.constant 0 : index
    %86 = vector.load %arg5[%c0_103, %c1_104, %c0_105, %c0_106] : memref<1x4x16x128xf32, #tpu.memory_space<vmem>>, vector<1x1x2x128xf32>
    %87 = vector.shape_cast %86 : vector<1x1x2x128xf32> to vector<2x128xf32>
    %88 = vector.shape_cast %85 : vector<2x128xf32> to vector<1x1x2x128xf32>
    tpu.vector_store %arg5[%c0_103, %c1_104, %c0_105, %c0_106], %88 {strides = array<i32>} : memref<1x4x16x128xf32, #tpu.memory_space<vmem>>, vector<1x1x2x128xf32>,
    %89 = vector.extract_strided_slice %84 {offsets = [2, 0], sizes = [2, 128], strides = [1, 1]} : vector<8x128xf32> to vector<2x128xf32>
    %c0_107 = arith.constant 0 : index
    %c1_108 = arith.constant 1 : index
    %c4_109 = arith.constant 4 : index
    %c0_110 = arith.constant 0 : index
    %90 = vector.load %arg5[%c0_107, %c1_108, %c4_109, %c0_110] : memref<1x4x16x128xf32, #tpu.memory_space<vmem>>, vector<1x1x2x128xf32>
    %91 = vector.shape_cast %90 : vector<1x1x2x128xf32> to vector<2x128xf32>
    %92 = vector.shape_cast %89 : vector<2x128xf32> to vector<1x1x2x128xf32>
    tpu.vector_store %arg5[%c0_107, %c1_108, %c4_109, %c0_110], %92 {strides = array<i32>} : memref<1x4x16x128xf32, #tpu.memory_space<vmem>>, vector<1x1x2x128xf32>,
    %93 = vector.extract_strided_slice %84 {offsets = [4, 0], sizes = [2, 128], strides = [1, 1]} : vector<8x128xf32> to vector<2x128xf32>
    %c0_111 = arith.constant 0 : index
    %c1_112 = arith.constant 1 : index
    %c8_113 = arith.constant 8 : index
    %c0_114 = arith.constant 0 : index
    %94 = vector.load %arg5[%c0_111, %c1_112, %c8_113, %c0_114] : memref<1x4x16x128xf32, #tpu.memory_space<vmem>>, vector<1x1x2x128xf32>
    %95 = vector.shape_cast %94 : vector<1x1x2x128xf32> to vector<2x128xf32>
    %96 = vector.shape_cast %93 : vector<2x128xf32> to vector<1x1x2x128xf32>
    tpu.vector_store %arg5[%c0_111, %c1_112, %c8_113, %c0_114], %96 {strides = array<i32>} : memref<1x4x16x128xf32, #tpu.memory_space<vmem>>, vector<1x1x2x128xf32>,
    %97 = vector.extract_strided_slice %84 {offsets = [6, 0], sizes = [2, 128], strides = [1, 1]} : vector<8x128xf32> to vector<2x128xf32>
    %c0_115 = arith.constant 0 : index
    %c1_116 = arith.constant 1 : index
    %c12_117 = arith.constant 12 : index
    %c0_118 = arith.constant 0 : index
    %98 = vector.load %arg5[%c0_115, %c1_116, %c12_117, %c0_118] : memref<1x4x16x128xf32, #tpu.memory_space<vmem>>, vector<1x1x2x128xf32>
    %99 = vector.shape_cast %98 : vector<1x1x2x128xf32> to vector<2x128xf32>
    %100 = vector.shape_cast %97 : vector<2x128xf32> to vector<1x1x2x128xf32>
    tpu.vector_store %arg5[%c0_115, %c1_116, %c12_117, %c0_118], %100 {strides = array<i32>} : memref<1x4x16x128xf32, #tpu.memory_space<vmem>>, vector<1x1x2x128xf32>,
    %c0_119 = arith.constant 0 : index
    %c1_120 = arith.constant 1 : index
    %c4_121 = arith.constant 4 : index
    %c0_122 = arith.constant 0 : index
    %c0_123 = arith.constant 0 : index
    %101 = vector.load %arg3[%c0_119, %c1_120, %c4_121, %c0_122, %c0_123] : memref<1x4x8x8x32xf32, #tpu.memory_space<vmem>>, vector<1x1x1x8x32xf32>
    %102 = vector.shape_cast %101 : vector<1x1x1x8x32xf32> to vector<8x32xf32>
    %cst_124 = arith.constant dense<0.000000e+00> : vector<8x128xf32>
    %103 = tpu.matmul %102, %1, %cst_124 {dimension_numbers = #tpu.dot_dimension_numbers<[1], [0], [0], [1], [0, 0, 1, 1], [], []>} : vector<8x32xf32>, vector<32x128xf32>, vector<8x128xf32> -> vector<8x128xf32>
    %c0_125 = arith.constant 0 : index
    %c1_126 = arith.constant 1 : index
    %c5_127 = arith.constant 5 : index
    %c0_128 = arith.constant 0 : index
    %c0_129 = arith.constant 0 : index
    %104 = vector.load %arg3[%c0_125, %c1_126, %c5_127, %c0_128, %c0_129] : memref<1x4x8x8x32xf32, #tpu.memory_space<vmem>>, vector<1x1x1x8x32xf32>
    %105 = vector.shape_cast %104 : vector<1x1x1x8x32xf32> to vector<8x32xf32>
    %cst_130 = arith.constant dense<0.000000e+00> : vector<8x128xf32>
    %106 = tpu.matmul %105, %3, %cst_130 {dimension_numbers = #tpu.dot_dimension_numbers<[1], [0], [0], [1], [0, 0, 1, 1], [], []>} : vector<8x32xf32>, vector<32x128xf32>, vector<8x128xf32> -> vector<8x128xf32>
    %107 = arith.addf %103, %106 : vector<8x128xf32>
    %c0_131 = arith.constant 0 : index
    %c1_132 = arith.constant 1 : index
    %c6_133 = arith.constant 6 : index
    %c0_134 = arith.constant 0 : index
    %c0_135 = arith.constant 0 : index
    %108 = vector.load %arg3[%c0_131, %c1_132, %c6_133, %c0_134, %c0_135] : memref<1x4x8x8x32xf32, #tpu.memory_space<vmem>>, vector<1x1x1x8x32xf32>
    %109 = vector.shape_cast %108 : vector<1x1x1x8x32xf32> to vector<8x32xf32>
    %cst_136 = arith.constant dense<0.000000e+00> : vector<8x128xf32>
    %110 = tpu.matmul %109, %5, %cst_136 {dimension_numbers = #tpu.dot_dimension_numbers<[1], [0], [0], [1], [0, 0, 1, 1], [], []>} : vector<8x32xf32>, vector<32x128xf32>, vector<8x128xf32> -> vector<8x128xf32>
    %111 = arith.addf %107, %110 : vector<8x128xf32>
    %c0_137 = arith.constant 0 : index
    %c1_138 = arith.constant 1 : index
    %c7_139 = arith.constant 7 : index
    %c0_140 = arith.constant 0 : index
    %c0_141 = arith.constant 0 : index
    %112 = vector.load %arg3[%c0_137, %c1_138, %c7_139, %c0_140, %c0_141] : memref<1x4x8x8x32xf32, #tpu.memory_space<vmem>>, vector<1x1x1x8x32xf32>
    %113 = vector.shape_cast %112 : vector<1x1x1x8x32xf32> to vector<8x32xf32>
    %cst_142 = arith.constant dense<0.000000e+00> : vector<8x128xf32>
    %114 = tpu.matmul %113, %7, %cst_142 {dimension_numbers = #tpu.dot_dimension_numbers<[1], [0], [0], [1], [0, 0, 1, 1], [], []>} : vector<8x32xf32>, vector<32x128xf32>, vector<8x128xf32> -> vector<8x128xf32>
    %115 = arith.addf %111, %114 : vector<8x128xf32>
    %116 = vector.extract_strided_slice %115 {offsets = [0, 0], sizes = [2, 128], strides = [1, 1]} : vector<8x128xf32> to vector<2x128xf32>
    %c0_143 = arith.constant 0 : index
    %c1_144 = arith.constant 1 : index
    %c2_145 = arith.constant 2 : index
    %c0_146 = arith.constant 0 : index
    %117 = vector.load %arg5[%c0_143, %c1_144, %c2_145, %c0_146] : memref<1x4x16x128xf32, #tpu.memory_space<vmem>>, vector<1x1x2x128xf32>
    %118 = vector.shape_cast %117 : vector<1x1x2x128xf32> to vector<2x128xf32>
    %119 = vector.shape_cast %116 : vector<2x128xf32> to vector<1x1x2x128xf32>
    tpu.vector_store %arg5[%c0_143, %c1_144, %c2_145, %c0_146], %119 {strides = array<i32>} : memref<1x4x16x128xf32, #tpu.memory_space<vmem>>, vector<1x1x2x128xf32>,
    %120 = vector.extract_strided_slice %115 {offsets = [2, 0], sizes = [2, 128], strides = [1, 1]} : vector<8x128xf32> to vector<2x128xf32>
    %c0_147 = arith.constant 0 : index
    %c1_148 = arith.constant 1 : index
    %c6_149 = arith.constant 6 : index
    %c0_150 = arith.constant 0 : index
    %121 = vector.load %arg5[%c0_147, %c1_148, %c6_149, %c0_150] : memref<1x4x16x128xf32, #tpu.memory_space<vmem>>, vector<1x1x2x128xf32>
    %122 = vector.shape_cast %121 : vector<1x1x2x128xf32> to vector<2x128xf32>
    %123 = vector.shape_cast %120 : vector<2x128xf32> to vector<1x1x2x128xf32>
    tpu.vector_store %arg5[%c0_147, %c1_148, %c6_149, %c0_150], %123 {strides = array<i32>} : memref<1x4x16x128xf32, #tpu.memory_space<vmem>>, vector<1x1x2x128xf32>,
    %124 = vector.extract_strided_slice %115 {offsets = [4, 0], sizes = [2, 128], strides = [1, 1]} : vector<8x128xf32> to vector<2x128xf32>
    %c0_151 = arith.constant 0 : index
    %c1_152 = arith.constant 1 : index
    %c10_153 = arith.constant 10 : index
    %c0_154 = arith.constant 0 : index
    %125 = vector.load %arg5[%c0_151, %c1_152, %c10_153, %c0_154] : memref<1x4x16x128xf32, #tpu.memory_space<vmem>>, vector<1x1x2x128xf32>
    %126 = vector.shape_cast %125 : vector<1x1x2x128xf32> to vector<2x128xf32>
    %127 = vector.shape_cast %124 : vector<2x128xf32> to vector<1x1x2x128xf32>
    tpu.vector_store %arg5[%c0_151, %c1_152, %c10_153, %c0_154], %127 {strides = array<i32>} : memref<1x4x16x128xf32, #tpu.memory_space<vmem>>, vector<1x1x2x128xf32>,
    %128 = vector.extract_strided_slice %115 {offsets = [6, 0], sizes = [2, 128], strides = [1, 1]} : vector<8x128xf32> to vector<2x128xf32>
    %c0_155 = arith.constant 0 : index
    %c1_156 = arith.constant 1 : index
    %c14_157 = arith.constant 14 : index
    %c0_158 = arith.constant 0 : index
    %129 = vector.load %arg5[%c0_155, %c1_156, %c14_157, %c0_158] : memref<1x4x16x128xf32, #tpu.memory_space<vmem>>, vector<1x1x2x128xf32>
    %130 = vector.shape_cast %129 : vector<1x1x2x128xf32> to vector<2x128xf32>
    %131 = vector.shape_cast %128 : vector<2x128xf32> to vector<1x1x2x128xf32>
    tpu.vector_store %arg5[%c0_155, %c1_156, %c14_157, %c0_158], %131 {strides = array<i32>} : memref<1x4x16x128xf32, #tpu.memory_space<vmem>>, vector<1x1x2x128xf32>,
    %c0_159 = arith.constant 0 : index
    %c2_160 = arith.constant 2 : index
    %c0_161 = arith.constant 0 : index
    %c0_162 = arith.constant 0 : index
    %c0_163 = arith.constant 0 : index
    %132 = vector.load %arg3[%c0_159, %c2_160, %c0_161, %c0_162, %c0_163] : memref<1x4x8x8x32xf32, #tpu.memory_space<vmem>>, vector<1x1x1x8x32xf32>
    %133 = vector.shape_cast %132 : vector<1x1x1x8x32xf32> to vector<8x32xf32>
    %cst_164 = arith.constant dense<0.000000e+00> : vector<8x128xf32>
    %134 = tpu.matmul %133, %1, %cst_164 {dimension_numbers = #tpu.dot_dimension_numbers<[1], [0], [0], [1], [0, 0, 1, 1], [], []>} : vector<8x32xf32>, vector<32x128xf32>, vector<8x128xf32> -> vector<8x128xf32>
    %c0_165 = arith.constant 0 : index
    %c2_166 = arith.constant 2 : index
    %c1_167 = arith.constant 1 : index
    %c0_168 = arith.constant 0 : index
    %c0_169 = arith.constant 0 : index
    %135 = vector.load %arg3[%c0_165, %c2_166, %c1_167, %c0_168, %c0_169] : memref<1x4x8x8x32xf32, #tpu.memory_space<vmem>>, vector<1x1x1x8x32xf32>
    %136 = vector.shape_cast %135 : vector<1x1x1x8x32xf32> to vector<8x32xf32>
    %cst_170 = arith.constant dense<0.000000e+00> : vector<8x128xf32>
    %137 = tpu.matmul %136, %3, %cst_170 {dimension_numbers = #tpu.dot_dimension_numbers<[1], [0], [0], [1], [0, 0, 1, 1], [], []>} : vector<8x32xf32>, vector<32x128xf32>, vector<8x128xf32> -> vector<8x128xf32>
    %138 = arith.addf %134, %137 : vector<8x128xf32>
    %c0_171 = arith.constant 0 : index
    %c2_172 = arith.constant 2 : index
    %c2_173 = arith.constant 2 : index
    %c0_174 = arith.constant 0 : index
    %c0_175 = arith.constant 0 : index
    %139 = vector.load %arg3[%c0_171, %c2_172, %c2_173, %c0_174, %c0_175] : memref<1x4x8x8x32xf32, #tpu.memory_space<vmem>>, vector<1x1x1x8x32xf32>
    %140 = vector.shape_cast %139 : vector<1x1x1x8x32xf32> to vector<8x32xf32>
    %cst_176 = arith.constant dense<0.000000e+00> : vector<8x128xf32>
    %141 = tpu.matmul %140, %5, %cst_176 {dimension_numbers = #tpu.dot_dimension_numbers<[1], [0], [0], [1], [0, 0, 1, 1], [], []>} : vector<8x32xf32>, vector<32x128xf32>, vector<8x128xf32> -> vector<8x128xf32>
    %142 = arith.addf %138, %141 : vector<8x128xf32>
    %c0_177 = arith.constant 0 : index
    %c2_178 = arith.constant 2 : index
    %c3_179 = arith.constant 3 : index
    %c0_180 = arith.constant 0 : index
    %c0_181 = arith.constant 0 : index
    %143 = vector.load %arg3[%c0_177, %c2_178, %c3_179, %c0_180, %c0_181] : memref<1x4x8x8x32xf32, #tpu.memory_space<vmem>>, vector<1x1x1x8x32xf32>
    %144 = vector.shape_cast %143 : vector<1x1x1x8x32xf32> to vector<8x32xf32>
    %cst_182 = arith.constant dense<0.000000e+00> : vector<8x128xf32>
    %145 = tpu.matmul %144, %7, %cst_182 {dimension_numbers = #tpu.dot_dimension_numbers<[1], [0], [0], [1], [0, 0, 1, 1], [], []>} : vector<8x32xf32>, vector<32x128xf32>, vector<8x128xf32> -> vector<8x128xf32>
    %146 = arith.addf %142, %145 : vector<8x128xf32>
    %147 = vector.extract_strided_slice %146 {offsets = [0, 0], sizes = [2, 128], strides = [1, 1]} : vector<8x128xf32> to vector<2x128xf32>
    %c0_183 = arith.constant 0 : index
    %c2_184 = arith.constant 2 : index
    %c0_185 = arith.constant 0 : index
    %c0_186 = arith.constant 0 : index
    %148 = vector.load %arg5[%c0_183, %c2_184, %c0_185, %c0_186] : memref<1x4x16x128xf32, #tpu.memory_space<vmem>>, vector<1x1x2x128xf32>
    %149 = vector.shape_cast %148 : vector<1x1x2x128xf32> to vector<2x128xf32>
    %150 = vector.shape_cast %147 : vector<2x128xf32> to vector<1x1x2x128xf32>
    tpu.vector_store %arg5[%c0_183, %c2_184, %c0_185, %c0_186], %150 {strides = array<i32>} : memref<1x4x16x128xf32, #tpu.memory_space<vmem>>, vector<1x1x2x128xf32>,
    %151 = vector.extract_strided_slice %146 {offsets = [2, 0], sizes = [2, 128], strides = [1, 1]} : vector<8x128xf32> to vector<2x128xf32>
    %c0_187 = arith.constant 0 : index
    %c2_188 = arith.constant 2 : index
    %c4_189 = arith.constant 4 : index
    %c0_190 = arith.constant 0 : index
    %152 = vector.load %arg5[%c0_187, %c2_188, %c4_189, %c0_190] : memref<1x4x16x128xf32, #tpu.memory_space<vmem>>, vector<1x1x2x128xf32>
    %153 = vector.shape_cast %152 : vector<1x1x2x128xf32> to vector<2x128xf32>
    %154 = vector.shape_cast %151 : vector<2x128xf32> to vector<1x1x2x128xf32>
    tpu.vector_store %arg5[%c0_187, %c2_188, %c4_189, %c0_190], %154 {strides = array<i32>} : memref<1x4x16x128xf32, #tpu.memory_space<vmem>>, vector<1x1x2x128xf32>,
    %155 = vector.extract_strided_slice %146 {offsets = [4, 0], sizes = [2, 128], strides = [1, 1]} : vector<8x128xf32> to vector<2x128xf32>
    %c0_191 = arith.constant 0 : index
    %c2_192 = arith.constant 2 : index
    %c8_193 = arith.constant 8 : index
    %c0_194 = arith.constant 0 : index
    %156 = vector.load %arg5[%c0_191, %c2_192, %c8_193, %c0_194] : memref<1x4x16x128xf32, #tpu.memory_space<vmem>>, vector<1x1x2x128xf32>
    %157 = vector.shape_cast %156 : vector<1x1x2x128xf32> to vector<2x128xf32>
    %158 = vector.shape_cast %155 : vector<2x128xf32> to vector<1x1x2x128xf32>
    tpu.vector_store %arg5[%c0_191, %c2_192, %c8_193, %c0_194], %158 {strides = array<i32>} : memref<1x4x16x128xf32, #tpu.memory_space<vmem>>, vector<1x1x2x128xf32>,
    %159 = vector.extract_strided_slice %146 {offsets = [6, 0], sizes = [2, 128], strides = [1, 1]} : vector<8x128xf32> to vector<2x128xf32>
    %c0_195 = arith.constant 0 : index
    %c2_196 = arith.constant 2 : index
    %c12_197 = arith.constant 12 : index
    %c0_198 = arith.constant 0 : index
    %160 = vector.load %arg5[%c0_195, %c2_196, %c12_197, %c0_198] : memref<1x4x16x128xf32, #tpu.memory_space<vmem>>, vector<1x1x2x128xf32>
    %161 = vector.shape_cast %160 : vector<1x1x2x128xf32> to vector<2x128xf32>
    %162 = vector.shape_cast %159 : vector<2x128xf32> to vector<1x1x2x128xf32>
    tpu.vector_store %arg5[%c0_195, %c2_196, %c12_197, %c0_198], %162 {strides = array<i32>} : memref<1x4x16x128xf32, #tpu.memory_space<vmem>>, vector<1x1x2x128xf32>,
    %c0_199 = arith.constant 0 : index
    %c2_200 = arith.constant 2 : index
    %c4_201 = arith.constant 4 : index
    %c0_202 = arith.constant 0 : index
    %c0_203 = arith.constant 0 : index
    %163 = vector.load %arg3[%c0_199, %c2_200, %c4_201, %c0_202, %c0_203] : memref<1x4x8x8x32xf32, #tpu.memory_space<vmem>>, vector<1x1x1x8x32xf32>
    %164 = vector.shape_cast %163 : vector<1x1x1x8x32xf32> to vector<8x32xf32>
    %cst_204 = arith.constant dense<0.000000e+00> : vector<8x128xf32>
    %165 = tpu.matmul %164, %1, %cst_204 {dimension_numbers = #tpu.dot_dimension_numbers<[1], [0], [0], [1], [0, 0, 1, 1], [], []>} : vector<8x32xf32>, vector<32x128xf32>, vector<8x128xf32> -> vector<8x128xf32>
    %c0_205 = arith.constant 0 : index
    %c2_206 = arith.constant 2 : index
    %c5_207 = arith.constant 5 : index
    %c0_208 = arith.constant 0 : index
    %c0_209 = arith.constant 0 : index
    %166 = vector.load %arg3[%c0_205, %c2_206, %c5_207, %c0_208, %c0_209] : memref<1x4x8x8x32xf32, #tpu.memory_space<vmem>>, vector<1x1x1x8x32xf32>
    %167 = vector.shape_cast %166 : vector<1x1x1x8x32xf32> to vector<8x32xf32>
    %cst_210 = arith.constant dense<0.000000e+00> : vector<8x128xf32>
    %168 = tpu.matmul %167, %3, %cst_210 {dimension_numbers = #tpu.dot_dimension_numbers<[1], [0], [0], [1], [0, 0, 1, 1], [], []>} : vector<8x32xf32>, vector<32x128xf32>, vector<8x128xf32> -> vector<8x128xf32>
    %169 = arith.addf %165, %168 : vector<8x128xf32>
    %c0_211 = arith.constant 0 : index
    %c2_212 = arith.constant 2 : index
    %c6_213 = arith.constant 6 : index
    %c0_214 = arith.constant 0 : index
    %c0_215 = arith.constant 0 : index
    %170 = vector.load %arg3[%c0_211, %c2_212, %c6_213, %c0_214, %c0_215] : memref<1x4x8x8x32xf32, #tpu.memory_space<vmem>>, vector<1x1x1x8x32xf32>
    %171 = vector.shape_cast %170 : vector<1x1x1x8x32xf32> to vector<8x32xf32>
    %cst_216 = arith.constant dense<0.000000e+00> : vector<8x128xf32>
    %172 = tpu.matmul %171, %5, %cst_216 {dimension_numbers = #tpu.dot_dimension_numbers<[1], [0], [0], [1], [0, 0, 1, 1], [], []>} : vector<8x32xf32>, vector<32x128xf32>, vector<8x128xf32> -> vector<8x128xf32>
    %173 = arith.addf %169, %172 : vector<8x128xf32>
    %c0_217 = arith.constant 0 : index
    %c2_218 = arith.constant 2 : index
    %c7_219 = arith.constant 7 : index
    %c0_220 = arith.constant 0 : index
    %c0_221 = arith.constant 0 : index
    %174 = vector.load %arg3[%c0_217, %c2_218, %c7_219, %c0_220, %c0_221] : memref<1x4x8x8x32xf32, #tpu.memory_space<vmem>>, vector<1x1x1x8x32xf32>
    %175 = vector.shape_cast %174 : vector<1x1x1x8x32xf32> to vector<8x32xf32>
    %cst_222 = arith.constant dense<0.000000e+00> : vector<8x128xf32>
    %176 = tpu.matmul %175, %7, %cst_222 {dimension_numbers = #tpu.dot_dimension_numbers<[1], [0], [0], [1], [0, 0, 1, 1], [], []>} : vector<8x32xf32>, vector<32x128xf32>, vector<8x128xf32> -> vector<8x128xf32>
    %177 = arith.addf %173, %176 : vector<8x128xf32>
    %178 = vector.extract_strided_slice %177 {offsets = [0, 0], sizes = [2, 128], strides = [1, 1]} : vector<8x128xf32> to vector<2x128xf32>
    %c0_223 = arith.constant 0 : index
    %c2_224 = arith.constant 2 : index
    %c2_225 = arith.constant 2 : index
    %c0_226 = arith.constant 0 : index
    %179 = vector.load %arg5[%c0_223, %c2_224, %c2_225, %c0_226] : memref<1x4x16x128xf32, #tpu.memory_space<vmem>>, vector<1x1x2x128xf32>
    %180 = vector.shape_cast %179 : vector<1x1x2x128xf32> to vector<2x128xf32>
    %181 = vector.shape_cast %178 : vector<2x128xf32> to vector<1x1x2x128xf32>
    tpu.vector_store %arg5[%c0_223, %c2_224, %c2_225, %c0_226], %181 {strides = array<i32>} : memref<1x4x16x128xf32, #tpu.memory_space<vmem>>, vector<1x1x2x128xf32>,
    %182 = vector.extract_strided_slice %177 {offsets = [2, 0], sizes = [2, 128], strides = [1, 1]} : vector<8x128xf32> to vector<2x128xf32>
    %c0_227 = arith.constant 0 : index
    %c2_228 = arith.constant 2 : index
    %c6_229 = arith.constant 6 : index
    %c0_230 = arith.constant 0 : index
    %183 = vector.load %arg5[%c0_227, %c2_228, %c6_229, %c0_230] : memref<1x4x16x128xf32, #tpu.memory_space<vmem>>, vector<1x1x2x128xf32>
    %184 = vector.shape_cast %183 : vector<1x1x2x128xf32> to vector<2x128xf32>
    %185 = vector.shape_cast %182 : vector<2x128xf32> to vector<1x1x2x128xf32>
    tpu.vector_store %arg5[%c0_227, %c2_228, %c6_229, %c0_230], %185 {strides = array<i32>} : memref<1x4x16x128xf32, #tpu.memory_space<vmem>>, vector<1x1x2x128xf32>,
    %186 = vector.extract_strided_slice %177 {offsets = [4, 0], sizes = [2, 128], strides = [1, 1]} : vector<8x128xf32> to vector<2x128xf32>
    %c0_231 = arith.constant 0 : index
    %c2_232 = arith.constant 2 : index
    %c10_233 = arith.constant 10 : index
    %c0_234 = arith.constant 0 : index
    %187 = vector.load %arg5[%c0_231, %c2_232, %c10_233, %c0_234] : memref<1x4x16x128xf32, #tpu.memory_space<vmem>>, vector<1x1x2x128xf32>
    %188 = vector.shape_cast %187 : vector<1x1x2x128xf32> to vector<2x128xf32>
    %189 = vector.shape_cast %186 : vector<2x128xf32> to vector<1x1x2x128xf32>
    tpu.vector_store %arg5[%c0_231, %c2_232, %c10_233, %c0_234], %189 {strides = array<i32>} : memref<1x4x16x128xf32, #tpu.memory_space<vmem>>, vector<1x1x2x128xf32>,
    %190 = vector.extract_strided_slice %177 {offsets = [6, 0], sizes = [2, 128], strides = [1, 1]} : vector<8x128xf32> to vector<2x128xf32>
    %c0_235 = arith.constant 0 : index
    %c2_236 = arith.constant 2 : index
    %c14_237 = arith.constant 14 : index
    %c0_238 = arith.constant 0 : index
    %191 = vector.load %arg5[%c0_235, %c2_236, %c14_237, %c0_238] : memref<1x4x16x128xf32, #tpu.memory_space<vmem>>, vector<1x1x2x128xf32>
    %192 = vector.shape_cast %191 : vector<1x1x2x128xf32> to vector<2x128xf32>
    %193 = vector.shape_cast %190 : vector<2x128xf32> to vector<1x1x2x128xf32>
    tpu.vector_store %arg5[%c0_235, %c2_236, %c14_237, %c0_238], %193 {strides = array<i32>} : memref<1x4x16x128xf32, #tpu.memory_space<vmem>>, vector<1x1x2x128xf32>,
    %c0_239 = arith.constant 0 : index
    %c3_240 = arith.constant 3 : index
    %c0_241 = arith.constant 0 : index
    %c0_242 = arith.constant 0 : index
    %c0_243 = arith.constant 0 : index
    %194 = vector.load %arg3[%c0_239, %c3_240, %c0_241, %c0_242, %c0_243] : memref<1x4x8x8x32xf32, #tpu.memory_space<vmem>>, vector<1x1x1x8x32xf32>
    %195 = vector.shape_cast %194 : vector<1x1x1x8x32xf32> to vector<8x32xf32>
    %cst_244 = arith.constant dense<0.000000e+00> : vector<8x128xf32>
    %196 = tpu.matmul %195, %1, %cst_244 {dimension_numbers = #tpu.dot_dimension_numbers<[1], [0], [0], [1], [0, 0, 1, 1], [], []>} : vector<8x32xf32>, vector<32x128xf32>, vector<8x128xf32> -> vector<8x128xf32>
    %c0_245 = arith.constant 0 : index
    %c3_246 = arith.constant 3 : index
    %c1_247 = arith.constant 1 : index
    %c0_248 = arith.constant 0 : index
    %c0_249 = arith.constant 0 : index
    %197 = vector.load %arg3[%c0_245, %c3_246, %c1_247, %c0_248, %c0_249] : memref<1x4x8x8x32xf32, #tpu.memory_space<vmem>>, vector<1x1x1x8x32xf32>
    %198 = vector.shape_cast %197 : vector<1x1x1x8x32xf32> to vector<8x32xf32>
    %cst_250 = arith.constant dense<0.000000e+00> : vector<8x128xf32>
    %199 = tpu.matmul %198, %3, %cst_250 {dimension_numbers = #tpu.dot_dimension_numbers<[1], [0], [0], [1], [0, 0, 1, 1], [], []>} : vector<8x32xf32>, vector<32x128xf32>, vector<8x128xf32> -> vector<8x128xf32>
    %200 = arith.addf %196, %199 : vector<8x128xf32>
    %c0_251 = arith.constant 0 : index
    %c3_252 = arith.constant 3 : index
    %c2_253 = arith.constant 2 : index
    %c0_254 = arith.constant 0 : index
    %c0_255 = arith.constant 0 : index
    %201 = vector.load %arg3[%c0_251, %c3_252, %c2_253, %c0_254, %c0_255] : memref<1x4x8x8x32xf32, #tpu.memory_space<vmem>>, vector<1x1x1x8x32xf32>
    %202 = vector.shape_cast %201 : vector<1x1x1x8x32xf32> to vector<8x32xf32>
    %cst_256 = arith.constant dense<0.000000e+00> : vector<8x128xf32>
    %203 = tpu.matmul %202, %5, %cst_256 {dimension_numbers = #tpu.dot_dimension_numbers<[1], [0], [0], [1], [0, 0, 1, 1], [], []>} : vector<8x32xf32>, vector<32x128xf32>, vector<8x128xf32> -> vector<8x128xf32>
    %204 = arith.addf %200, %203 : vector<8x128xf32>
    %c0_257 = arith.constant 0 : index
    %c3_258 = arith.constant 3 : index
    %c3_259 = arith.constant 3 : index
    %c0_260 = arith.constant 0 : index
    %c0_261 = arith.constant 0 : index
    %205 = vector.load %arg3[%c0_257, %c3_258, %c3_259, %c0_260, %c0_261] : memref<1x4x8x8x32xf32, #tpu.memory_space<vmem>>, vector<1x1x1x8x32xf32>
    %206 = vector.shape_cast %205 : vector<1x1x1x8x32xf32> to vector<8x32xf32>
    %cst_262 = arith.constant dense<0.000000e+00> : vector<8x128xf32>
    %207 = tpu.matmul %206, %7, %cst_262 {dimension_numbers = #tpu.dot_dimension_numbers<[1], [0], [0], [1], [0, 0, 1, 1], [], []>} : vector<8x32xf32>, vector<32x128xf32>, vector<8x128xf32> -> vector<8x128xf32>
    %208 = arith.addf %204, %207 : vector<8x128xf32>
    %209 = vector.extract_strided_slice %208 {offsets = [0, 0], sizes = [2, 128], strides = [1, 1]} : vector<8x128xf32> to vector<2x128xf32>
    %c0_263 = arith.constant 0 : index
    %c3_264 = arith.constant 3 : index
    %c0_265 = arith.constant 0 : index
    %c0_266 = arith.constant 0 : index
    %210 = vector.load %arg5[%c0_263, %c3_264, %c0_265, %c0_266] : memref<1x4x16x128xf32, #tpu.memory_space<vmem>>, vector<1x1x2x128xf32>
    %211 = vector.shape_cast %210 : vector<1x1x2x128xf32> to vector<2x128xf32>
    %212 = vector.shape_cast %209 : vector<2x128xf32> to vector<1x1x2x128xf32>
    tpu.vector_store %arg5[%c0_263, %c3_264, %c0_265, %c0_266], %212 {strides = array<i32>} : memref<1x4x16x128xf32, #tpu.memory_space<vmem>>, vector<1x1x2x128xf32>,
    %213 = vector.extract_strided_slice %208 {offsets = [2, 0], sizes = [2, 128], strides = [1, 1]} : vector<8x128xf32> to vector<2x128xf32>
    %c0_267 = arith.constant 0 : index
    %c3_268 = arith.constant 3 : index
    %c4_269 = arith.constant 4 : index
    %c0_270 = arith.constant 0 : index
    %214 = vector.load %arg5[%c0_267, %c3_268, %c4_269, %c0_270] : memref<1x4x16x128xf32, #tpu.memory_space<vmem>>, vector<1x1x2x128xf32>
    %215 = vector.shape_cast %214 : vector<1x1x2x128xf32> to vector<2x128xf32>
    %216 = vector.shape_cast %213 : vector<2x128xf32> to vector<1x1x2x128xf32>
    tpu.vector_store %arg5[%c0_267, %c3_268, %c4_269, %c0_270], %216 {strides = array<i32>} : memref<1x4x16x128xf32, #tpu.memory_space<vmem>>, vector<1x1x2x128xf32>,
    %217 = vector.extract_strided_slice %208 {offsets = [4, 0], sizes = [2, 128], strides = [1, 1]} : vector<8x128xf32> to vector<2x128xf32>
    %c0_271 = arith.constant 0 : index
    %c3_272 = arith.constant 3 : index
    %c8_273 = arith.constant 8 : index
    %c0_274 = arith.constant 0 : index
    %218 = vector.load %arg5[%c0_271, %c3_272, %c8_273, %c0_274] : memref<1x4x16x128xf32, #tpu.memory_space<vmem>>, vector<1x1x2x128xf32>
    %219 = vector.shape_cast %218 : vector<1x1x2x128xf32> to vector<2x128xf32>
    %220 = vector.shape_cast %217 : vector<2x128xf32> to vector<1x1x2x128xf32>
    tpu.vector_store %arg5[%c0_271, %c3_272, %c8_273, %c0_274], %220 {strides = array<i32>} : memref<1x4x16x128xf32, #tpu.memory_space<vmem>>, vector<1x1x2x128xf32>,
    %221 = vector.extract_strided_slice %208 {offsets = [6, 0], sizes = [2, 128], strides = [1, 1]} : vector<8x128xf32> to vector<2x128xf32>
    %c0_275 = arith.constant 0 : index
    %c3_276 = arith.constant 3 : index
    %c12_277 = arith.constant 12 : index
    %c0_278 = arith.constant 0 : index
    %222 = vector.load %arg5[%c0_275, %c3_276, %c12_277, %c0_278] : memref<1x4x16x128xf32, #tpu.memory_space<vmem>>, vector<1x1x2x128xf32>
    %223 = vector.shape_cast %222 : vector<1x1x2x128xf32> to vector<2x128xf32>
    %224 = vector.shape_cast %221 : vector<2x128xf32> to vector<1x1x2x128xf32>
    tpu.vector_store %arg5[%c0_275, %c3_276, %c12_277, %c0_278], %224 {strides = array<i32>} : memref<1x4x16x128xf32, #tpu.memory_space<vmem>>, vector<1x1x2x128xf32>,
    %c0_279 = arith.constant 0 : index
    %c3_280 = arith.constant 3 : index
    %c4_281 = arith.constant 4 : index
    %c0_282 = arith.constant 0 : index
    %c0_283 = arith.constant 0 : index
    %225 = vector.load %arg3[%c0_279, %c3_280, %c4_281, %c0_282, %c0_283] : memref<1x4x8x8x32xf32, #tpu.memory_space<vmem>>, vector<1x1x1x8x32xf32>
    %226 = vector.shape_cast %225 : vector<1x1x1x8x32xf32> to vector<8x32xf32>
    %cst_284 = arith.constant dense<0.000000e+00> : vector<8x128xf32>
    %227 = tpu.matmul %226, %1, %cst_284 {dimension_numbers = #tpu.dot_dimension_numbers<[1], [0], [0], [1], [0, 0, 1, 1], [], []>} : vector<8x32xf32>, vector<32x128xf32>, vector<8x128xf32> -> vector<8x128xf32>
    %c0_285 = arith.constant 0 : index
    %c3_286 = arith.constant 3 : index
    %c5_287 = arith.constant 5 : index
    %c0_288 = arith.constant 0 : index
    %c0_289 = arith.constant 0 : index
    %228 = vector.load %arg3[%c0_285, %c3_286, %c5_287, %c0_288, %c0_289] : memref<1x4x8x8x32xf32, #tpu.memory_space<vmem>>, vector<1x1x1x8x32xf32>
    %229 = vector.shape_cast %228 : vector<1x1x1x8x32xf32> to vector<8x32xf32>
    %cst_290 = arith.constant dense<0.000000e+00> : vector<8x128xf32>
    %230 = tpu.matmul %229, %3, %cst_290 {dimension_numbers = #tpu.dot_dimension_numbers<[1], [0], [0], [1], [0, 0, 1, 1], [], []>} : vector<8x32xf32>, vector<32x128xf32>, vector<8x128xf32> -> vector<8x128xf32>
    %231 = arith.addf %227, %230 : vector<8x128xf32>
    %c0_291 = arith.constant 0 : index
    %c3_292 = arith.constant 3 : index
    %c6_293 = arith.constant 6 : index
    %c0_294 = arith.constant 0 : index
    %c0_295 = arith.constant 0 : index
    %232 = vector.load %arg3[%c0_291, %c3_292, %c6_293, %c0_294, %c0_295] : memref<1x4x8x8x32xf32, #tpu.memory_space<vmem>>, vector<1x1x1x8x32xf32>
    %233 = vector.shape_cast %232 : vector<1x1x1x8x32xf32> to vector<8x32xf32>
    %cst_296 = arith.constant dense<0.000000e+00> : vector<8x128xf32>
    %234 = tpu.matmul %233, %5, %cst_296 {dimension_numbers = #tpu.dot_dimension_numbers<[1], [0], [0], [1], [0, 0, 1, 1], [], []>} : vector<8x32xf32>, vector<32x128xf32>, vector<8x128xf32> -> vector<8x128xf32>
    %235 = arith.addf %231, %234 : vector<8x128xf32>
    %c0_297 = arith.constant 0 : index
    %c3_298 = arith.constant 3 : index
    %c7_299 = arith.constant 7 : index
    %c0_300 = arith.constant 0 : index
    %c0_301 = arith.constant 0 : index
    %236 = vector.load %arg3[%c0_297, %c3_298, %c7_299, %c0_300, %c0_301] : memref<1x4x8x8x32xf32, #tpu.memory_space<vmem>>, vector<1x1x1x8x32xf32>
    %237 = vector.shape_cast %236 : vector<1x1x1x8x32xf32> to vector<8x32xf32>
    %cst_302 = arith.constant dense<0.000000e+00> : vector<8x128xf32>
    %238 = tpu.matmul %237, %7, %cst_302 {dimension_numbers = #tpu.dot_dimension_numbers<[1], [0], [0], [1], [0, 0, 1, 1], [], []>} : vector<8x32xf32>, vector<32x128xf32>, vector<8x128xf32> -> vector<8x128xf32>
    %239 = arith.addf %235, %238 : vector<8x128xf32>
    %240 = vector.extract_strided_slice %239 {offsets = [0, 0], sizes = [2, 128], strides = [1, 1]} : vector<8x128xf32> to vector<2x128xf32>
    %c0_303 = arith.constant 0 : index
    %c3_304 = arith.constant 3 : index
    %c2_305 = arith.constant 2 : index
    %c0_306 = arith.constant 0 : index
    %241 = vector.load %arg5[%c0_303, %c3_304, %c2_305, %c0_306] : memref<1x4x16x128xf32, #tpu.memory_space<vmem>>, vector<1x1x2x128xf32>
    %242 = vector.shape_cast %241 : vector<1x1x2x128xf32> to vector<2x128xf32>
    %243 = vector.shape_cast %240 : vector<2x128xf32> to vector<1x1x2x128xf32>
    tpu.vector_store %arg5[%c0_303, %c3_304, %c2_305, %c0_306], %243 {strides = array<i32>} : memref<1x4x16x128xf32, #tpu.memory_space<vmem>>, vector<1x1x2x128xf32>,
    %244 = vector.extract_strided_slice %239 {offsets = [2, 0], sizes = [2, 128], strides = [1, 1]} : vector<8x128xf32> to vector<2x128xf32>
    %c0_307 = arith.constant 0 : index
    %c3_308 = arith.constant 3 : index
    %c6_309 = arith.constant 6 : index
    %c0_310 = arith.constant 0 : index
    %245 = vector.load %arg5[%c0_307, %c3_308, %c6_309, %c0_310] : memref<1x4x16x128xf32, #tpu.memory_space<vmem>>, vector<1x1x2x128xf32>
    %246 = vector.shape_cast %245 : vector<1x1x2x128xf32> to vector<2x128xf32>
    %247 = vector.shape_cast %244 : vector<2x128xf32> to vector<1x1x2x128xf32>
    tpu.vector_store %arg5[%c0_307, %c3_308, %c6_309, %c0_310], %247 {strides = array<i32>} : memref<1x4x16x128xf32, #tpu.memory_space<vmem>>, vector<1x1x2x128xf32>,
    %248 = vector.extract_strided_slice %239 {offsets = [4, 0], sizes = [2, 128], strides = [1, 1]} : vector<8x128xf32> to vector<2x128xf32>
    %c0_311 = arith.constant 0 : index
    %c3_312 = arith.constant 3 : index
    %c10_313 = arith.constant 10 : index
    %c0_314 = arith.constant 0 : index
    %249 = vector.load %arg5[%c0_311, %c3_312, %c10_313, %c0_314] : memref<1x4x16x128xf32, #tpu.memory_space<vmem>>, vector<1x1x2x128xf32>
    %250 = vector.shape_cast %249 : vector<1x1x2x128xf32> to vector<2x128xf32>
    %251 = vector.shape_cast %248 : vector<2x128xf32> to vector<1x1x2x128xf32>
    tpu.vector_store %arg5[%c0_311, %c3_312, %c10_313, %c0_314], %251 {strides = array<i32>} : memref<1x4x16x128xf32, #tpu.memory_space<vmem>>, vector<1x1x2x128xf32>,
    %252 = vector.extract_strided_slice %239 {offsets = [6, 0], sizes = [2, 128], strides = [1, 1]} : vector<8x128xf32> to vector<2x128xf32>
    %c0_315 = arith.constant 0 : index
    %c3_316 = arith.constant 3 : index
    %c14_317 = arith.constant 14 : index
    %c0_318 = arith.constant 0 : index
    %253 = vector.load %arg5[%c0_315, %c3_316, %c14_317, %c0_318] : memref<1x4x16x128xf32, #tpu.memory_space<vmem>>, vector<1x1x2x128xf32>
    %254 = vector.shape_cast %253 : vector<1x1x2x128xf32> to vector<2x128xf32>
    %255 = vector.shape_cast %252 : vector<2x128xf32> to vector<1x1x2x128xf32>
    tpu.vector_store %arg5[%c0_315, %c3_316, %c14_317, %c0_318], %255 {strides = array<i32>} : memref<1x4x16x128xf32, #tpu.memory_space<vmem>>, vector<1x1x2x128xf32>,
    return
  }
  func.func @transform_0(%arg0: i32, %arg1: i32, %arg2: i32) -> (i32, i32, i32, i32, i32) {
    %c0_i32 = arith.constant 0 : i32
    %c0_i32_0 = arith.constant 0 : i32
    %c0_i32_1 = arith.constant 0 : i32
    return %arg0, %arg1, %c0_i32, %arg2, %c0_i32_0 : i32, i32, i32, i32, i32
  }
  func.func @transform_1(%arg0: i32, %arg1: i32, %arg2: i32) -> (i32, i32, i32) {
    %c0_i32 = arith.constant 0 : i32
    %c0_i32_0 = arith.constant 0 : i32
    %c0_i32_1 = arith.constant 0 : i32
    %c0_i32_2 = arith.constant 0 : i32
    return %c0_i32, %c0_i32_0, %c0_i32_1 : i32, i32, i32
  }
  func.func @transform_2(%arg0: i32, %arg1: i32, %arg2: i32) -> (i32, i32, i32, i32) {
    %c0_i32 = arith.constant 0 : i32
    %c0_i32_0 = arith.constant 0 : i32
    return %arg0, %arg1, %arg2, %c0_i32 : i32, i32, i32, i32
  }
}

</mosaic_0001>

<llo_original>
// kernel: pixel_shuffle3d.1
$region0: #{pixel_shuffle3d.1}
  #allocation0 [shape = 'u32[]', space=smem, size = 0x4, offset = 0x4, fixed_abs, tag = 'smem constant byte address 0x4 - core index']
  #allocation1 [shape = 'u32[144,128]{1,0:T(1,128)}', space=vmem, size = 0x12000, scoped, tag = 'internal scratch']
  %s0 = inlined_call_operand.vmem [shape: f32[2,4,8,8,32], index: 0, kind: input, shape index: {}]
  %s1 = inlined_call_operand.vmem [shape: f32[4,32,128], index: 1, kind: input, shape index: {}]
  %s2 = inlined_call_operand.vmem [shape: f32[2,4,16,128], index: 2, kind: output, shape index: {}]
  %s3 = sld [smem:[#allocation0]]
  $region41: #{pixel_shuffle3d.1} parent=0
    _
  %s5 = ssub.s32 1, %s3
  %s6 = scalar_select 0, %s5, %s3
  loop: start=0, step=1, limit=4
  $region2: #{pixel_shuffle3d.1} parent=0 // loop_pre_header
    _
  $region3: #{pixel_shuffle3d.1} parent=0 // loop_header
    %s8 = sphi 0, %s12
    %p9 = scmp.ge.s32.totalorder %s8, 4
    %s15 = sphi 0, %s34
    %s16 = sphi 0, %s30
    %s17 = sphi 0, %s26
    %s18 = sphi 0, %s15
    %s19 = sphi 0, %s16
    %s20 = sphi 0, %s17
    %s21 = sphi 0, %s18
    %s22 = sphi 0, %s19
    %s23 = sphi 0, %s20
    %s41 = sphi 0, %s43
    %s44 = sphi 0, %s41
    %s45 = sphi 0, %s44
    %s61 = sphi 0, %s45
    %s65 = sphi 0, %s65
    %s67 = sphi 0, %s65
    %s68 = sphi 0, %s67
    %s82 = sphi 0, %s68
    %s92 = sphi 0, %s94
    %s95 = sphi 0, %s92
    %s96 = sphi 0, %s95
    %s112 = sphi 0, %s96
  $region4: #{pixel_shuffle3d.1} parent=0 // loop_header_branch
    %11 = sbr.rel (%p9) target = $region8
  $region5: #{pixel_shuffle3d.1} parent=0 // loop_body
    %s13 = ssub.s32 %s8, 1
    %s14 = ssub.s32 %s8, 2
    %s24 = sadd.s32 1, %s17
    %p25 = scmp.ge.s32.totalorder %s24, 1
    %s26 = scalar_select %p25, 0, %s24
    %s27 = sadd.s32 1, %s16
    %s28 = scalar_select %p25, %s27, %s16
    %p29 = scmp.ge.s32.totalorder %s28, 1
    %s30 = scalar_select %p29, 0, %s28
    %s31 = sadd.s32 1, %s15
    %s32 = scalar_select %p29, %s31, %s15
    %p33 = scmp.ge.s32.totalorder %s32, 2
    %s34 = scalar_select %p33, 0, %s32
    %s35 = ssub.s32 %s15, %s34
    %s36 = ssub.s32 %s16, %s30
    %s37 = sor.u32 %s35, %s36
    %s38 = ssub.s32 %s17, %s26
    %s39 = sor.u32 %s37, %s38
    %p40 = scmp.eq.s32.totalorder %s39, 0
    %s42 = sadd.s32 %s41, 1
    %s43 = scalar_select %p40, %s41, %s42
    %p46 = pneg %p40
    %p47 = scmp.eq.s32.totalorder %s8, 1
    %p48 = por %p46, %p47
    %p49 = scmp.ne.s32.totalorder %s41, %s44
    %p50 = scmp.eq.s32.totalorder %s8, 0
    %p51 = por %p49, %p50
    %p52 = scmp.ne.s32.totalorder %s41, %s44
    %p53 = scmp.eq.s32.totalorder %s13, 1
    %p54 = por %p52, %p53
    %p55 = scmp.ne.s32.totalorder %s44, %s45
    %p56 = scmp.eq.s32.totalorder %s13, 0
    %p57 = por %p55, %p56
    %p58 = scmp.ne.s32.totalorder %s44, %s45
    %p59 = scmp.eq.s32.totalorder %s14, 1
    %p60 = por %p58, %p59
    %p62 = scmp.ne.s32.totalorder %s45, %s61
    %p63 = scmp.eq.s32.totalorder %s14, 0
    %p64 = por %p62, %p63
    %s66 = sadd.s32 %s65, 1
    %p69 = scmp.eq.s32.totalorder %s8, 1
    %p70 = scmp.ne.s32.totalorder %s65, %s67
    %p71 = scmp.eq.s32.totalorder %s8, 0
    %p72 = por %p70, %p71
    %p73 = scmp.ne.s32.totalorder %s65, %s67
    %p74 = scmp.eq.s32.totalorder %s13, 1
    %p75 = por %p73, %p74
    %p76 = scmp.ne.s32.totalorder %s67, %s68
    %p77 = scmp.eq.s32.totalorder %s13, 0
    %p78 = por %p76, %p77
    %p79 = scmp.ne.s32.totalorder %s67, %s68
    %p80 = scmp.eq.s32.totalorder %s14, 1
    %p81 = por %p79, %p80
    %p83 = scmp.ne.s32.totalorder %s68, %s82
    %p84 = scmp.eq.s32.totalorder %s14, 0
    %p85 = por %p83, %p84
    %s86 = ssub.s32 %s15, %s34
    %s87 = ssub.s32 %s16, %s30
    %s88 = sor.u32 %s86, %s87
    %s89 = ssub.s32 %s17, %s26
    %s90 = sor.u32 %s88, %s89
    %p91 = scmp.eq.s32.totalorder %s90, 0
    %s93 = sadd.s32 %s92, 1
    %s94 = scalar_select %p91, %s92, %s93
    %p97 = pneg %p91
    %p98 = scmp.eq.s32.totalorder %s8, 1
    %p99 = por %p97, %p98
    %p100 = scmp.ne.s32.totalorder %s92, %s95
    %p101 = scmp.eq.s32.totalorder %s8, 0
    %p102 = por %p100, %p101
    %p103 = scmp.ne.s32.totalorder %s92, %s95
    %p104 = scmp.eq.s32.totalorder %s13, 1
    %p105 = por %p103, %p104
    %p106 = scmp.ne.s32.totalorder %s95, %s96
    %p107 = scmp.eq.s32.totalorder %s13, 0
    %p108 = por %p106, %p107
    %p109 = scmp.ne.s32.totalorder %s95, %s96
    %p110 = scmp.eq.s32.totalorder %s14, 1
    %p111 = por %p109, %p110
    %p113 = scmp.ne.s32.totalorder %s96, %s112
    %p114 = scmp.eq.s32.totalorder %s14, 0
    %p115 = por %p113, %p114
    %p116 = scmp.le.s32.totalorder 1, %s8
    %p117 = scmp.lt.s32.totalorder %s8, 3
    %p118 = pnand %p116, %p117
    %p119 = pneg %p118
    // Predicated region
    $region9: #{pixel_shuffle3d.1} parent=5 // pred_check
      _
    $region10: #{pixel_shuffle3d.1} parent=5 // pred_check_branch
      %121 = sbr.rel (%p118) target = $region12
    $region11: #{pixel_shuffle3d.1} parent=5 // pred_region
      %s122 = ssub.s32 %s8, 1
      // Predicated region
      $region13: #{pixel_shuffle3d.1} parent=11 // pred_check
        %p123 = pneg %p78
      $region14: #{pixel_shuffle3d.1} parent=11 // pred_check_branch
        %125 = sbr.rel (%p123) target = $region16
      $region15: #{pixel_shuffle3d.1} parent=11 // pred_region
        _
      $region16: #{pixel_shuffle3d.1} parent=11 // pred_fallthru
        _
    $region12: #{pixel_shuffle3d.1} parent=5 // pred_fallthru
      _
    %p126 = scmp.lt.s32.totalorder %s8, 2
    // Predicated region
    $region17: #{pixel_shuffle3d.1} parent=5 // pred_check
      %p127 = pneg %p126
    $region18: #{pixel_shuffle3d.1} parent=5 // pred_check_branch
      %129 = sbr.rel (%p127) target = $region20
    $region19: #{pixel_shuffle3d.1} parent=5 // pred_region
      // Predicated region
      $region21: #{pixel_shuffle3d.1} parent=19 // pred_check
        %p130 = pneg %p51
      $region22: #{pixel_shuffle3d.1} parent=19 // pred_check_branch
        %132 = sbr.rel (%p130) target = $region24
      $region23: #{pixel_shuffle3d.1} parent=19 // pred_region
        %s133 = smul.u32 4, %s16
        %p134 = scmp.lt.s32.totalorder %s15, 1
        %s135 = scalar_select %p134, %s15, 1
        %p136 = scmp.lt.s32.totalorder %s133, 3
        %s137 = scalar_select %p136, %s133, 3
        %p138 = scmp.lt.s32.totalorder %s17, 0
        %s139 = scalar_select %p138, %s17, 0
        %s140 = smul.addr %s137, 8
        %s141 = sadd.s32 %s139, %s140
        %s142 = smul.addr %s135, 32
        %s143 = sadd.s32 %s141, %s142
        %s144 = smul.addr %s143, 8
        %s145 = scalar_lea.vmem %s0, %s144
        %s146 = smul.u32 4, %s16
      $region24: #{pixel_shuffle3d.1} parent=19 // pred_fallthru
        _
    $region20: #{pixel_shuffle3d.1} parent=5 // pred_fallthru
      _
    %p147 = scmp.le.s32.totalorder 1, %s8
    %p148 = scmp.lt.s32.totalorder %s8, 3
    %p149 = pnand %p147, %p148
    %p150 = pneg %p149
    // Predicated region
    $region25: #{pixel_shuffle3d.1} parent=5 // pred_check
      _
    $region26: #{pixel_shuffle3d.1} parent=5 // pred_check_branch
      %152 = sbr.rel (%p149) target = $region28
    $region27: #{pixel_shuffle3d.1} parent=5 // pred_region
      %s153 = ssub.s32 %s8, 1
      %s154 = smul.u32 4, %s19
      %p155 = scmp.lt.s32.totalorder %s18, 1
      %s156 = scalar_select %p155, %s18, 1
      %p157 = scmp.lt.s32.totalorder %s154, 3
      %s158 = scalar_select %p157, %s154, 3
      %p159 = scmp.lt.s32.totalorder %s20, 0
      %s160 = scalar_select %p159, %s20, 0
      %s161 = smul.addr %s158, 8
      %s162 = sadd.s32 %s160, %s161
      %s163 = smul.addr %s156, 32
      %s164 = sadd.s32 %s162, %s163
      %s165 = smul.addr %s164, 8
      %s166 = scalar_lea.vmem %s0, %s165
      %p167 = pneg %p57
      %p168 = pneg %p54
      %p169 = pneg %p78
      %p170 = pneg %p75
      %p171 = pneg %p108
      %p172 = pneg %p105
      %s173 = smul.u32 4, %s19
      %s174 = smul.u32 2, %s20
      %p175 = scmp.lt.s32.totalorder %s18, 1
      %s176 = scalar_select %p175, %s18, 1
      %p177 = scmp.lt.s32.totalorder %s173, 3
      %s178 = scalar_select %p177, %s173, 3
      %p179 = scmp.lt.s32.totalorder %s174, 1
      %s180 = scalar_select %p179, %s174, 1
      %s181 = smul.addr %s178, 2
      %s182 = sadd.s32 %s180, %s181
      %s183 = smul.addr %s176, 8
      %s184 = sadd.s32 %s182, %s183
      %s185 = smul.addr %s184, 8
      %s186 = scalar_lea.vmem %s2, %s185
      %s187 = smul.u32 4, %s19
      %p188 = scmp.lt.s32.totalorder %s18, 1
      %s189 = scalar_select %p188, %s18, 1
      %p190 = scmp.lt.s32.totalorder %s187, 3
      %s191 = scalar_select %p190, %s187, 3
      %p192 = scmp.lt.s32.totalorder %s20, 0
      %s193 = scalar_select %p192, %s20, 0
      %s194 = smul.addr %s191, 8
      %s195 = sadd.s32 %s193, %s194
      %s196 = smul.addr %s189, 32
      %s197 = sadd.s32 %s195, %s196
      %s198 = smul.addr %s197, 8
      %s199 = scalar_lea.vmem %s0, %s198
      %s200 = smul.u32 4, %s19
      %s201 = smul.u32 4, %s19
      %s202 = smul.u32 2, %s20
      %p203 = scmp.lt.s32.totalorder %s18, 1
      %s204 = scalar_select %p203, %s18, 1
      %p205 = scmp.lt.s32.totalorder %s201, 3
      %s206 = scalar_select %p205, %s201, 3
      %p207 = scmp.lt.s32.totalorder %s202, 1
      %s208 = scalar_select %p207, %s202, 1
      %s209 = smul.addr %s206, 2
      %s210 = sadd.s32 %s208, %s209
      %s211 = smul.addr %s204, 8
      %s212 = sadd.s32 %s210, %s211
      %s213 = smul.addr %s212, 8
      %s214 = scalar_lea.vmem %s2, %s213
      %s215 = smul.u32 4, %s19
      %s216 = smul.u32 2, %s20
      %v217 = vld [vmem:[%s1] sm:$0xff]
      %v218 = vld [vmem:[%s1 + $0x8] sm:$0xff]
      %v219 = vld [vmem:[%s1 + $0x10] sm:$0xff]
      %v220 = vld [vmem:[%s1 + $0x18] sm:$0xff]
      %s221 = scalar_lea.vmem %s1, 32
      %v222 = vld [vmem:[%s221] sm:$0xff]
      %v223 = vld [vmem:[%s221 + $0x8] sm:$0xff]
      %v224 = vld [vmem:[%s221 + $0x10] sm:$0xff]
      %v225 = vld [vmem:[%s221 + $0x18] sm:$0xff]
      %s226 = scalar_lea.vmem %s1, 64
      %v227 = vld [vmem:[%s226] sm:$0xff]
      %v228 = vld [vmem:[%s226 + $0x8] sm:$0xff]
      %v229 = vld [vmem:[%s226 + $0x10] sm:$0xff]
      %v230 = vld [vmem:[%s226 + $0x18] sm:$0xff]
      %s231 = scalar_lea.vmem %s1, 96
      %v232 = vld [vmem:[%s231] sm:$0xff]
      %v233 = vld [vmem:[%s231 + $0x8] sm:$0xff]
      %v234 = vld [vmem:[%s231 + $0x10] sm:$0xff]
      %v235 = vld [vmem:[%s231 + $0x18] sm:$0xff]
      %v236 = vld [vmem:[%s199] sm:$0xff]
      %s237 = scalar_lea.vmem %s199, 8
      %v238 = vld [vmem:[%s237] sm:$0xff]
      %vm239 = vcmask 261120
      %v241 = vsel %vm239, %v238, 0
      %243 = vmatprep.subr.mxu0 0.0
      %244 = vmatpush1.msra.mxu0 %v222
      %245 = vmatprep.subr.mxu0 0.0
      %246 = vmatpush1.msra.mxu0 %v223
      %247 = vmatprep.subr.mxu0 0.0
      %248 = vmatpush1.msra.mxu0 %v224
      %249 = vmatprep.subr.mxu0 0.0
      %250 = vmatpush1.msra.mxu0 %v225
      %251 = vmatprep.subr.mxu0 0.0
      %252 = vmatpush1.msra.mxu0 0.0
      %253 = vmatprep.subr.mxu0 0.0
      %254 = vmatpush1.msra.mxu0 0.0
      %255 = vmatprep.subr.mxu0 0.0
      %256 = vmatpush1.msra.mxu0 0.0
      %257 = vmatprep.subr.mxu0 0.0
      %258 = vmatpush1.msra.mxu0 0.0
      %259 = vmatprep.subr.mxu0 0.0
      %260 = vmatpush1.msra.mxu0 0.0
      %261 = vmatprep.subr.mxu0 0.0
      %262 = vmatpush1.msra.mxu0 0.0
      %263 = vmatprep.subr.mxu0 0.0
      %264 = vmatpush1.msra.mxu0 0.0
      %265 = vmatprep.subr.mxu0 0.0
      %266 = vmatpush1.msra.mxu0 0.0
      %267 = vmatprep.subr.mxu0 0.0
      %268 = vmatpush1.msra.mxu0 0.0
      %269 = vmatprep.subr.mxu0 0.0
      %270 = vmatpush1.msra.mxu0 0.0
      %271 = vmatprep.subr.mxu0 0.0
      %272 = vmatpush1.msra.mxu0 0.0
      %273 = vmatprep.subr.mxu0 0.0
      %274 = vmatpush1.msra.mxu0 0.0
      %275 = vmatprep.subr.mxu0 0.0
      %276 = vmatpush1.msra.mxu0 0.0
      %277 = vmatprep.subr.mxu0 0.0
      %278 = vmatpush1.msra.mxu0 0.0
      %279 = vmatprep.subr.mxu0 0.0
      %280 = vmatpush1.msra.mxu0 0.0
      %281 = vmatprep.subr.mxu0 0.0
      %282 = vmatpush1.msra.mxu0 0.0
      %283 = vmatprep.subr.mxu0 0.0
      %284 = vmatpush1.msra.mxu0 0.0
      %285 = vmatprep.subr.mxu0 0.0
      %286 = vmatpush1.msra.mxu0 0.0
      %287 = vmatprep.subr.mxu0 0.0
      %288 = vmatpush1.msra.mxu0 0.0
      %289 = vmatprep.subr.mxu0 0.0
      %290 = vmatpush1.msra.mxu0 0.0
      %291 = vmatprep.subr.mxu0 0.0
      %292 = vmatpush1.msra.mxu0 0.0
      %293 = vmatprep.subr.mxu0 0.0
      %294 = vmatpush1.msra.mxu0 0.0
      %295 = vmatprep.subr.mxu0 0.0
      %296 = vmatpush1.msra.mxu0 0.0
      %297 = vmatprep.subr.mxu0 0.0
      %298 = vmatpush1.msra.mxu0 0.0
      %299 = vmatprep.subr.mxu0 0.0
      %300 = vmatpush1.msra.mxu0 0.0
      %301 = vmatprep.subr.mxu0 0.0
      %302 = vmatpush1.msra.mxu0 0.0
      %303 = vmatprep.subr.mxu0 0.0
      %304 = vmatpush1.msra.mxu0 0.0
      %305 = vmatprep.subr.mxu0 0.0
      %306 = vmatpush1.msra.mxu0 0.0
      %307 = vmatprep.mubr.f32.mxu0 0.0
      %308 = vmatmul.mubr.f32.gmra.mrb[0].mxu0 %v241
      %v309 = vpop.f32.mrb[0].mxu0
      %v310 = vadd.f32 0.0, %v309
      %v311 = vpop.f32.mrb[0].mxu0
      %312 = vdwg.mxu0
      %v314 = vsel %vm239, %v236, 0
      %316 = vmatprep.subr.mxu0 0.0
      %317 = vmatpush1.msra.mxu0 %v217
      %318 = vmatprep.subr.mxu0 0.0
      %319 = vmatpush1.msra.mxu0 %v218
      %320 = vmatprep.subr.mxu0 0.0
      %321 = vmatpush1.msra.mxu0 %v219
      %322 = vmatprep.subr.mxu0 0.0
      %323 = vmatpush1.msra.mxu0 %v220
      %324 = vmatprep.subr.mxu0 0.0
      %325 = vmatpush1.msra.mxu0 0.0
      %326 = vmatprep.subr.mxu0 0.0
      %327 = vmatpush1.msra.mxu0 0.0
      %328 = vmatprep.subr.mxu0 0.0
      %329 = vmatpush1.msra.mxu0 0.0
      %330 = vmatprep.subr.mxu0 0.0
      %331 = vmatpush1.msra.mxu0 0.0
      %332 = vmatprep.subr.mxu0 0.0
      %333 = vmatpush1.msra.mxu0 0.0
      %334 = vmatprep.subr.mxu0 0.0
      %335 = vmatpush1.msra.mxu0 0.0
      %336 = vmatprep.subr.mxu0 0.0
      %337 = vmatpush1.msra.mxu0 0.0
      %338 = vmatprep.subr.mxu0 0.0
      %339 = vmatpush1.msra.mxu0 0.0
      %340 = vmatprep.subr.mxu0 0.0
      %341 = vmatpush1.msra.mxu0 0.0
      %342 = vmatprep.subr.mxu0 0.0
      %343 = vmatpush1.msra.mxu0 0.0
      %344 = vmatprep.subr.mxu0 0.0
      %345 = vmatpush1.msra.mxu0 0.0
      %346 = vmatprep.subr.mxu0 0.0
      %347 = vmatpush1.msra.mxu0 0.0
      %348 = vmatprep.subr.mxu0 0.0
      %349 = vmatpush1.msra.mxu0 0.0
      %350 = vmatprep.subr.mxu0 0.0
      %351 = vmatpush1.msra.mxu0 0.0
      %352 = vmatprep.subr.mxu0 0.0
      %353 = vmatpush1.msra.mxu0 0.0
      %354 = vmatprep.subr.mxu0 0.0
      %355 = vmatpush1.msra.mxu0 0.0
      %356 = vmatprep.subr.mxu0 0.0
      %357 = vmatpush1.msra.mxu0 0.0
      %358 = vmatprep.subr.mxu0 0.0
      %359 = vmatpush1.msra.mxu0 0.0
      %360 = vmatprep.subr.mxu0 0.0
      %361 = vmatpush1.msra.mxu0 0.0
      %362 = vmatprep.subr.mxu0 0.0
      %363 = vmatpush1.msra.mxu0 0.0
      %364 = vmatprep.subr.mxu0 0.0
      %365 = vmatpush1.msra.mxu0 0.0
      %366 = vmatprep.subr.mxu0 0.0
      %367 = vmatpush1.msra.mxu0 0.0
      %368 = vmatprep.subr.mxu0 0.0
      %369 = vmatpush1.msra.mxu0 0.0
      %370 = vmatprep.subr.mxu0 0.0
      %371 = vmatpush1.msra.mxu0 0.0
      %372 = vmatprep.subr.mxu0 0.0
      %373 = vmatpush1.msra.mxu0 0.0
      %374 = vmatprep.subr.mxu0 0.0
      %375 = vmatpush1.msra.mxu0 0.0
      %376 = vmatprep.subr.mxu0 0.0
      %377 = vmatpush1.msra.mxu0 0.0
      %378 = vmatprep.subr.mxu0 0.0
      %379 = vmatpush1.msra.mxu0 0.0
      %380 = vmatprep.mubr.f32.mxu0 0.0
      %381 = vmatmul.mubr.f32.gmra.mrb[0].mxu0 %v314
      %v382 = vpop.f32.mrb[0].mxu0
      %v383 = vadd.f32 %v310, %v382
      %v384 = vpop.f32.mrb[0].mxu0
      %385 = vdwg.mxu0
      %s386 = scalar_lea.vmem %s199, 16
      %v387 = vld [vmem:[%s386] sm:$0xff]
      %v389 = vsel %vm239, %v387, 0
      %391 = vmatprep.subr.mxu0 0.0
      %392 = vmatpush1.msra.mxu0 %v227
      %393 = vmatprep.subr.mxu0 0.0
      %394 = vmatpush1.msra.mxu0 %v228
      %395 = vmatprep.subr.mxu0 0.0
      %396 = vmatpush1.msra.mxu0 %v229
      %397 = vmatprep.subr.mxu0 0.0
      %398 = vmatpush1.msra.mxu0 %v230
      %399 = vmatprep.subr.mxu0 0.0
      %400 = vmatpush1.msra.mxu0 0.0
      %401 = vmatprep.subr.mxu0 0.0
      %402 = vmatpush1.msra.mxu0 0.0
      %403 = vmatprep.subr.mxu0 0.0
      %404 = vmatpush1.msra.mxu0 0.0
      %405 = vmatprep.subr.mxu0 0.0
      %406 = vmatpush1.msra.mxu0 0.0
      %407 = vmatprep.subr.mxu0 0.0
      %408 = vmatpush1.msra.mxu0 0.0
      %409 = vmatprep.subr.mxu0 0.0
      %410 = vmatpush1.msra.mxu0 0.0
      %411 = vmatprep.subr.mxu0 0.0
      %412 = vmatpush1.msra.mxu0 0.0
      %413 = vmatprep.subr.mxu0 0.0
      %414 = vmatpush1.msra.mxu0 0.0
      %415 = vmatprep.subr.mxu0 0.0
      %416 = vmatpush1.msra.mxu0 0.0
      %417 = vmatprep.subr.mxu0 0.0
      %418 = vmatpush1.msra.mxu0 0.0
      %419 = vmatprep.subr.mxu0 0.0
      %420 = vmatpush1.msra.mxu0 0.0
      %421 = vmatprep.subr.mxu0 0.0
      %422 = vmatpush1.msra.mxu0 0.0
      %423 = vmatprep.subr.mxu0 0.0
      %424 = vmatpush1.msra.mxu0 0.0
      %425 = vmatprep.subr.mxu0 0.0
      %426 = vmatpush1.msra.mxu0 0.0
      %427 = vmatprep.subr.mxu0 0.0
      %428 = vmatpush1.msra.mxu0 0.0
      %429 = vmatprep.subr.mxu0 0.0
      %430 = vmatpush1.msra.mxu0 0.0
      %431 = vmatprep.subr.mxu0 0.0
      %432 = vmatpush1.msra.mxu0 0.0
      %433 = vmatprep.subr.mxu0 0.0
      %434 = vmatpush1.msra.mxu0 0.0
      %435 = vmatprep.subr.mxu0 0.0
      %436 = vmatpush1.msra.mxu0 0.0
      %437 = vmatprep.subr.mxu0 0.0
      %438 = vmatpush1.msra.mxu0 0.0
      %439 = vmatprep.subr.mxu0 0.0
      %440 = vmatpush1.msra.mxu0 0.0
      %441 = vmatprep.subr.mxu0 0.0
      %442 = vmatpush1.msra.mxu0 0.0
      %443 = vmatprep.subr.mxu0 0.0
      %444 = vmatpush1.msra.mxu0 0.0
      %445 = vmatprep.subr.mxu0 0.0
      %446 = vmatpush1.msra.mxu0 0.0
      %447 = vmatprep.subr.mxu0 0.0
      %448 = vmatpush1.msra.mxu0 0.0
      %449 = vmatprep.subr.mxu0 0.0
      %450 = vmatpush1.msra.mxu0 0.0
      %451 = vmatprep.subr.mxu0 0.0
      %452 = vmatpush1.msra.mxu0 0.0
      %453 = vmatprep.subr.mxu0 0.0
      %454 = vmatpush1.msra.mxu0 0.0
      %455 = vmatprep.mubr.f32.mxu0 0.0
      %456 = vmatmul.mubr.f32.gmra.mrb[0].mxu0 %v389
      %v457 = vpop.f32.mrb[0].mxu0
      %v458 = vadd.f32 0.0, %v457
      %v459 = vpop.f32.mrb[0].mxu0
      %460 = vdwg.mxu0
      %v461 = vadd.f32 %v383, %v458
      %s462 = scalar_lea.vmem %s199, 24
      %v463 = vld [vmem:[%s462] sm:$0xff]
      %v465 = vsel %vm239, %v463, 0
      %467 = vmatprep.subr.mxu0 0.0
      %468 = vmatpush1.msra.mxu0 %v232
      %469 = vmatprep.subr.mxu0 0.0
      %470 = vmatpush1.msra.mxu0 %v233
      %471 = vmatprep.subr.mxu0 0.0
      %472 = vmatpush1.msra.mxu0 %v234
      %473 = vmatprep.subr.mxu0 0.0
      %474 = vmatpush1.msra.mxu0 %v235
      %475 = vmatprep.subr.mxu0 0.0
      %476 = vmatpush1.msra.mxu0 0.0
      %477 = vmatprep.subr.mxu0 0.0
      %478 = vmatpush1.msra.mxu0 0.0
      %479 = vmatprep.subr.mxu0 0.0
      %480 = vmatpush1.msra.mxu0 0.0
      %481 = vmatprep.subr.mxu0 0.0
      %482 = vmatpush1.msra.mxu0 0.0
      %483 = vmatprep.subr.mxu0 0.0
      %484 = vmatpush1.msra.mxu0 0.0
      %485 = vmatprep.subr.mxu0 0.0
      %486 = vmatpush1.msra.mxu0 0.0
      %487 = vmatprep.subr.mxu0 0.0
      %488 = vmatpush1.msra.mxu0 0.0
      %489 = vmatprep.subr.mxu0 0.0
      %490 = vmatpush1.msra.mxu0 0.0
      %491 = vmatprep.subr.mxu0 0.0
      %492 = vmatpush1.msra.mxu0 0.0
      %493 = vmatprep.subr.mxu0 0.0
      %494 = vmatpush1.msra.mxu0 0.0
      %495 = vmatprep.subr.mxu0 0.0
      %496 = vmatpush1.msra.mxu0 0.0
      %497 = vmatprep.subr.mxu0 0.0
      %498 = vmatpush1.msra.mxu0 0.0
      %499 = vmatprep.subr.mxu0 0.0
      %500 = vmatpush1.msra.mxu0 0.0
      %501 = vmatprep.subr.mxu0 0.0
      %502 = vmatpush1.msra.mxu0 0.0
      %503 = vmatprep.subr.mxu0 0.0
      %504 = vmatpush1.msra.mxu0 0.0
      %505 = vmatprep.subr.mxu0 0.0
      %506 = vmatpush1.msra.mxu0 0.0
      %507 = vmatprep.subr.mxu0 0.0
      %508 = vmatpush1.msra.mxu0 0.0
      %509 = vmatprep.subr.mxu0 0.0
      %510 = vmatpush1.msra.mxu0 0.0
      %511 = vmatprep.subr.mxu0 0.0
      %512 = vmatpush1.msra.mxu0 0.0
      %513 = vmatprep.subr.mxu0 0.0
      %514 = vmatpush1.msra.mxu0 0.0
      %515 = vmatprep.subr.mxu0 0.0
      %516 = vmatpush1.msra.mxu0 0.0
      %517 = vmatprep.subr.mxu0 0.0
      %518 = vmatpush1.msra.mxu0 0.0
      %519 = vmatprep.subr.mxu0 0.0
      %520 = vmatpush1.msra.mxu0 0.0
      %521 = vmatprep.subr.mxu0 0.0
      %522 = vmatpush1.msra.mxu0 0.0
      %523 = vmatprep.subr.mxu0 0.0
      %524 = vmatpush1.msra.mxu0 0.0
      %525 = vmatprep.subr.mxu0 0.0
      %526 = vmatpush1.msra.mxu0 0.0
      %527 = vmatprep.subr.mxu0 0.0
      %528 = vmatpush1.msra.mxu0 0.0
      %529 = vmatprep.subr.mxu0 0.0
      %530 = vmatpush1.msra.mxu0 0.0
      %531 = vmatprep.mubr.f32.mxu0 0.0
      %532 = vmatmul.mubr.f32.gmra.mrb[0].mxu0 %v465
      %v533 = vpop.f32.mrb[0].mxu0
      %v534 = vadd.f32 0.0, %v533
      %v535 = vpop.f32.mrb[0].mxu0
      %536 = vdwg.mxu0
      %v537 = vadd.f32 %v461, %v534
      %538 = vst [vmem:[%s214] sm:$0x3] %v537
      %539 = vst [vmem:[%s214 + $0x2] sm:$0xc] %v537
      %540 = vst [vmem:[%s214 + $0x4] sm:$0x30] %v537
      %541 = vst [vmem:[%s214 + $0x6] sm:$0xc0] %v537
      %s542 = scalar_lea.vmem %s199, 32
      %v543 = vld [vmem:[%s542] sm:$0xff]
      %s544 = scalar_lea.vmem %s199, 40
      %v545 = vld [vmem:[%s544] sm:$0xff]
      %v547 = vsel %vm239, %v545, 0
      %549 = vmatprep.subr.mxu0 0.0
      %550 = vmatpush1.msra.mxu0 %v222
      %551 = vmatprep.subr.mxu0 0.0
      %552 = vmatpush1.msra.mxu0 %v223
      %553 = vmatprep.subr.mxu0 0.0
      %554 = vmatpush1.msra.mxu0 %v224
      %555 = vmatprep.subr.mxu0 0.0
      %556 = vmatpush1.msra.mxu0 %v225
      %557 = vmatprep.subr.mxu0 0.0
      %558 = vmatpush1.msra.mxu0 0.0
      %559 = vmatprep.subr.mxu0 0.0
      %560 = vmatpush1.msra.mxu0 0.0
      %561 = vmatprep.subr.mxu0 0.0
      %562 = vmatpush1.msra.mxu0 0.0
      %563 = vmatprep.subr.mxu0 0.0
      %564 = vmatpush1.msra.mxu0 0.0
      %565 = vmatprep.subr.mxu0 0.0
      %566 = vmatpush1.msra.mxu0 0.0
      %567 = vmatprep.subr.mxu0 0.0
      %568 = vmatpush1.msra.mxu0 0.0
      %569 = vmatprep.subr.mxu0 0.0
      %570 = vmatpush1.msra.mxu0 0.0
      %571 = vmatprep.subr.mxu0 0.0
      %572 = vmatpush1.msra.mxu0 0.0
      %573 = vmatprep.subr.mxu0 0.0
      %574 = vmatpush1.msra.mxu0 0.0
      %575 = vmatprep.subr.mxu0 0.0
      %576 = vmatpush1.msra.mxu0 0.0
      %577 = vmatprep.subr.mxu0 0.0
      %578 = vmatpush1.msra.mxu0 0.0
      %579 = vmatprep.subr.mxu0 0.0
      %580 = vmatpush1.msra.mxu0 0.0
      %581 = vmatprep.subr.mxu0 0.0
      %582 = vmatpush1.msra.mxu0 0.0
      %583 = vmatprep.subr.mxu0 0.0
      %584 = vmatpush1.msra.mxu0 0.0
      %585 = vmatprep.subr.mxu0 0.0
      %586 = vmatpush1.msra.mxu0 0.0
      %587 = vmatprep.subr.mxu0 0.0
      %588 = vmatpush1.msra.mxu0 0.0
      %589 = vmatprep.subr.mxu0 0.0
      %590 = vmatpush1.msra.mxu0 0.0
      %591 = vmatprep.subr.mxu0 0.0
      %592 = vmatpush1.msra.mxu0 0.0
      %593 = vmatprep.subr.mxu0 0.0
      %594 = vmatpush1.msra.mxu0 0.0
      %595 = vmatprep.subr.mxu0 0.0
      %596 = vmatpush1.msra.mxu0 0.0
      %597 = vmatprep.subr.mxu0 0.0
      %598 = vmatpush1.msra.mxu0 0.0
      %599 = vmatprep.subr.mxu0 0.0
      %600 = vmatpush1.msra.mxu0 0.0
      %601 = vmatprep.subr.mxu0 0.0
      %602 = vmatpush1.msra.mxu0 0.0
      %603 = vmatprep.subr.mxu0 0.0
      %604 = vmatpush1.msra.mxu0 0.0
      %605 = vmatprep.subr.mxu0 0.0
      %606 = vmatpush1.msra.mxu0 0.0
      %607 = vmatprep.subr.mxu0 0.0
      %608 = vmatpush1.msra.mxu0 0.0
      %609 = vmatprep.subr.mxu0 0.0
      %610 = vmatpush1.msra.mxu0 0.0
      %611 = vmatprep.subr.mxu0 0.0
      %612 = vmatpush1.msra.mxu0 0.0
      %613 = vmatprep.mubr.f32.mxu0 0.0
      %614 = vmatmul.mubr.f32.gmra.mrb[0].mxu0 %v547
      %v615 = vpop.f32.mrb[0].mxu0
      %v616 = vadd.f32 0.0, %v615
      %v617 = vpop.f32.mrb[0].mxu0
      %618 = vdwg.mxu0
      %v620 = vsel %vm239, %v543, 0
      %622 = vmatprep.subr.mxu0 0.0
      %623 = vmatpush1.msra.mxu0 %v217
      %624 = vmatprep.subr.mxu0 0.0
      %625 = vmatpush1.msra.mxu0 %v218
      %626 = vmatprep.subr.mxu0 0.0
      %627 = vmatpush1.msra.mxu0 %v219
      %628 = vmatprep.subr.mxu0 0.0
      %629 = vmatpush1.msra.mxu0 %v220
      %630 = vmatprep.subr.mxu0 0.0
      %631 = vmatpush1.msra.mxu0 0.0
      %632 = vmatprep.subr.mxu0 0.0
      %633 = vmatpush1.msra.mxu0 0.0
      %634 = vmatprep.subr.mxu0 0.0
      %635 = vmatpush1.msra.mxu0 0.0
      %636 = vmatprep.subr.mxu0 0.0
      %637 = vmatpush1.msra.mxu0 0.0
      %638 = vmatprep.subr.mxu0 0.0
      %639 = vmatpush1.msra.mxu0 0.0
      %640 = vmatprep.subr.mxu0 0.0
      %641 = vmatpush1.msra.mxu0 0.0
      %642 = vmatprep.subr.mxu0 0.0
      %643 = vmatpush1.msra.mxu0 0.0
      %644 = vmatprep.subr.mxu0 0.0
      %645 = vmatpush1.msra.mxu0 0.0
      %646 = vmatprep.subr.mxu0 0.0
      %647 = vmatpush1.msra.mxu0 0.0
      %648 = vmatprep.subr.mxu0 0.0
      %649 = vmatpush1.msra.mxu0 0.0
      %650 = vmatprep.subr.mxu0 0.0
      %651 = vmatpush1.msra.mxu0 0.0
      %652 = vmatprep.subr.mxu0 0.0
      %653 = vmatpush1.msra.mxu0 0.0
      %654 = vmatprep.subr.mxu0 0.0
      %655 = vmatpush1.msra.mxu0 0.0
      %656 = vmatprep.subr.mxu0 0.0
      %657 = vmatpush1.msra.mxu0 0.0
      %658 = vmatprep.subr.mxu0 0.0
      %659 = vmatpush1.msra.mxu0 0.0
      %660 = vmatprep.subr.mxu0 0.0
      %661 = vmatpush1.msra.mxu0 0.0
      %662 = vmatprep.subr.mxu0 0.0
      %663 = vmatpush1.msra.mxu0 0.0
      %664 = vmatprep.subr.mxu0 0.0
      %665 = vmatpush1.msra.mxu0 0.0
      %666 = vmatprep.subr.mxu0 0.0
      %667 = vmatpush1.msra.mxu0 0.0
      %668 = vmatprep.subr.mxu0 0.0
      %669 = vmatpush1.msra.mxu0 0.0
      %670 = vmatprep.subr.mxu0 0.0
      %671 = vmatpush1.msra.mxu0 0.0
      %672 = vmatprep.subr.mxu0 0.0
      %673 = vmatpush1.msra.mxu0 0.0
      %674 = vmatprep.subr.mxu0 0.0
      %675 = vmatpush1.msra.mxu0 0.0
      %676 = vmatprep.subr.mxu0 0.0
      %677 = vmatpush1.msra.mxu0 0.0
      %678 = vmatprep.subr.mxu0 0.0
      %679 = vmatpush1.msra.mxu0 0.0
      %680 = vmatprep.subr.mxu0 0.0
      %681 = vmatpush1.msra.mxu0 0.0
      %682 = vmatprep.subr.mxu0 0.0
      %683 = vmatpush1.msra.mxu0 0.0
      %684 = vmatprep.subr.mxu0 0.0
      %685 = vmatpush1.msra.mxu0 0.0
      %686 = vmatprep.mubr.f32.mxu0 0.0
      %687 = vmatmul.mubr.f32.gmra.mrb[0].mxu0 %v620
      %v688 = vpop.f32.mrb[0].mxu0
      %v689 = vadd.f32 %v616, %v688
      %v690 = vpop.f32.mrb[0].mxu0
      %691 = vdwg.mxu0
      %s692 = scalar_lea.vmem %s199, 48
      %v693 = vld [vmem:[%s692] sm:$0xff]
      %v695 = vsel %vm239, %v693, 0
      %697 = vmatprep.subr.mxu0 0.0
      %698 = vmatpush1.msra.mxu0 %v227
      %699 = vmatprep.subr.mxu0 0.0
      %700 = vmatpush1.msra.mxu0 %v228
      %701 = vmatprep.subr.mxu0 0.0
      %702 = vmatpush1.msra.mxu0 %v229
      %703 = vmatprep.subr.mxu0 0.0
      %704 = vmatpush1.msra.mxu0 %v230
      %705 = vmatprep.subr.mxu0 0.0
      %706 = vmatpush1.msra.mxu0 0.0
      %707 = vmatprep.subr.mxu0 0.0
      %708 = vmatpush1.msra.mxu0 0.0
      %709 = vmatprep.subr.mxu0 0.0
      %710 = vmatpush1.msra.mxu0 0.0
      %711 = vmatprep.subr.mxu0 0.0
      %712 = vmatpush1.msra.mxu0 0.0
      %713 = vmatprep.subr.mxu0 0.0
      %714 = vmatpush1.msra.mxu0 0.0
      %715 = vmatprep.subr.mxu0 0.0
      %716 = vmatpush1.msra.mxu0 0.0
      %717 = vmatprep.subr.mxu0 0.0
      %718 = vmatpush1.msra.mxu0 0.0
      %719 = vmatprep.subr.mxu0 0.0
      %720 = vmatpush1.msra.mxu0 0.0
      %721 = vmatprep.subr.mxu0 0.0
      %722 = vmatpush1.msra.mxu0 0.0
      %723 = vmatprep.subr.mxu0 0.0
      %724 = vmatpush1.msra.mxu0 0.0
      %725 = vmatprep.subr.mxu0 0.0
      %726 = vmatpush1.msra.mxu0 0.0
      %727 = vmatprep.subr.mxu0 0.0
      %728 = vmatpush1.msra.mxu0 0.0
      %729 = vmatprep.subr.mxu0 0.0
      %730 = vmatpush1.msra.mxu0 0.0
      %731 = vmatprep.subr.mxu0 0.0
      %732 = vmatpush1.msra.mxu0 0.0
      %733 = vmatprep.subr.mxu0 0.0
      %734 = vmatpush1.msra.mxu0 0.0
      %735 = vmatprep.subr.mxu0 0.0
      %736 = vmatpush1.msra.mxu0 0.0
      %737 = vmatprep.subr.mxu0 0.0
      %738 = vmatpush1.msra.mxu0 0.0
      %739 = vmatprep.subr.mxu0 0.0
      %740 = vmatpush1.msra.mxu0 0.0
      %741 = vmatprep.subr.mxu0 0.0
      %742 = vmatpush1.msra.mxu0 0.0
      %743 = vmatprep.subr.mxu0 0.0
      %744 = vmatpush1.msra.mxu0 0.0
      %745 = vmatprep.subr.mxu0 0.0
      %746 = vmatpush1.msra.mxu0 0.0
      %747 = vmatprep.subr.mxu0 0.0
      %748 = vmatpush1.msra.mxu0 0.0
      %749 = vmatprep.subr.mxu0 0.0
      %750 = vmatpush1.msra.mxu0 0.0
      %751 = vmatprep.subr.mxu0 0.0
      %752 = vmatpush1.msra.mxu0 0.0
      %753 = vmatprep.subr.mxu0 0.0
      %754 = vmatpush1.msra.mxu0 0.0
      %755 = vmatprep.subr.mxu0 0.0
      %756 = vmatpush1.msra.mxu0 0.0
      %757 = vmatprep.subr.mxu0 0.0
      %758 = vmatpush1.msra.mxu0 0.0
      %759 = vmatprep.subr.mxu0 0.0
      %760 = vmatpush1.msra.mxu0 0.0
      %761 = vmatprep.mubr.f32.mxu0 0.0
      %762 = vmatmul.mubr.f32.gmra.mrb[0].mxu0 %v695
      %v763 = vpop.f32.mrb[0].mxu0
      %v764 = vadd.f32 0.0, %v763
      %v765 = vpop.f32.mrb[0].mxu0
      %766 = vdwg.mxu0
      %v767 = vadd.f32 %v689, %v764
      %s768 = scalar_lea.vmem %s199, 56
      %v769 = vld [vmem:[%s768] sm:$0xff]
      %v771 = vsel %vm239, %v769, 0
      %773 = vmatprep.subr.mxu0 0.0
      %774 = vmatpush1.msra.mxu0 %v232
      %775 = vmatprep.subr.mxu0 0.0
      %776 = vmatpush1.msra.mxu0 %v233
      %777 = vmatprep.subr.mxu0 0.0
      %778 = vmatpush1.msra.mxu0 %v234
      %779 = vmatprep.subr.mxu0 0.0
      %780 = vmatpush1.msra.mxu0 %v235
      %781 = vmatprep.subr.mxu0 0.0
      %782 = vmatpush1.msra.mxu0 0.0
      %783 = vmatprep.subr.mxu0 0.0
      %784 = vmatpush1.msra.mxu0 0.0
      %785 = vmatprep.subr.mxu0 0.0
      %786 = vmatpush1.msra.mxu0 0.0
      %787 = vmatprep.subr.mxu0 0.0
      %788 = vmatpush1.msra.mxu0 0.0
      %789 = vmatprep.subr.mxu0 0.0
      %790 = vmatpush1.msra.mxu0 0.0
      %791 = vmatprep.subr.mxu0 0.0
      %792 = vmatpush1.msra.mxu0 0.0
      %793 = vmatprep.subr.mxu0 0.0
      %794 = vmatpush1.msra.mxu0 0.0
      %795 = vmatprep.subr.mxu0 0.0
      %796 = vmatpush1.msra.mxu0 0.0
      %797 = vmatprep.subr.mxu0 0.0
      %798 = vmatpush1.msra.mxu0 0.0
      %799 = vmatprep.subr.mxu0 0.0
      %800 = vmatpush1.msra.mxu0 0.0
      %801 = vmatprep.subr.mxu0 0.0
      %802 = vmatpush1.msra.mxu0 0.0
      %803 = vmatprep.subr.mxu0 0.0
      %804 = vmatpush1.msra.mxu0 0.0
      %805 = vmatprep.subr.mxu0 0.0
      %806 = vmatpush1.msra.mxu0 0.0
      %807 = vmatprep.subr.mxu0 0.0
      %808 = vmatpush1.msra.mxu0 0.0
      %809 = vmatprep.subr.mxu0 0.0
      %810 = vmatpush1.msra.mxu0 0.0
      %811 = vmatprep.subr.mxu0 0.0
      %812 = vmatpush1.msra.mxu0 0.0
      %813 = vmatprep.subr.mxu0 0.0
      %814 = vmatpush1.msra.mxu0 0.0
      %815 = vmatprep.subr.mxu0 0.0
      %816 = vmatpush1.msra.mxu0 0.0
      %817 = vmatprep.subr.mxu0 0.0
      %818 = vmatpush1.msra.mxu0 0.0
      %819 = vmatprep.subr.mxu0 0.0
      %820 = vmatpush1.msra.mxu0 0.0
      %821 = vmatprep.subr.mxu0 0.0
      %822 = vmatpush1.msra.mxu0 0.0
      %823 = vmatprep.subr.mxu0 0.0
      %824 = vmatpush1.msra.mxu0 0.0
      %825 = vmatprep.subr.mxu0 0.0
      %826 = vmatpush1.msra.mxu0 0.0
      %827 = vmatprep.subr.mxu0 0.0
      %828 = vmatpush1.msra.mxu0 0.0
      %829 = vmatprep.subr.mxu0 0.0
      %830 = vmatpush1.msra.mxu0 0.0
      %831 = vmatprep.subr.mxu0 0.0
      %832 = vmatpush1.msra.mxu0 0.0
      %833 = vmatprep.subr.mxu0 0.0
      %834 = vmatpush1.msra.mxu0 0.0
      %835 = vmatprep.subr.mxu0 0.0
      %836 = vmatpush1.msra.mxu0 0.0
      %837 = vmatprep.mubr.f32.mxu0 0.0
      %838 = vmatmul.mubr.f32.gmra.mrb[0].mxu0 %v771
      %v839 = vpop.f32.mrb[0].mxu0
      %v840 = vadd.f32 0.0, %v839
      %v841 = vpop.f32.mrb[0].mxu0
      %842 = vdwg.mxu0
      %v843 = vadd.f32 %v767, %v840
      %844 = vst [vmem:[%s214 + $0x2] sm:$0x3] %v843
      %845 = vst [vmem:[%s214 + $0x4] sm:$0xc] %v843
      %846 = vst [vmem:[%s214 + $0x6] sm:$0x30] %v843
      %847 = vst [vmem:[%s214 + $0x8] sm:$0xc0] %v843
      %s848 = scalar_lea.vmem %s199, 64
      %v849 = vld [vmem:[%s848] sm:$0xff]
      %s850 = scalar_lea.vmem %s199, 72
      %v851 = vld [vmem:[%s850] sm:$0xff]
      %v853 = vsel %vm239, %v851, 0
      %855 = vmatprep.subr.mxu0 0.0
      %856 = vmatpush1.msra.mxu0 %v222
      %857 = vmatprep.subr.mxu0 0.0
      %858 = vmatpush1.msra.mxu0 %v223
      %859 = vmatprep.subr.mxu0 0.0
      %860 = vmatpush1.msra.mxu0 %v224
      %861 = vmatprep.subr.mxu0 0.0
      %862 = vmatpush1.msra.mxu0 %v225
      %863 = vmatprep.subr.mxu0 0.0
      %864 = vmatpush1.msra.mxu0 0.0
      %865 = vmatprep.subr.mxu0 0.0
      %866 = vmatpush1.msra.mxu0 0.0
      %867 = vmatprep.subr.mxu0 0.0
      %868 = vmatpush1.msra.mxu0 0.0
      %869 = vmatprep.subr.mxu0 0.0
      %870 = vmatpush1.msra.mxu0 0.0
      %871 = vmatprep.subr.mxu0 0.0
      %872 = vmatpush1.msra.mxu0 0.0
      %873 = vmatprep.subr.mxu0 0.0
      %874 = vmatpush1.msra.mxu0 0.0
      %875 = vmatprep.subr.mxu0 0.0
      %876 = vmatpush1.msra.mxu0 0.0
      %877 = vmatprep.subr.mxu0 0.0
      %878 = vmatpush1.msra.mxu0 0.0
      %879 = vmatprep.subr.mxu0 0.0
      %880 = vmatpush1.msra.mxu0 0.0
      %881 = vmatprep.subr.mxu0 0.0
      %882 = vmatpush1.msra.mxu0 0.0
      %883 = vmatprep.subr.mxu0 0.0
      %884 = vmatpush1.msra.mxu0 0.0
      %885 = vmatprep.subr.mxu0 0.0
      %886 = vmatpush1.msra.mxu0 0.0
      %887 = vmatprep.subr.mxu0 0.0
      %888 = vmatpush1.msra.mxu0 0.0
      %889 = vmatprep.subr.mxu0 0.0
      %890 = vmatpush1.msra.mxu0 0.0
      %891 = vmatprep.subr.mxu0 0.0
      %892 = vmatpush1.msra.mxu0 0.0
      %893 = vmatprep.subr.mxu0 0.0
      %894 = vmatpush1.msra.mxu0 0.0
      %895 = vmatprep.subr.mxu0 0.0
      %896 = vmatpush1.msra.mxu0 0.0
      %897 = vmatprep.subr.mxu0 0.0
      %898 = vmatpush1.msra.mxu0 0.0
      %899 = vmatprep.subr.mxu0 0.0
      %900 = vmatpush1.msra.mxu0 0.0
      %901 = vmatprep.subr.mxu0 0.0
      %902 = vmatpush1.msra.mxu0 0.0
      %903 = vmatprep.subr.mxu0 0.0
      %904 = vmatpush1.msra.mxu0 0.0
      %905 = vmatprep.subr.mxu0 0.0
      %906 = vmatpush1.msra.mxu0 0.0
      %907 = vmatprep.subr.mxu0 0.0
      %908 = vmatpush1.msra.mxu0 0.0
      %909 = vmatprep.subr.mxu0 0.0
      %910 = vmatpush1.msra.mxu0 0.0
      %911 = vmatprep.subr.mxu0 0.0
      %912 = vmatpush1.msra.mxu0 0.0
      %913 = vmatprep.subr.mxu0 0.0
      %914 = vmatpush1.msra.mxu0 0.0
      %915 = vmatprep.subr.mxu0 0.0
      %916 = vmatpush1.msra.mxu0 0.0
      %917 = vmatprep.subr.mxu0 0.0
      %918 = vmatpush1.msra.mxu0 0.0
      %919 = vmatprep.mubr.f32.mxu0 0.0
      %920 = vmatmul.mubr.f32.gmra.mrb[0].mxu0 %v853
      %v921 = vpop.f32.mrb[0].mxu0
      %v922 = vadd.f32 0.0, %v921
      %v923 = vpop.f32.mrb[0].mxu0
      %924 = vdwg.mxu0
      %v926 = vsel %vm239, %v849, 0
      %928 = vmatprep.subr.mxu0 0.0
      %929 = vmatpush1.msra.mxu0 %v217
      %930 = vmatprep.subr.mxu0 0.0
      %931 = vmatpush1.msra.mxu0 %v218
      %932 = vmatprep.subr.mxu0 0.0
      %933 = vmatpush1.msra.mxu0 %v219
      %934 = vmatprep.subr.mxu0 0.0
      %935 = vmatpush1.msra.mxu0 %v220
      %936 = vmatprep.subr.mxu0 0.0
      %937 = vmatpush1.msra.mxu0 0.0
      %938 = vmatprep.subr.mxu0 0.0
      %939 = vmatpush1.msra.mxu0 0.0
      %940 = vmatprep.subr.mxu0 0.0
      %941 = vmatpush1.msra.mxu0 0.0
      %942 = vmatprep.subr.mxu0 0.0
      %943 = vmatpush1.msra.mxu0 0.0
      %944 = vmatprep.subr.mxu0 0.0
      %945 = vmatpush1.msra.mxu0 0.0
      %946 = vmatprep.subr.mxu0 0.0
      %947 = vmatpush1.msra.mxu0 0.0
      %948 = vmatprep.subr.mxu0 0.0
      %949 = vmatpush1.msra.mxu0 0.0
      %950 = vmatprep.subr.mxu0 0.0
      %951 = vmatpush1.msra.mxu0 0.0
      %952 = vmatprep.subr.mxu0 0.0
      %953 = vmatpush1.msra.mxu0 0.0
      %954 = vmatprep.subr.mxu0 0.0
      %955 = vmatpush1.msra.mxu0 0.0
      %956 = vmatprep.subr.mxu0 0.0
      %957 = vmatpush1.msra.mxu0 0.0
      %958 = vmatprep.subr.mxu0 0.0
      %959 = vmatpush1.msra.mxu0 0.0
      %960 = vmatprep.subr.mxu0 0.0
      %961 = vmatpush1.msra.mxu0 0.0
      %962 = vmatprep.subr.mxu0 0.0
      %963 = vmatpush1.msra.mxu0 0.0
      %964 = vmatprep.subr.mxu0 0.0
      %965 = vmatpush1.msra.mxu0 0.0
      %966 = vmatprep.subr.mxu0 0.0
      %967 = vmatpush1.msra.mxu0 0.0
      %968 = vmatprep.subr.mxu0 0.0
      %969 = vmatpush1.msra.mxu0 0.0
      %970 = vmatprep.subr.mxu0 0.0
      %971 = vmatpush1.msra.mxu0 0.0
      %972 = vmatprep.subr.mxu0 0.0
      %973 = vmatpush1.msra.mxu0 0.0
      %974 = vmatprep.subr.mxu0 0.0
      %975 = vmatpush1.msra.mxu0 0.0
      %976 = vmatprep.subr.mxu0 0.0
      %977 = vmatpush1.msra.mxu0 0.0
      %978 = vmatprep.subr.mxu0 0.0
      %979 = vmatpush1.msra.mxu0 0.0
      %980 = vmatprep.subr.mxu0 0.0
      %981 = vmatpush1.msra.mxu0 0.0
      %982 = vmatprep.subr.mxu0 0.0
      %983 = vmatpush1.msra.mxu0 0.0
      %984 = vmatprep.subr.mxu0 0.0
      %985 = vmatpush1.msra.mxu0 0.0
      %986 = vmatprep.subr.mxu0 0.0
      %987 = vmatpush1.msra.mxu0 0.0
      %988 = vmatprep.subr.mxu0 0.0
      %989 = vmatpush1.msra.mxu0 0.0
      %990 = vmatprep.subr.mxu0 0.0
      %991 = vmatpush1.msra.mxu0 0.0
      %992 = vmatprep.mubr.f32.mxu0 0.0
      %993 = vmatmul.mubr.f32.gmra.mrb[0].mxu0 %v926
      %v994 = vpop.f32.mrb[0].mxu0
      %v995 = vadd.f32 %v922, %v994
      %v996 = vpop.f32.mrb[0].mxu0
      %997 = vdwg.mxu0
      %s998 = scalar_lea.vmem %s199, 80
      %v999 = vld [vmem:[%s998] sm:$0xff]
      %v1001 = vsel %vm239, %v999, 0
      %1003 = vmatprep.subr.mxu0 0.0
      %1004 = vmatpush1.msra.mxu0 %v227
      %1005 = vmatprep.subr.mxu0 0.0
      %1006 = vmatpush1.msra.mxu0 %v228
      %1007 = vmatprep.subr.mxu0 0.0
      %1008 = vmatpush1.msra.mxu0 %v229
      %1009 = vmatprep.subr.mxu0 0.0
      %1010 = vmatpush1.msra.mxu0 %v230
      %1011 = vmatprep.subr.mxu0 0.0
      %1012 = vmatpush1.msra.mxu0 0.0
      %1013 = vmatprep.subr.mxu0 0.0
      %1014 = vmatpush1.msra.mxu0 0.0
      %1015 = vmatprep.subr.mxu0 0.0
      %1016 = vmatpush1.msra.mxu0 0.0
      %1017 = vmatprep.subr.mxu0 0.0
      %1018 = vmatpush1.msra.mxu0 0.0
      %1019 = vmatprep.subr.mxu0 0.0
      %1020 = vmatpush1.msra.mxu0 0.0
      %1021 = vmatprep.subr.mxu0 0.0
      %1022 = vmatpush1.msra.mxu0 0.0
      %1023 = vmatprep.subr.mxu0 0.0
      %1024 = vmatpush1.msra.mxu0 0.0
      %1025 = vmatprep.subr.mxu0 0.0
      %1026 = vmatpush1.msra.mxu0 0.0
      %1027 = vmatprep.subr.mxu0 0.0
      %1028 = vmatpush1.msra.mxu0 0.0
      %1029 = vmatprep.subr.mxu0 0.0
      %1030 = vmatpush1.msra.mxu0 0.0
      %1031 = vmatprep.subr.mxu0 0.0
      %1032 = vmatpush1.msra.mxu0 0.0
      %1033 = vmatprep.subr.mxu0 0.0
      %1034 = vmatpush1.msra.mxu0 0.0
      %1035 = vmatprep.subr.mxu0 0.0
      %1036 = vmatpush1.msra.mxu0 0.0
      %1037 = vmatprep.subr.mxu0 0.0
      %1038 = vmatpush1.msra.mxu0 0.0
      %1039 = vmatprep.subr.mxu0 0.0
      %1040 = vmatpush1.msra.mxu0 0.0
      %1041 = vmatprep.subr.mxu0 0.0
      %1042 = vmatpush1.msra.mxu0 0.0
      %1043 = vmatprep.subr.mxu0 0.0
      %1044 = vmatpush1.msra.mxu0 0.0
      %1045 = vmatprep.subr.mxu0 0.0
      %1046 = vmatpush1.msra.mxu0 0.0
      %1047 = vmatprep.subr.mxu0 0.0
      %1048 = vmatpush1.msra.mxu0 0.0
      %1049 = vmatprep.subr.mxu0 0.0
      %1050 = vmatpush1.msra.mxu0 0.0
      %1051 = vmatprep.subr.mxu0 0.0
      %1052 = vmatpush1.msra.mxu0 0.0
      %1053 = vmatprep.subr.mxu0 0.0
      %1054 = vmatpush1.msra.mxu0 0.0
      %1055 = vmatprep.subr.mxu0 0.0
      %1056 = vmatpush1.msra.mxu0 0.0
      %1057 = vmatprep.subr.mxu0 0.0
      %1058 = vmatpush1.msra.mxu0 0.0
      %1059 = vmatprep.subr.mxu0 0.0
      %1060 = vmatpush1.msra.mxu0 0.0
      %1061 = vmatprep.subr.mxu0 0.0
      %1062 = vmatpush1.msra.mxu0 0.0
      %1063 = vmatprep.subr.mxu0 0.0
      %1064 = vmatpush1.msra.mxu0 0.0
      %1065 = vmatprep.subr.mxu0 0.0
      %1066 = vmatpush1.msra.mxu0 0.0
      %1067 = vmatprep.mubr.f32.mxu0 0.0
      %1068 = vmatmul.mubr.f32.gmra.mrb[0].mxu0 %v1001
      %v1069 = vpop.f32.mrb[0].mxu0
      %v1070 = vadd.f32 0.0, %v1069
      %v1071 = vpop.f32.mrb[0].mxu0
      %1072 = vdwg.mxu0
      %v1073 = vadd.f32 %v995, %v1070
      %s1074 = scalar_lea.vmem %s199, 88
      %v1075 = vld [vmem:[%s1074] sm:$0xff]
      %v1077 = vsel %vm239, %v1075, 0
      %1079 = vmatprep.subr.mxu0 0.0
      %1080 = vmatpush1.msra.mxu0 %v232
      %1081 = vmatprep.subr.mxu0 0.0
      %1082 = vmatpush1.msra.mxu0 %v233
      %1083 = vmatprep.subr.mxu0 0.0
      %1084 = vmatpush1.msra.mxu0 %v234
      %1085 = vmatprep.subr.mxu0 0.0
      %1086 = vmatpush1.msra.mxu0 %v235
      %1087 = vmatprep.subr.mxu0 0.0
      %1088 = vmatpush1.msra.mxu0 0.0
      %1089 = vmatprep.subr.mxu0 0.0
      %1090 = vmatpush1.msra.mxu0 0.0
      %1091 = vmatprep.subr.mxu0 0.0
      %1092 = vmatpush1.msra.mxu0 0.0
      %1093 = vmatprep.subr.mxu0 0.0
      %1094 = vmatpush1.msra.mxu0 0.0
      %1095 = vmatprep.subr.mxu0 0.0
      %1096 = vmatpush1.msra.mxu0 0.0
      %1097 = vmatprep.subr.mxu0 0.0
      %1098 = vmatpush1.msra.mxu0 0.0
      %1099 = vmatprep.subr.mxu0 0.0
      %1100 = vmatpush1.msra.mxu0 0.0
      %1101 = vmatprep.subr.mxu0 0.0
      %1102 = vmatpush1.msra.mxu0 0.0
      %1103 = vmatprep.subr.mxu0 0.0
      %1104 = vmatpush1.msra.mxu0 0.0
      %1105 = vmatprep.subr.mxu0 0.0
      %1106 = vmatpush1.msra.mxu0 0.0
      %1107 = vmatprep.subr.mxu0 0.0
      %1108 = vmatpush1.msra.mxu0 0.0
      %1109 = vmatprep.subr.mxu0 0.0
      %1110 = vmatpush1.msra.mxu0 0.0
      %1111 = vmatprep.subr.mxu0 0.0
      %1112 = vmatpush1.msra.mxu0 0.0
      %1113 = vmatprep.subr.mxu0 0.0
      %1114 = vmatpush1.msra.mxu0 0.0
      %1115 = vmatprep.subr.mxu0 0.0
      %1116 = vmatpush1.msra.mxu0 0.0
      %1117 = vmatprep.subr.mxu0 0.0
      %1118 = vmatpush1.msra.mxu0 0.0
      %1119 = vmatprep.subr.mxu0 0.0
      %1120 = vmatpush1.msra.mxu0 0.0
      %1121 = vmatprep.subr.mxu0 0.0
      %1122 = vmatpush1.msra.mxu0 0.0
      %1123 = vmatprep.subr.mxu0 0.0
      %1124 = vmatpush1.msra.mxu0 0.0
      %1125 = vmatprep.subr.mxu0 0.0
      %1126 = vmatpush1.msra.mxu0 0.0
      %1127 = vmatprep.subr.mxu0 0.0
      %1128 = vmatpush1.msra.mxu0 0.0
      %1129 = vmatprep.subr.mxu0 0.0
      %1130 = vmatpush1.msra.mxu0 0.0
      %1131 = vmatprep.subr.mxu0 0.0
      %1132 = vmatpush1.msra.mxu0 0.0
      %1133 = vmatprep.subr.mxu0 0.0
      %1134 = vmatpush1.msra.mxu0 0.0
      %1135 = vmatprep.subr.mxu0 0.0
      %1136 = vmatpush1.msra.mxu0 0.0
      %1137 = vmatprep.subr.mxu0 0.0
      %1138 = vmatpush1.msra.mxu0 0.0
      %1139 = vmatprep.subr.mxu0 0.0
      %1140 = vmatpush1.msra.mxu0 0.0
      %1141 = vmatprep.subr.mxu0 0.0
      %1142 = vmatpush1.msra.mxu0 0.0
      %1143 = vmatprep.mubr.f32.mxu0 0.0
      %1144 = vmatmul.mubr.f32.gmra.mrb[0].mxu0 %v1077
      %v1145 = vpop.f32.mrb[0].mxu0
      %v1146 = vadd.f32 0.0, %v1145
      %v1147 = vpop.f32.mrb[0].mxu0
      %1148 = vdwg.mxu0
      %v1149 = vadd.f32 %v1073, %v1146
      %s1150 = scalar_lea.vmem %s214, 16
      %1151 = vst [vmem:[%s1150] sm:$0x3] %v1149
      %1152 = vst [vmem:[%s1150 + $0x2] sm:$0xc] %v1149
      %1153 = vst [vmem:[%s1150 + $0x4] sm:$0x30] %v1149
      %1154 = vst [vmem:[%s1150 + $0x6] sm:$0xc0] %v1149
      %s1155 = scalar_lea.vmem %s199, 96
      %v1156 = vld [vmem:[%s1155] sm:$0xff]
      %s1157 = scalar_lea.vmem %s199, 104
      %v1158 = vld [vmem:[%s1157] sm:$0xff]
      %v1160 = vsel %vm239, %v1158, 0
      %1162 = vmatprep.subr.mxu0 0.0
      %1163 = vmatpush1.msra.mxu0 %v222
      %1164 = vmatprep.subr.mxu0 0.0
      %1165 = vmatpush1.msra.mxu0 %v223
      %1166 = vmatprep.subr.mxu0 0.0
      %1167 = vmatpush1.msra.mxu0 %v224
      %1168 = vmatprep.subr.mxu0 0.0
      %1169 = vmatpush1.msra.mxu0 %v225
      %1170 = vmatprep.subr.mxu0 0.0
      %1171 = vmatpush1.msra.mxu0 0.0
      %1172 = vmatprep.subr.mxu0 0.0
      %1173 = vmatpush1.msra.mxu0 0.0
      %1174 = vmatprep.subr.mxu0 0.0
      %1175 = vmatpush1.msra.mxu0 0.0
      %1176 = vmatprep.subr.mxu0 0.0
      %1177 = vmatpush1.msra.mxu0 0.0
      %1178 = vmatprep.subr.mxu0 0.0
      %1179 = vmatpush1.msra.mxu0 0.0
      %1180 = vmatprep.subr.mxu0 0.0
      %1181 = vmatpush1.msra.mxu0 0.0
      %1182 = vmatprep.subr.mxu0 0.0
      %1183 = vmatpush1.msra.mxu0 0.0
      %1184 = vmatprep.subr.mxu0 0.0
      %1185 = vmatpush1.msra.mxu0 0.0
      %1186 = vmatprep.subr.mxu0 0.0
      %1187 = vmatpush1.msra.mxu0 0.0
      %1188 = vmatprep.subr.mxu0 0.0
      %1189 = vmatpush1.msra.mxu0 0.0
      %1190 = vmatprep.subr.mxu0 0.0
      %1191 = vmatpush1.msra.mxu0 0.0
      %1192 = vmatprep.subr.mxu0 0.0
      %1193 = vmatpush1.msra.mxu0 0.0
      %1194 = vmatprep.subr.mxu0 0.0
      %1195 = vmatpush1.msra.mxu0 0.0
      %1196 = vmatprep.subr.mxu0 0.0
      %1197 = vmatpush1.msra.mxu0 0.0
      %1198 = vmatprep.subr.mxu0 0.0
      %1199 = vmatpush1.msra.mxu0 0.0
      %1200 = vmatprep.subr.mxu0 0.0
      %1201 = vmatpush1.msra.mxu0 0.0
      %1202 = vmatprep.subr.mxu0 0.0
      %1203 = vmatpush1.msra.mxu0 0.0
      %1204 = vmatprep.subr.mxu0 0.0
      %1205 = vmatpush1.msra.mxu0 0.0
      %1206 = vmatprep.subr.mxu0 0.0
      %1207 = vmatpush1.msra.mxu0 0.0
      %1208 = vmatprep.subr.mxu0 0.0
      %1209 = vmatpush1.msra.mxu0 0.0
      %1210 = vmatprep.subr.mxu0 0.0
      %1211 = vmatpush1.msra.mxu0 0.0
      %1212 = vmatprep.subr.mxu0 0.0
      %1213 = vmatpush1.msra.mxu0 0.0
      %1214 = vmatprep.subr.mxu0 0.0
      %1215 = vmatpush1.msra.mxu0 0.0
      %1216 = vmatprep.subr.mxu0 0.0
      %1217 = vmatpush1.msra.mxu0 0.0
      %1218 = vmatprep.subr.mxu0 0.0
      %1219 = vmatpush1.msra.mxu0 0.0
      %1220 = vmatprep.subr.mxu0 0.0
      %1221 = vmatpush1.msra.mxu0 0.0
      %1222 = vmatprep.subr.mxu0 0.0
      %1223 = vmatpush1.msra.mxu0 0.0
      %1224 = vmatprep.subr.mxu0 0.0
      %1225 = vmatpush1.msra.mxu0 0.0
      %1226 = vmatprep.mubr.f32.mxu0 0.0
      %1227 = vmatmul.mubr.f32.gmra.mrb[0].mxu0 %v1160
      %v1228 = vpop.f32.mrb[0].mxu0
      %v1229 = vadd.f32 0.0, %v1228
      %v1230 = vpop.f32.mrb[0].mxu0
      %1231 = vdwg.mxu0
      %v1233 = vsel %vm239, %v1156, 0
      %1235 = vmatprep.subr.mxu0 0.0
      %1236 = vmatpush1.msra.mxu0 %v217
      %1237 = vmatprep.subr.mxu0 0.0
      %1238 = vmatpush1.msra.mxu0 %v218
      %1239 = vmatprep.subr.mxu0 0.0
      %1240 = vmatpush1.msra.mxu0 %v219
      %1241 = vmatprep.subr.mxu0 0.0
      %1242 = vmatpush1.msra.mxu0 %v220
      %1243 = vmatprep.subr.mxu0 0.0
      %1244 = vmatpush1.msra.mxu0 0.0
      %1245 = vmatprep.subr.mxu0 0.0
      %1246 = vmatpush1.msra.mxu0 0.0
      %1247 = vmatprep.subr.mxu0 0.0
      %1248 = vmatpush1.msra.mxu0 0.0
      %1249 = vmatprep.subr.mxu0 0.0
      %1250 = vmatpush1.msra.mxu0 0.0
      %1251 = vmatprep.subr.mxu0 0.0
      %1252 = vmatpush1.msra.mxu0 0.0
      %1253 = vmatprep.subr.mxu0 0.0
      %1254 = vmatpush1.msra.mxu0 0.0
      %1255 = vmatprep.subr.mxu0 0.0
      %1256 = vmatpush1.msra.mxu0 0.0
      %1257 = vmatprep.subr.mxu0 0.0
      %1258 = vmatpush1.msra.mxu0 0.0
      %1259 = vmatprep.subr.mxu0 0.0
      %1260 = vmatpush1.msra.mxu0 0.0
      %1261 = vmatprep.subr.mxu0 0.0
      %1262 = vmatpush1.msra.mxu0 0.0
      %1263 = vmatprep.subr.mxu0 0.0
      %1264 = vmatpush1.msra.mxu0 0.0
      %1265 = vmatprep.subr.mxu0 0.0
      %1266 = vmatpush1.msra.mxu0 0.0
      %1267 = vmatprep.subr.mxu0 0.0
      %1268 = vmatpush1.msra.mxu0 0.0
      %1269 = vmatprep.subr.mxu0 0.0
      %1270 = vmatpush1.msra.mxu0 0.0
      %1271 = vmatprep.subr.mxu0 0.0
      %1272 = vmatpush1.msra.mxu0 0.0
      %1273 = vmatprep.subr.mxu0 0.0
      %1274 = vmatpush1.msra.mxu0 0.0
      %1275 = vmatprep.subr.mxu0 0.0
      %1276 = vmatpush1.msra.mxu0 0.0
      %1277 = vmatprep.subr.mxu0 0.0
      %1278 = vmatpush1.msra.mxu0 0.0
      %1279 = vmatprep.subr.mxu0 0.0
      %1280 = vmatpush1.msra.mxu0 0.0
      %1281 = vmatprep.subr.mxu0 0.0
      %1282 = vmatpush1.msra.mxu0 0.0
      %1283 = vmatprep.subr.mxu0 0.0
      %1284 = vmatpush1.msra.mxu0 0.0
      %1285 = vmatprep.subr.mxu0 0.0
      %1286 = vmatpush1.msra.mxu0 0.0
      %1287 = vmatprep.subr.mxu0 0.0
      %1288 = vmatpush1.msra.mxu0 0.0
      %1289 = vmatprep.subr.mxu0 0.0
      %1290 = vmatpush1.msra.mxu0 0.0
      %1291 = vmatprep.subr.mxu0 0.0
      %1292 = vmatpush1.msra.mxu0 0.0
      %1293 = vmatprep.subr.mxu0 0.0
      %1294 = vmatpush1.msra.mxu0 0.0
      %1295 = vmatprep.subr.mxu0 0.0
      %1296 = vmatpush1.msra.mxu0 0.0
      %1297 = vmatprep.subr.mxu0 0.0
      %1298 = vmatpush1.msra.mxu0 0.0
      %1299 = vmatprep.mubr.f32.mxu0 0.0
      %1300 = vmatmul.mubr.f32.gmra.mrb[0].mxu0 %v1233
      %v1301 = vpop.f32.mrb[0].mxu0
      %v1302 = vadd.f32 %v1229, %v1301
      %v1303 = vpop.f32.mrb[0].mxu0
      %1304 = vdwg.mxu0
      %s1305 = scalar_lea.vmem %s199, 112
      %v1306 = vld [vmem:[%s1305] sm:$0xff]
      %v1308 = vsel %vm239, %v1306, 0
      %1310 = vmatprep.subr.mxu0 0.0
      %1311 = vmatpush1.msra.mxu0 %v227
      %1312 = vmatprep.subr.mxu0 0.0
      %1313 = vmatpush1.msra.mxu0 %v228
      %1314 = vmatprep.subr.mxu0 0.0
      %1315 = vmatpush1.msra.mxu0 %v229
      %1316 = vmatprep.subr.mxu0 0.0
      %1317 = vmatpush1.msra.mxu0 %v230
      %1318 = vmatprep.subr.mxu0 0.0
      %1319 = vmatpush1.msra.mxu0 0.0
      %1320 = vmatprep.subr.mxu0 0.0
      %1321 = vmatpush1.msra.mxu0 0.0
      %1322 = vmatprep.subr.mxu0 0.0
      %1323 = vmatpush1.msra.mxu0 0.0
      %1324 = vmatprep.subr.mxu0 0.0
      %1325 = vmatpush1.msra.mxu0 0.0
      %1326 = vmatprep.subr.mxu0 0.0
      %1327 = vmatpush1.msra.mxu0 0.0
      %1328 = vmatprep.subr.mxu0 0.0
      %1329 = vmatpush1.msra.mxu0 0.0
      %1330 = vmatprep.subr.mxu0 0.0
      %1331 = vmatpush1.msra.mxu0 0.0
      %1332 = vmatprep.subr.mxu0 0.0
      %1333 = vmatpush1.msra.mxu0 0.0
      %1334 = vmatprep.subr.mxu0 0.0
      %1335 = vmatpush1.msra.mxu0 0.0
      %1336 = vmatprep.subr.mxu0 0.0
      %1337 = vmatpush1.msra.mxu0 0.0
      %1338 = vmatprep.subr.mxu0 0.0
      %1339 = vmatpush1.msra.mxu0 0.0
      %1340 = vmatprep.subr.mxu0 0.0
      %1341 = vmatpush1.msra.mxu0 0.0
      %1342 = vmatprep.subr.mxu0 0.0
      %1343 = vmatpush1.msra.mxu0 0.0
      %1344 = vmatprep.subr.mxu0 0.0
      %1345 = vmatpush1.msra.mxu0 0.0
      %1346 = vmatprep.subr.mxu0 0.0
      %1347 = vmatpush1.msra.mxu0 0.0
      %1348 = vmatprep.subr.mxu0 0.0
      %1349 = vmatpush1.msra.mxu0 0.0
      %1350 = vmatprep.subr.mxu0 0.0
      %1351 = vmatpush1.msra.mxu0 0.0
      %1352 = vmatprep.subr.mxu0 0.0
      %1353 = vmatpush1.msra.mxu0 0.0
      %1354 = vmatprep.subr.mxu0 0.0
      %1355 = vmatpush1.msra.mxu0 0.0
      %1356 = vmatprep.subr.mxu0 0.0
      %1357 = vmatpush1.msra.mxu0 0.0
      %1358 = vmatprep.subr.mxu0 0.0
      %1359 = vmatpush1.msra.mxu0 0.0
      %1360 = vmatprep.subr.mxu0 0.0
      %1361 = vmatpush1.msra.mxu0 0.0
      %1362 = vmatprep.subr.mxu0 0.0
      %1363 = vmatpush1.msra.mxu0 0.0
      %1364 = vmatprep.subr.mxu0 0.0
      %1365 = vmatpush1.msra.mxu0 0.0
      %1366 = vmatprep.subr.mxu0 0.0
      %1367 = vmatpush1.msra.mxu0 0.0
      %1368 = vmatprep.subr.mxu0 0.0
      %1369 = vmatpush1.msra.mxu0 0.0
      %1370 = vmatprep.subr.mxu0 0.0
      %1371 = vmatpush1.msra.mxu0 0.0
      %1372 = vmatprep.subr.mxu0 0.0
      %1373 = vmatpush1.msra.mxu0 0.0
      %1374 = vmatprep.mubr.f32.mxu0 0.0
      %1375 = vmatmul.mubr.f32.gmra.mrb[0].mxu0 %v1308
      %v1376 = vpop.f32.mrb[0].mxu0
      %v1377 = vadd.f32 0.0, %v1376
      %v1378 = vpop.f32.mrb[0].mxu0
      %1379 = vdwg.mxu0
      %v1380 = vadd.f32 %v1302, %v1377
      %s1381 = scalar_lea.vmem %s199, 120
      %v1382 = vld [vmem:[%s1381] sm:$0xff]
      %v1384 = vsel %vm239, %v1382, 0
      %1386 = vmatprep.subr.mxu0 0.0
      %1387 = vmatpush1.msra.mxu0 %v232
      %1388 = vmatprep.subr.mxu0 0.0
      %1389 = vmatpush1.msra.mxu0 %v233
      %1390 = vmatprep.subr.mxu0 0.0
      %1391 = vmatpush1.msra.mxu0 %v234
      %1392 = vmatprep.subr.mxu0 0.0
      %1393 = vmatpush1.msra.mxu0 %v235
      %1394 = vmatprep.subr.mxu0 0.0
      %1395 = vmatpush1.msra.mxu0 0.0
      %1396 = vmatprep.subr.mxu0 0.0
      %1397 = vmatpush1.msra.mxu0 0.0
      %1398 = vmatprep.subr.mxu0 0.0
      %1399 = vmatpush1.msra.mxu0 0.0
      %1400 = vmatprep.subr.mxu0 0.0
      %1401 = vmatpush1.msra.mxu0 0.0
      %1402 = vmatprep.subr.mxu0 0.0
      %1403 = vmatpush1.msra.mxu0 0.0
      %1404 = vmatprep.subr.mxu0 0.0
      %1405 = vmatpush1.msra.mxu0 0.0
      %1406 = vmatprep.subr.mxu0 0.0
      %1407 = vmatpush1.msra.mxu0 0.0
      %1408 = vmatprep.subr.mxu0 0.0
      %1409 = vmatpush1.msra.mxu0 0.0
      %1410 = vmatprep.subr.mxu0 0.0
      %1411 = vmatpush1.msra.mxu0 0.0
      %1412 = vmatprep.subr.mxu0 0.0
      %1413 = vmatpush1.msra.mxu0 0.0
      %1414 = vmatprep.subr.mxu0 0.0
      %1415 = vmatpush1.msra.mxu0 0.0
      %1416 = vmatprep.subr.mxu0 0.0
      %1417 = vmatpush1.msra.mxu0 0.0
      %1418 = vmatprep.subr.mxu0 0.0
      %1419 = vmatpush1.msra.mxu0 0.0
      %1420 = vmatprep.subr.mxu0 0.0
      %1421 = vmatpush1.msra.mxu0 0.0
      %1422 = vmatprep.subr.mxu0 0.0
      %1423 = vmatpush1.msra.mxu0 0.0
      %1424 = vmatprep.subr.mxu0 0.0
      %1425 = vmatpush1.msra.mxu0 0.0
      %1426 = vmatprep.subr.mxu0 0.0
      %1427 = vmatpush1.msra.mxu0 0.0
      %1428 = vmatprep.subr.mxu0 0.0
      %1429 = vmatpush1.msra.mxu0 0.0
      %1430 = vmatprep.subr.mxu0 0.0
      %1431 = vmatpush1.msra.mxu0 0.0
      %1432 = vmatprep.subr.mxu0 0.0
      %1433 = vmatpush1.msra.mxu0 0.0
      %1434 = vmatprep.subr.mxu0 0.0
      %1435 = vmatpush1.msra.mxu0 0.0
      %1436 = vmatprep.subr.mxu0 0.0
      %1437 = vmatpush1.msra.mxu0 0.0
      %1438 = vmatprep.subr.mxu0 0.0
      %1439 = vmatpush1.msra.mxu0 0.0
      %1440 = vmatprep.subr.mxu0 0.0
      %1441 = vmatpush1.msra.mxu0 0.0
      %1442 = vmatprep.subr.mxu0 0.0
      %1443 = vmatpush1.msra.mxu0 0.0
      %1444 = vmatprep.subr.mxu0 0.0
      %1445 = vmatpush1.msra.mxu0 0.0
      %1446 = vmatprep.subr.mxu0 0.0
      %1447 = vmatpush1.msra.mxu0 0.0
      %1448 = vmatprep.subr.mxu0 0.0
      %1449 = vmatpush1.msra.mxu0 0.0
      %1450 = vmatprep.mubr.f32.mxu0 0.0
      %1451 = vmatmul.mubr.f32.gmra.mrb[0].mxu0 %v1384
      %v1452 = vpop.f32.mrb[0].mxu0
      %v1453 = vadd.f32 0.0, %v1452
      %v1454 = vpop.f32.mrb[0].mxu0
      %1455 = vdwg.mxu0
      %v1456 = vadd.f32 %v1380, %v1453
      %1457 = vst [vmem:[%s1150 + $0x2] sm:$0x3] %v1456
      %1458 = vst [vmem:[%s1150 + $0x4] sm:$0xc] %v1456
      %1459 = vst [vmem:[%s1150 + $0x6] sm:$0x30] %v1456
      %1460 = vst [vmem:[%s1150 + $0x8] sm:$0xc0] %v1456
      %s1461 = scalar_lea.vmem %s199, 128
      %v1462 = vld [vmem:[%s1461] sm:$0xff]
      %s1463 = scalar_lea.vmem %s199, 136
      %v1464 = vld [vmem:[%s1463] sm:$0xff]
      %v1466 = vsel %vm239, %v1464, 0
      %1468 = vmatprep.subr.mxu0 0.0
      %1469 = vmatpush1.msra.mxu0 %v222
      %1470 = vmatprep.subr.mxu0 0.0
      %1471 = vmatpush1.msra.mxu0 %v223
      %1472 = vmatprep.subr.mxu0 0.0
      %1473 = vmatpush1.msra.mxu0 %v224
      %1474 = vmatprep.subr.mxu0 0.0
      %1475 = vmatpush1.msra.mxu0 %v225
      %1476 = vmatprep.subr.mxu0 0.0
      %1477 = vmatpush1.msra.mxu0 0.0
      %1478 = vmatprep.subr.mxu0 0.0
      %1479 = vmatpush1.msra.mxu0 0.0
      %1480 = vmatprep.subr.mxu0 0.0
      %1481 = vmatpush1.msra.mxu0 0.0
      %1482 = vmatprep.subr.mxu0 0.0
      %1483 = vmatpush1.msra.mxu0 0.0
      %1484 = vmatprep.subr.mxu0 0.0
      %1485 = vmatpush1.msra.mxu0 0.0
      %1486 = vmatprep.subr.mxu0 0.0
      %1487 = vmatpush1.msra.mxu0 0.0
      %1488 = vmatprep.subr.mxu0 0.0
      %1489 = vmatpush1.msra.mxu0 0.0
      %1490 = vmatprep.subr.mxu0 0.0
      %1491 = vmatpush1.msra.mxu0 0.0
      %1492 = vmatprep.subr.mxu0 0.0
      %1493 = vmatpush1.msra.mxu0 0.0
      %1494 = vmatprep.subr.mxu0 0.0
      %1495 = vmatpush1.msra.mxu0 0.0
      %1496 = vmatprep.subr.mxu0 0.0
      %1497 = vmatpush1.msra.mxu0 0.0
      %1498 = vmatprep.subr.mxu0 0.0
      %1499 = vmatpush1.msra.mxu0 0.0
      %1500 = vmatprep.subr.mxu0 0.0
      %1501 = vmatpush1.msra.mxu0 0.0
      %1502 = vmatprep.subr.mxu0 0.0
      %1503 = vmatpush1.msra.mxu0 0.0
      %1504 = vmatprep.subr.mxu0 0.0
      %1505 = vmatpush1.msra.mxu0 0.0
      %1506 = vmatprep.subr.mxu0 0.0
      %1507 = vmatpush1.msra.mxu0 0.0
      %1508 = vmatprep.subr.mxu0 0.0
      %1509 = vmatpush1.msra.mxu0 0.0
      %1510 = vmatprep.subr.mxu0 0.0
      %1511 = vmatpush1.msra.mxu0 0.0
      %1512 = vmatprep.subr.mxu0 0.0
      %1513 = vmatpush1.msra.mxu0 0.0
      %1514 = vmatprep.subr.mxu0 0.0
      %1515 = vmatpush1.msra.mxu0 0.0
      %1516 = vmatprep.subr.mxu0 0.0
      %1517 = vmatpush1.msra.mxu0 0.0
      %1518 = vmatprep.subr.mxu0 0.0
      %1519 = vmatpush1.msra.mxu0 0.0
      %1520 = vmatprep.subr.mxu0 0.0
      %1521 = vmatpush1.msra.mxu0 0.0
      %1522 = vmatprep.subr.mxu0 0.0
      %1523 = vmatpush1.msra.mxu0 0.0
      %1524 = vmatprep.subr.mxu0 0.0
      %1525 = vmatpush1.msra.mxu0 0.0
      %1526 = vmatprep.subr.mxu0 0.0
      %1527 = vmatpush1.msra.mxu0 0.0
      %1528 = vmatprep.subr.mxu0 0.0
      %1529 = vmatpush1.msra.mxu0 0.0
      %1530 = vmatprep.subr.mxu0 0.0
      %1531 = vmatpush1.msra.mxu0 0.0
      %1532 = vmatprep.mubr.f32.mxu0 0.0
      %1533 = vmatmul.mubr.f32.gmra.mrb[0].mxu0 %v1466
      %v1534 = vpop.f32.mrb[0].mxu0
      %v1535 = vadd.f32 0.0, %v1534
      %v1536 = vpop.f32.mrb[0].mxu0
      %1537 = vdwg.mxu0
      %v1539 = vsel %vm239, %v1462, 0
      %1541 = vmatprep.subr.mxu0 0.0
      %1542 = vmatpush1.msra.mxu0 %v217
      %1543 = vmatprep.subr.mxu0 0.0
      %1544 = vmatpush1.msra.mxu0 %v218
      %1545 = vmatprep.subr.mxu0 0.0
      %1546 = vmatpush1.msra.mxu0 %v219
      %1547 = vmatprep.subr.mxu0 0.0
      %1548 = vmatpush1.msra.mxu0 %v220
      %1549 = vmatprep.subr.mxu0 0.0
      %1550 = vmatpush1.msra.mxu0 0.0
      %1551 = vmatprep.subr.mxu0 0.0
      %1552 = vmatpush1.msra.mxu0 0.0
      %1553 = vmatprep.subr.mxu0 0.0
      %1554 = vmatpush1.msra.mxu0 0.0
      %1555 = vmatprep.subr.mxu0 0.0
      %1556 = vmatpush1.msra.mxu0 0.0
      %1557 = vmatprep.subr.mxu0 0.0
      %1558 = vmatpush1.msra.mxu0 0.0
      %1559 = vmatprep.subr.mxu0 0.0
      %1560 = vmatpush1.msra.mxu0 0.0
      %1561 = vmatprep.subr.mxu0 0.0
      %1562 = vmatpush1.msra.mxu0 0.0
      %1563 = vmatprep.subr.mxu0 0.0
      %1564 = vmatpush1.msra.mxu0 0.0
      %1565 = vmatprep.subr.mxu0 0.0
      %1566 = vmatpush1.msra.mxu0 0.0
      %1567 = vmatprep.subr.mxu0 0.0
      %1568 = vmatpush1.msra.mxu0 0.0
      %1569 = vmatprep.subr.mxu0 0.0
      %1570 = vmatpush1.msra.mxu0 0.0
      %1571 = vmatprep.subr.mxu0 0.0
      %1572 = vmatpush1.msra.mxu0 0.0
      %1573 = vmatprep.subr.mxu0 0.0
      %1574 = vmatpush1.msra.mxu0 0.0
      %1575 = vmatprep.subr.mxu0 0.0
      %1576 = vmatpush1.msra.mxu0 0.0
      %1577 = vmatprep.subr.mxu0 0.0
      %1578 = vmatpush1.msra.mxu0 0.0
      %1579 = vmatprep.subr.mxu0 0.0
      %1580 = vmatpush1.msra.mxu0 0.0
      %1581 = vmatprep.subr.mxu0 0.0
      %1582 = vmatpush1.msra.mxu0 0.0
      %1583 = vmatprep.subr.mxu0 0.0
      %1584 = vmatpush1.msra.mxu0 0.0
      %1585 = vmatprep.subr.mxu0 0.0
      %1586 = vmatpush1.msra.mxu0 0.0
      %1587 = vmatprep.subr.mxu0 0.0
      %1588 = vmatpush1.msra.mxu0 0.0
      %1589 = vmatprep.subr.mxu0 0.0
      %1590 = vmatpush1.msra.mxu0 0.0
      %1591 = vmatprep.subr.mxu0 0.0
      %1592 = vmatpush1.msra.mxu0 0.0
      %1593 = vmatprep.subr.mxu0 0.0
      %1594 = vmatpush1.msra.mxu0 0.0
      %1595 = vmatprep.subr.mxu0 0.0
      %1596 = vmatpush1.msra.mxu0 0.0
      %1597 = vmatprep.subr.mxu0 0.0
      %1598 = vmatpush1.msra.mxu0 0.0
      %1599 = vmatprep.subr.mxu0 0.0
      %1600 = vmatpush1.msra.mxu0 0.0
      %1601 = vmatprep.subr.mxu0 0.0
      %1602 = vmatpush1.msra.mxu0 0.0
      %1603 = vmatprep.subr.mxu0 0.0
      %1604 = vmatpush1.msra.mxu0 0.0
      %1605 = vmatprep.mubr.f32.mxu0 0.0
      %1606 = vmatmul.mubr.f32.gmra.mrb[0].mxu0 %v1539
      %v1607 = vpop.f32.mrb[0].mxu0
      %v1608 = vadd.f32 %v1535, %v1607
      %v1609 = vpop.f32.mrb[0].mxu0
      %1610 = vdwg.mxu0
      %s1611 = scalar_lea.vmem %s199, 144
      %v1612 = vld [vmem:[%s1611] sm:$0xff]
      %v1614 = vsel %vm239, %v1612, 0
      %1616 = vmatprep.subr.mxu0 0.0
      %1617 = vmatpush1.msra.mxu0 %v227
      %1618 = vmatprep.subr.mxu0 0.0
      %1619 = vmatpush1.msra.mxu0 %v228
      %1620 = vmatprep.subr.mxu0 0.0
      %1621 = vmatpush1.msra.mxu0 %v229
      %1622 = vmatprep.subr.mxu0 0.0
      %1623 = vmatpush1.msra.mxu0 %v230
      %1624 = vmatprep.subr.mxu0 0.0
      %1625 = vmatpush1.msra.mxu0 0.0
      %1626 = vmatprep.subr.mxu0 0.0
      %1627 = vmatpush1.msra.mxu0 0.0
      %1628 = vmatprep.subr.mxu0 0.0
      %1629 = vmatpush1.msra.mxu0 0.0
      %1630 = vmatprep.subr.mxu0 0.0
      %1631 = vmatpush1.msra.mxu0 0.0
      %1632 = vmatprep.subr.mxu0 0.0
      %1633 = vmatpush1.msra.mxu0 0.0
      %1634 = vmatprep.subr.mxu0 0.0
      %1635 = vmatpush1.msra.mxu0 0.0
      %1636 = vmatprep.subr.mxu0 0.0
      %1637 = vmatpush1.msra.mxu0 0.0
      %1638 = vmatprep.subr.mxu0 0.0
      %1639 = vmatpush1.msra.mxu0 0.0
      %1640 = vmatprep.subr.mxu0 0.0
      %1641 = vmatpush1.msra.mxu0 0.0
      %1642 = vmatprep.subr.mxu0 0.0
      %1643 = vmatpush1.msra.mxu0 0.0
      %1644 = vmatprep.subr.mxu0 0.0
      %1645 = vmatpush1.msra.mxu0 0.0
      %1646 = vmatprep.subr.mxu0 0.0
      %1647 = vmatpush1.msra.mxu0 0.0
      %1648 = vmatprep.subr.mxu0 0.0
      %1649 = vmatpush1.msra.mxu0 0.0
      %1650 = vmatprep.subr.mxu0 0.0
      %1651 = vmatpush1.msra.mxu0 0.0
      %1652 = vmatprep.subr.mxu0 0.0
      %1653 = vmatpush1.msra.mxu0 0.0
      %1654 = vmatprep.subr.mxu0 0.0
      %1655 = vmatpush1.msra.mxu0 0.0
      %1656 = vmatprep.subr.mxu0 0.0
      %1657 = vmatpush1.msra.mxu0 0.0
      %1658 = vmatprep.subr.mxu0 0.0
      %1659 = vmatpush1.msra.mxu0 0.0
      %1660 = vmatprep.subr.mxu0 0.0
      %1661 = vmatpush1.msra.mxu0 0.0
      %1662 = vmatprep.subr.mxu0 0.0
      %1663 = vmatpush1.msra.mxu0 0.0
      %1664 = vmatprep.subr.mxu0 0.0
      %1665 = vmatpush1.msra.mxu0 0.0
      %1666 = vmatprep.subr.mxu0 0.0
      %1667 = vmatpush1.msra.mxu0 0.0
      %1668 = vmatprep.subr.mxu0 0.0
      %1669 = vmatpush1.msra.mxu0 0.0
      %1670 = vmatprep.subr.mxu0 0.0
      %1671 = vmatpush1.msra.mxu0 0.0
      %1672 = vmatprep.subr.mxu0 0.0
      %1673 = vmatpush1.msra.mxu0 0.0
      %1674 = vmatprep.subr.mxu0 0.0
      %1675 = vmatpush1.msra.mxu0 0.0
      %1676 = vmatprep.subr.mxu0 0.0
      %1677 = vmatpush1.msra.mxu0 0.0
      %1678 = vmatprep.subr.mxu0 0.0
      %1679 = vmatpush1.msra.mxu0 0.0
      %1680 = vmatprep.mubr.f32.mxu0 0.0
      %1681 = vmatmul.mubr.f32.gmra.mrb[0].mxu0 %v1614
      %v1682 = vpop.f32.mrb[0].mxu0
      %v1683 = vadd.f32 0.0, %v1682
      %v1684 = vpop.f32.mrb[0].mxu0
      %1685 = vdwg.mxu0
      %v1686 = vadd.f32 %v1608, %v1683
      %s1687 = scalar_lea.vmem %s199, 152
      %v1688 = vld [vmem:[%s1687] sm:$0xff]
      %v1690 = vsel %vm239, %v1688, 0
      %1692 = vmatprep.subr.mxu0 0.0
      %1693 = vmatpush1.msra.mxu0 %v232
      %1694 = vmatprep.subr.mxu0 0.0
      %1695 = vmatpush1.msra.mxu0 %v233
      %1696 = vmatprep.subr.mxu0 0.0
      %1697 = vmatpush1.msra.mxu0 %v234
      %1698 = vmatprep.subr.mxu0 0.0
      %1699 = vmatpush1.msra.mxu0 %v235
      %1700 = vmatprep.subr.mxu0 0.0
      %1701 = vmatpush1.msra.mxu0 0.0
      %1702 = vmatprep.subr.mxu0 0.0
      %1703 = vmatpush1.msra.mxu0 0.0
      %1704 = vmatprep.subr.mxu0 0.0
      %1705 = vmatpush1.msra.mxu0 0.0
      %1706 = vmatprep.subr.mxu0 0.0
      %1707 = vmatpush1.msra.mxu0 0.0
      %1708 = vmatprep.subr.mxu0 0.0
      %1709 = vmatpush1.msra.mxu0 0.0
      %1710 = vmatprep.subr.mxu0 0.0
      %1711 = vmatpush1.msra.mxu0 0.0
      %1712 = vmatprep.subr.mxu0 0.0
      %1713 = vmatpush1.msra.mxu0 0.0
      %1714 = vmatprep.subr.mxu0 0.0
      %1715 = vmatpush1.msra.mxu0 0.0
      %1716 = vmatprep.subr.mxu0 0.0
      %1717 = vmatpush1.msra.mxu0 0.0
      %1718 = vmatprep.subr.mxu0 0.0
      %1719 = vmatpush1.msra.mxu0 0.0
      %1720 = vmatprep.subr.mxu0 0.0
      %1721 = vmatpush1.msra.mxu0 0.0
      %1722 = vmatprep.subr.mxu0 0.0
      %1723 = vmatpush1.msra.mxu0 0.0
      %1724 = vmatprep.subr.mxu0 0.0
      %1725 = vmatpush1.msra.mxu0 0.0
      %1726 = vmatprep.subr.mxu0 0.0
      %1727 = vmatpush1.msra.mxu0 0.0
      %1728 = vmatprep.subr.mxu0 0.0
      %1729 = vmatpush1.msra.mxu0 0.0
      %1730 = vmatprep.subr.mxu0 0.0
      %1731 = vmatpush1.msra.mxu0 0.0
      %1732 = vmatprep.subr.mxu0 0.0
      %1733 = vmatpush1.msra.mxu0 0.0
      %1734 = vmatprep.subr.mxu0 0.0
      %1735 = vmatpush1.msra.mxu0 0.0
      %1736 = vmatprep.subr.mxu0 0.0
      %1737 = vmatpush1.msra.mxu0 0.0
      %1738 = vmatprep.subr.mxu0 0.0
      %1739 = vmatpush1.msra.mxu0 0.0
      %1740 = vmatprep.subr.mxu0 0.0
      %1741 = vmatpush1.msra.mxu0 0.0
      %1742 = vmatprep.subr.mxu0 0.0
      %1743 = vmatpush1.msra.mxu0 0.0
      %1744 = vmatprep.subr.mxu0 0.0
      %1745 = vmatpush1.msra.mxu0 0.0
      %1746 = vmatprep.subr.mxu0 0.0
      %1747 = vmatpush1.msra.mxu0 0.0
      %1748 = vmatprep.subr.mxu0 0.0
      %1749 = vmatpush1.msra.mxu0 0.0
      %1750 = vmatprep.subr.mxu0 0.0
      %1751 = vmatpush1.msra.mxu0 0.0
      %1752 = vmatprep.subr.mxu0 0.0
      %1753 = vmatpush1.msra.mxu0 0.0
      %1754 = vmatprep.subr.mxu0 0.0
      %1755 = vmatpush1.msra.mxu0 0.0
      %1756 = vmatprep.mubr.f32.mxu0 0.0
      %1757 = vmatmul.mubr.f32.gmra.mrb[0].mxu0 %v1690
      %v1758 = vpop.f32.mrb[0].mxu0
      %v1759 = vadd.f32 0.0, %v1758
      %v1760 = vpop.f32.mrb[0].mxu0
      %1761 = vdwg.mxu0
      %v1762 = vadd.f32 %v1686, %v1759
      %s1763 = scalar_lea.vmem %s214, 32
      %1764 = vst [vmem:[%s1763] sm:$0x3] %v1762
      %1765 = vst [vmem:[%s1763 + $0x2] sm:$0xc] %v1762
      %1766 = vst [vmem:[%s1763 + $0x4] sm:$0x30] %v1762
      %1767 = vst [vmem:[%s1763 + $0x6] sm:$0xc0] %v1762
      %s1768 = scalar_lea.vmem %s199, 160
      %v1769 = vld [vmem:[%s1768] sm:$0xff]
      %s1770 = scalar_lea.vmem %s199, 168
      %v1771 = vld [vmem:[%s1770] sm:$0xff]
      %v1773 = vsel %vm239, %v1771, 0
      %1775 = vmatprep.subr.mxu0 0.0
      %1776 = vmatpush1.msra.mxu0 %v222
      %1777 = vmatprep.subr.mxu0 0.0
      %1778 = vmatpush1.msra.mxu0 %v223
      %1779 = vmatprep.subr.mxu0 0.0
      %1780 = vmatpush1.msra.mxu0 %v224
      %1781 = vmatprep.subr.mxu0 0.0
      %1782 = vmatpush1.msra.mxu0 %v225
      %1783 = vmatprep.subr.mxu0 0.0
      %1784 = vmatpush1.msra.mxu0 0.0
      %1785 = vmatprep.subr.mxu0 0.0
      %1786 = vmatpush1.msra.mxu0 0.0
      %1787 = vmatprep.subr.mxu0 0.0
      %1788 = vmatpush1.msra.mxu0 0.0
      %1789 = vmatprep.subr.mxu0 0.0
      %1790 = vmatpush1.msra.mxu0 0.0
      %1791 = vmatprep.subr.mxu0 0.0
      %1792 = vmatpush1.msra.mxu0 0.0
      %1793 = vmatprep.subr.mxu0 0.0
      %1794 = vmatpush1.msra.mxu0 0.0
      %1795 = vmatprep.subr.mxu0 0.0
      %1796 = vmatpush1.msra.mxu0 0.0
      %1797 = vmatprep.subr.mxu0 0.0
      %1798 = vmatpush1.msra.mxu0 0.0
      %1799 = vmatprep.subr.mxu0 0.0
      %1800 = vmatpush1.msra.mxu0 0.0
      %1801 = vmatprep.subr.mxu0 0.0
      %1802 = vmatpush1.msra.mxu0 0.0
      %1803 = vmatprep.subr.mxu0 0.0
      %1804 = vmatpush1.msra.mxu0 0.0
      %1805 = vmatprep.subr.mxu0 0.0
      %1806 = vmatpush1.msra.mxu0 0.0
      %1807 = vmatprep.subr.mxu0 0.0
      %1808 = vmatpush1.msra.mxu0 0.0
      %1809 = vmatprep.subr.mxu0 0.0
      %1810 = vmatpush1.msra.mxu0 0.0
      %1811 = vmatprep.subr.mxu0 0.0
      %1812 = vmatpush1.msra.mxu0 0.0
      %1813 = vmatprep.subr.mxu0 0.0
      %1814 = vmatpush1.msra.mxu0 0.0
      %1815 = vmatprep.subr.mxu0 0.0
      %1816 = vmatpush1.msra.mxu0 0.0
      %1817 = vmatprep.subr.mxu0 0.0
      %1818 = vmatpush1.msra.mxu0 0.0
      %1819 = vmatprep.subr.mxu0 0.0
      %1820 = vmatpush1.msra.mxu0 0.0
      %1821 = vmatprep.subr.mxu0 0.0
      %1822 = vmatpush1.msra.mxu0 0.0
      %1823 = vmatprep.subr.mxu0 0.0
      %1824 = vmatpush1.msra.mxu0 0.0
      %1825 = vmatprep.subr.mxu0 0.0
      %1826 = vmatpush1.msra.mxu0 0.0
      %1827 = vmatprep.subr.mxu0 0.0
      %1828 = vmatpush1.msra.mxu0 0.0
      %1829 = vmatprep.subr.mxu0 0.0
      %1830 = vmatpush1.msra.mxu0 0.0
      %1831 = vmatprep.subr.mxu0 0.0
      %1832 = vmatpush1.msra.mxu0 0.0
      %1833 = vmatprep.subr.mxu0 0.0
      %1834 = vmatpush1.msra.mxu0 0.0
      %1835 = vmatprep.subr.mxu0 0.0
      %1836 = vmatpush1.msra.mxu0 0.0
      %1837 = vmatprep.subr.mxu0 0.0
      %1838 = vmatpush1.msra.mxu0 0.0
      %1839 = vmatprep.mubr.f32.mxu0 0.0
      %1840 = vmatmul.mubr.f32.gmra.mrb[0].mxu0 %v1773
      %v1841 = vpop.f32.mrb[0].mxu0
      %v1842 = vadd.f32 0.0, %v1841
      %v1843 = vpop.f32.mrb[0].mxu0
      %1844 = vdwg.mxu0
      %v1846 = vsel %vm239, %v1769, 0
      %1848 = vmatprep.subr.mxu0 0.0
      %1849 = vmatpush1.msra.mxu0 %v217
      %1850 = vmatprep.subr.mxu0 0.0
      %1851 = vmatpush1.msra.mxu0 %v218
      %1852 = vmatprep.subr.mxu0 0.0
      %1853 = vmatpush1.msra.mxu0 %v219
      %1854 = vmatprep.subr.mxu0 0.0
      %1855 = vmatpush1.msra.mxu0 %v220
      %1856 = vmatprep.subr.mxu0 0.0
      %1857 = vmatpush1.msra.mxu0 0.0
      %1858 = vmatprep.subr.mxu0 0.0
      %1859 = vmatpush1.msra.mxu0 0.0
      %1860 = vmatprep.subr.mxu0 0.0
      %1861 = vmatpush1.msra.mxu0 0.0
      %1862 = vmatprep.subr.mxu0 0.0
      %1863 = vmatpush1.msra.mxu0 0.0
      %1864 = vmatprep.subr.mxu0 0.0
      %1865 = vmatpush1.msra.mxu0 0.0
      %1866 = vmatprep.subr.mxu0 0.0
      %1867 = vmatpush1.msra.mxu0 0.0
      %1868 = vmatprep.subr.mxu0 0.0
      %1869 = vmatpush1.msra.mxu0 0.0
      %1870 = vmatprep.subr.mxu0 0.0
      %1871 = vmatpush1.msra.mxu0 0.0
      %1872 = vmatprep.subr.mxu0 0.0
      %1873 = vmatpush1.msra.mxu0 0.0
      %1874 = vmatprep.subr.mxu0 0.0
      %1875 = vmatpush1.msra.mxu0 0.0
      %1876 = vmatprep.subr.mxu0 0.0
      %1877 = vmatpush1.msra.mxu0 0.0
      %1878 = vmatprep.subr.mxu0 0.0
      %1879 = vmatpush1.msra.mxu0 0.0
      %1880 = vmatprep.subr.mxu0 0.0
      %1881 = vmatpush1.msra.mxu0 0.0
      %1882 = vmatprep.subr.mxu0 0.0
      %1883 = vmatpush1.msra.mxu0 0.0
      %1884 = vmatprep.subr.mxu0 0.0
      %1885 = vmatpush1.msra.mxu0 0.0
      %1886 = vmatprep.subr.mxu0 0.0
      %1887 = vmatpush1.msra.mxu0 0.0
      %1888 = vmatprep.subr.mxu0 0.0
      %1889 = vmatpush1.msra.mxu0 0.0
      %1890 = vmatprep.subr.mxu0 0.0
      %1891 = vmatpush1.msra.mxu0 0.0
      %1892 = vmatprep.subr.mxu0 0.0
      %1893 = vmatpush1.msra.mxu0 0.0
      %1894 = vmatprep.subr.mxu0 0.0
      %1895 = vmatpush1.msra.mxu0 0.0
      %1896 = vmatprep.subr.mxu0 0.0
      %1897 = vmatpush1.msra.mxu0 0.0
      %1898 = vmatprep.subr.mxu0 0.0
      %1899 = vmatpush1.msra.mxu0 0.0
      %1900 = vmatprep.subr.mxu0 0.0
      %1901 = vmatpush1.msra.mxu0 0.0
      %1902 = vmatprep.subr.mxu0 0.0
      %1903 = vmatpush1.msra.mxu0 0.0
      %1904 = vmatprep.subr.mxu0 0.0
      %1905 = vmatpush1.msra.mxu0 0.0
      %1906 = vmatprep.subr.mxu0 0.0
      %1907 = vmatpush1.msra.mxu0 0.0
      %1908 = vmatprep.subr.mxu0 0.0
      %1909 = vmatpush1.msra.mxu0 0.0
      %1910 = vmatprep.subr.mxu0 0.0
      %1911 = vmatpush1.msra.mxu0 0.0
      %1912 = vmatprep.mubr.f32.mxu0 0.0
      %1913 = vmatmul.mubr.f32.gmra.mrb[0].mxu0 %v1846
      %v1914 = vpop.f32.mrb[0].mxu0
      %v1915 = vadd.f32 %v1842, %v1914
      %v1916 = vpop.f32.mrb[0].mxu0
      %1917 = vdwg.mxu0
      %s1918 = scalar_lea.vmem %s199, 176
      %v1919 = vld [vmem:[%s1918] sm:$0xff]
      %v1921 = vsel %vm239, %v1919, 0
      %1923 = vmatprep.subr.mxu0 0.0
      %1924 = vmatpush1.msra.mxu0 %v227
      %1925 = vmatprep.subr.mxu0 0.0
      %1926 = vmatpush1.msra.mxu0 %v228
      %1927 = vmatprep.subr.mxu0 0.0
      %1928 = vmatpush1.msra.mxu0 %v229
      %1929 = vmatprep.subr.mxu0 0.0
      %1930 = vmatpush1.msra.mxu0 %v230
      %1931 = vmatprep.subr.mxu0 0.0
      %1932 = vmatpush1.msra.mxu0 0.0
      %1933 = vmatprep.subr.mxu0 0.0
      %1934 = vmatpush1.msra.mxu0 0.0
      %1935 = vmatprep.subr.mxu0 0.0
      %1936 = vmatpush1.msra.mxu0 0.0
      %1937 = vmatprep.subr.mxu0 0.0
      %1938 = vmatpush1.msra.mxu0 0.0
      %1939 = vmatprep.subr.mxu0 0.0
      %1940 = vmatpush1.msra.mxu0 0.0
      %1941 = vmatprep.subr.mxu0 0.0
      %1942 = vmatpush1.msra.mxu0 0.0
      %1943 = vmatprep.subr.mxu0 0.0
      %1944 = vmatpush1.msra.mxu0 0.0
      %1945 = vmatprep.subr.mxu0 0.0
      %1946 = vmatpush1.msra.mxu0 0.0
      %1947 = vmatprep.subr.mxu0 0.0
      %1948 = vmatpush1.msra.mxu0 0.0
      %1949 = vmatprep.subr.mxu0 0.0
      %1950 = vmatpush1.msra.mxu0 0.0
      %1951 = vmatprep.subr.mxu0 0.0
      %1952 = vmatpush1.msra.mxu0 0.0
      %1953 = vmatprep.subr.mxu0 0.0
      %1954 = vmatpush1.msra.mxu0 0.0
      %1955 = vmatprep.subr.mxu0 0.0
      %1956 = vmatpush1.msra.mxu0 0.0
      %1957 = vmatprep.subr.mxu0 0.0
      %1958 = vmatpush1.msra.mxu0 0.0
      %1959 = vmatprep.subr.mxu0 0.0
      %1960 = vmatpush1.msra.mxu0 0.0
      %1961 = vmatprep.subr.mxu0 0.0
      %1962 = vmatpush1.msra.mxu0 0.0
      %1963 = vmatprep.subr.mxu0 0.0
      %1964 = vmatpush1.msra.mxu0 0.0
      %1965 = vmatprep.subr.mxu0 0.0
      %1966 = vmatpush1.msra.mxu0 0.0
      %1967 = vmatprep.subr.mxu0 0.0
      %1968 = vmatpush1.msra.mxu0 0.0
      %1969 = vmatprep.subr.mxu0 0.0
      %1970 = vmatpush1.msra.mxu0 0.0
      %1971 = vmatprep.subr.mxu0 0.0
      %1972 = vmatpush1.msra.mxu0 0.0
      %1973 = vmatprep.subr.mxu0 0.0
      %1974 = vmatpush1.msra.mxu0 0.0
      %1975 = vmatprep.subr.mxu0 0.0
      %1976 = vmatpush1.msra.mxu0 0.0
      %1977 = vmatprep.subr.mxu0 0.0
      %1978 = vmatpush1.msra.mxu0 0.0
      %1979 = vmatprep.subr.mxu0 0.0
      %1980 = vmatpush1.msra.mxu0 0.0
      %1981 = vmatprep.subr.mxu0 0.0
      %1982 = vmatpush1.msra.mxu0 0.0
      %1983 = vmatprep.subr.mxu0 0.0
      %1984 = vmatpush1.msra.mxu0 0.0
      %1985 = vmatprep.subr.mxu0 0.0
      %1986 = vmatpush1.msra.mxu0 0.0
      %1987 = vmatprep.mubr.f32.mxu0 0.0
      %1988 = vmatmul.mubr.f32.gmra.mrb[0].mxu0 %v1921
      %v1989 = vpop.f32.mrb[0].mxu0
      %v1990 = vadd.f32 0.0, %v1989
      %v1991 = vpop.f32.mrb[0].mxu0
      %1992 = vdwg.mxu0
      %v1993 = vadd.f32 %v1915, %v1990
      %s1994 = scalar_lea.vmem %s199, 184
      %v1995 = vld [vmem:[%s1994] sm:$0xff]
      %v1997 = vsel %vm239, %v1995, 0
      %1999 = vmatprep.subr.mxu0 0.0
      %2000 = vmatpush1.msra.mxu0 %v232
      %2001 = vmatprep.subr.mxu0 0.0
      %2002 = vmatpush1.msra.mxu0 %v233
      %2003 = vmatprep.subr.mxu0 0.0
      %2004 = vmatpush1.msra.mxu0 %v234
      %2005 = vmatprep.subr.mxu0 0.0
      %2006 = vmatpush1.msra.mxu0 %v235
      %2007 = vmatprep.subr.mxu0 0.0
      %2008 = vmatpush1.msra.mxu0 0.0
      %2009 = vmatprep.subr.mxu0 0.0
      %2010 = vmatpush1.msra.mxu0 0.0
      %2011 = vmatprep.subr.mxu0 0.0
      %2012 = vmatpush1.msra.mxu0 0.0
      %2013 = vmatprep.subr.mxu0 0.0
      %2014 = vmatpush1.msra.mxu0 0.0
      %2015 = vmatprep.subr.mxu0 0.0
      %2016 = vmatpush1.msra.mxu0 0.0
      %2017 = vmatprep.subr.mxu0 0.0
      %2018 = vmatpush1.msra.mxu0 0.0
      %2019 = vmatprep.subr.mxu0 0.0
      %2020 = vmatpush1.msra.mxu0 0.0
      %2021 = vmatprep.subr.mxu0 0.0
      %2022 = vmatpush1.msra.mxu0 0.0
      %2023 = vmatprep.subr.mxu0 0.0
      %2024 = vmatpush1.msra.mxu0 0.0
      %2025 = vmatprep.subr.mxu0 0.0
      %2026 = vmatpush1.msra.mxu0 0.0
      %2027 = vmatprep.subr.mxu0 0.0
      %2028 = vmatpush1.msra.mxu0 0.0
      %2029 = vmatprep.subr.mxu0 0.0
      %2030 = vmatpush1.msra.mxu0 0.0
      %2031 = vmatprep.subr.mxu0 0.0
      %2032 = vmatpush1.msra.mxu0 0.0
      %2033 = vmatprep.subr.mxu0 0.0
      %2034 = vmatpush1.msra.mxu0 0.0
      %2035 = vmatprep.subr.mxu0 0.0
      %2036 = vmatpush1.msra.mxu0 0.0
      %2037 = vmatprep.subr.mxu0 0.0
      %2038 = vmatpush1.msra.mxu0 0.0
      %2039 = vmatprep.subr.mxu0 0.0
      %2040 = vmatpush1.msra.mxu0 0.0
      %2041 = vmatprep.subr.mxu0 0.0
      %2042 = vmatpush1.msra.mxu0 0.0
      %2043 = vmatprep.subr.mxu0 0.0
      %2044 = vmatpush1.msra.mxu0 0.0
      %2045 = vmatprep.subr.mxu0 0.0
      %2046 = vmatpush1.msra.mxu0 0.0
      %2047 = vmatprep.subr.mxu0 0.0
      %2048 = vmatpush1.msra.mxu0 0.0
      %2049 = vmatprep.subr.mxu0 0.0
      %2050 = vmatpush1.msra.mxu0 0.0
      %2051 = vmatprep.subr.mxu0 0.0
      %2052 = vmatpush1.msra.mxu0 0.0
      %2053 = vmatprep.subr.mxu0 0.0
      %2054 = vmatpush1.msra.mxu0 0.0
      %2055 = vmatprep.subr.mxu0 0.0
      %2056 = vmatpush1.msra.mxu0 0.0
      %2057 = vmatprep.subr.mxu0 0.0
      %2058 = vmatpush1.msra.mxu0 0.0
      %2059 = vmatprep.subr.mxu0 0.0
      %2060 = vmatpush1.msra.mxu0 0.0
      %2061 = vmatprep.subr.mxu0 0.0
      %2062 = vmatpush1.msra.mxu0 0.0
      %2063 = vmatprep.mubr.f32.mxu0 0.0
      %2064 = vmatmul.mubr.f32.gmra.mrb[0].mxu0 %v1997
      %v2065 = vpop.f32.mrb[0].mxu0
      %v2066 = vadd.f32 0.0, %v2065
      %v2067 = vpop.f32.mrb[0].mxu0
      %2068 = vdwg.mxu0
      %v2069 = vadd.f32 %v1993, %v2066
      %2070 = vst [vmem:[%s1763 + $0x2] sm:$0x3] %v2069
      %2071 = vst [vmem:[%s1763 + $0x4] sm:$0xc] %v2069
      %2072 = vst [vmem:[%s1763 + $0x6] sm:$0x30] %v2069
      %2073 = vst [vmem:[%s1763 + $0x8] sm:$0xc0] %v2069
      %s2074 = scalar_lea.vmem %s199, 192
      %v2075 = vld [vmem:[%s2074] sm:$0xff]
      %s2076 = scalar_lea.vmem %s199, 200
      %v2077 = vld [vmem:[%s2076] sm:$0xff]
      %v2079 = vsel %vm239, %v2077, 0
      %2081 = vmatprep.subr.mxu0 0.0
      %2082 = vmatpush1.msra.mxu0 %v222
      %2083 = vmatprep.subr.mxu0 0.0
      %2084 = vmatpush1.msra.mxu0 %v223
      %2085 = vmatprep.subr.mxu0 0.0
      %2086 = vmatpush1.msra.mxu0 %v224
      %2087 = vmatprep.subr.mxu0 0.0
      %2088 = vmatpush1.msra.mxu0 %v225
      %2089 = vmatprep.subr.mxu0 0.0
      %2090 = vmatpush1.msra.mxu0 0.0
      %2091 = vmatprep.subr.mxu0 0.0
      %2092 = vmatpush1.msra.mxu0 0.0
      %2093 = vmatprep.subr.mxu0 0.0
      %2094 = vmatpush1.msra.mxu0 0.0
      %2095 = vmatprep.subr.mxu0 0.0
      %2096 = vmatpush1.msra.mxu0 0.0
      %2097 = vmatprep.subr.mxu0 0.0
      %2098 = vmatpush1.msra.mxu0 0.0
      %2099 = vmatprep.subr.mxu0 0.0
      %2100 = vmatpush1.msra.mxu0 0.0
      %2101 = vmatprep.subr.mxu0 0.0
      %2102 = vmatpush1.msra.mxu0 0.0
      %2103 = vmatprep.subr.mxu0 0.0
      %2104 = vmatpush1.msra.mxu0 0.0
      %2105 = vmatprep.subr.mxu0 0.0
      %2106 = vmatpush1.msra.mxu0 0.0
      %2107 = vmatprep.subr.mxu0 0.0
      %2108 = vmatpush1.msra.mxu0 0.0
      %2109 = vmatprep.subr.mxu0 0.0
      %2110 = vmatpush1.msra.mxu0 0.0
      %2111 = vmatprep.subr.mxu0 0.0
      %2112 = vmatpush1.msra.mxu0 0.0
      %2113 = vmatprep.subr.mxu0 0.0
      %2114 = vmatpush1.msra.mxu0 0.0
      %2115 = vmatprep.subr.mxu0 0.0
      %2116 = vmatpush1.msra.mxu0 0.0
      %2117 = vmatprep.subr.mxu0 0.0
      %2118 = vmatpush1.msra.mxu0 0.0
      %2119 = vmatprep.subr.mxu0 0.0
      %2120 = vmatpush1.msra.mxu0 0.0
      %2121 = vmatprep.subr.mxu0 0.0
      %2122 = vmatpush1.msra.mxu0 0.0
      %2123 = vmatprep.subr.mxu0 0.0
      %2124 = vmatpush1.msra.mxu0 0.0
      %2125 = vmatprep.subr.mxu0 0.0
      %2126 = vmatpush1.msra.mxu0 0.0
      %2127 = vmatprep.subr.mxu0 0.0
      %2128 = vmatpush1.msra.mxu0 0.0
      %2129 = vmatprep.subr.mxu0 0.0
      %2130 = vmatpush1.msra.mxu0 0.0
      %2131 = vmatprep.subr.mxu0 0.0
      %2132 = vmatpush1.msra.mxu0 0.0
      %2133 = vmatprep.subr.mxu0 0.0
      %2134 = vmatpush1.msra.mxu0 0.0
      %2135 = vmatprep.subr.mxu0 0.0
      %2136 = vmatpush1.msra.mxu0 0.0
      %2137 = vmatprep.subr.mxu0 0.0
      %2138 = vmatpush1.msra.mxu0 0.0
      %2139 = vmatprep.subr.mxu0 0.0
      %2140 = vmatpush1.msra.mxu0 0.0
      %2141 = vmatprep.subr.mxu0 0.0
      %2142 = vmatpush1.msra.mxu0 0.0
      %2143 = vmatprep.subr.mxu0 0.0
      %2144 = vmatpush1.msra.mxu0 0.0
      %2145 = vmatprep.mubr.f32.mxu0 0.0
      %2146 = vmatmul.mubr.f32.gmra.mrb[0].mxu0 %v2079
      %v2147 = vpop.f32.mrb[0].mxu0
      %v2148 = vadd.f32 0.0, %v2147
      %v2149 = vpop.f32.mrb[0].mxu0
      %2150 = vdwg.mxu0
      %v2152 = vsel %vm239, %v2075, 0
      %2154 = vmatprep.subr.mxu0 0.0
      %2155 = vmatpush1.msra.mxu0 %v217
      %2156 = vmatprep.subr.mxu0 0.0
      %2157 = vmatpush1.msra.mxu0 %v218
      %2158 = vmatprep.subr.mxu0 0.0
      %2159 = vmatpush1.msra.mxu0 %v219
      %2160 = vmatprep.subr.mxu0 0.0
      %2161 = vmatpush1.msra.mxu0 %v220
      %2162 = vmatprep.subr.mxu0 0.0
      %2163 = vmatpush1.msra.mxu0 0.0
      %2164 = vmatprep.subr.mxu0 0.0
      %2165 = vmatpush1.msra.mxu0 0.0
      %2166 = vmatprep.subr.mxu0 0.0
      %2167 = vmatpush1.msra.mxu0 0.0
      %2168 = vmatprep.subr.mxu0 0.0
      %2169 = vmatpush1.msra.mxu0 0.0
      %2170 = vmatprep.subr.mxu0 0.0
      %2171 = vmatpush1.msra.mxu0 0.0
      %2172 = vmatprep.subr.mxu0 0.0
      %2173 = vmatpush1.msra.mxu0 0.0
      %2174 = vmatprep.subr.mxu0 0.0
      %2175 = vmatpush1.msra.mxu0 0.0
      %2176 = vmatprep.subr.mxu0 0.0
      %2177 = vmatpush1.msra.mxu0 0.0
      %2178 = vmatprep.subr.mxu0 0.0
      %2179 = vmatpush1.msra.mxu0 0.0
      %2180 = vmatprep.subr.mxu0 0.0
      %2181 = vmatpush1.msra.mxu0 0.0
      %2182 = vmatprep.subr.mxu0 0.0
      %2183 = vmatpush1.msra.mxu0 0.0
      %2184 = vmatprep.subr.mxu0 0.0
      %2185 = vmatpush1.msra.mxu0 0.0
      %2186 = vmatprep.subr.mxu0 0.0
      %2187 = vmatpush1.msra.mxu0 0.0
      %2188 = vmatprep.subr.mxu0 0.0
      %2189 = vmatpush1.msra.mxu0 0.0
      %2190 = vmatprep.subr.mxu0 0.0
      %2191 = vmatpush1.msra.mxu0 0.0
      %2192 = vmatprep.subr.mxu0 0.0
      %2193 = vmatpush1.msra.mxu0 0.0
      %2194 = vmatprep.subr.mxu0 0.0
      %2195 = vmatpush1.msra.mxu0 0.0
      %2196 = vmatprep.subr.mxu0 0.0
      %2197 = vmatpush1.msra.mxu0 0.0
      %2198 = vmatprep.subr.mxu0 0.0
      %2199 = vmatpush1.msra.mxu0 0.0
      %2200 = vmatprep.subr.mxu0 0.0
      %2201 = vmatpush1.msra.mxu0 0.0
      %2202 = vmatprep.subr.mxu0 0.0
      %2203 = vmatpush1.msra.mxu0 0.0
      %2204 = vmatprep.subr.mxu0 0.0
      %2205 = vmatpush1.msra.mxu0 0.0
      %2206 = vmatprep.subr.mxu0 0.0
      %2207 = vmatpush1.msra.mxu0 0.0
      %2208 = vmatprep.subr.mxu0 0.0
      %2209 = vmatpush1.msra.mxu0 0.0
      %2210 = vmatprep.subr.mxu0 0.0
      %2211 = vmatpush1.msra.mxu0 0.0
      %2212 = vmatprep.subr.mxu0 0.0
      %2213 = vmatpush1.msra.mxu0 0.0
      %2214 = vmatprep.subr.mxu0 0.0
      %2215 = vmatpush1.msra.mxu0 0.0
      %2216 = vmatprep.subr.mxu0 0.0
      %2217 = vmatpush1.msra.mxu0 0.0
      %2218 = vmatprep.mubr.f32.mxu0 0.0
      %2219 = vmatmul.mubr.f32.gmra.mrb[0].mxu0 %v2152
      %v2220 = vpop.f32.mrb[0].mxu0
      %v2221 = vadd.f32 %v2148, %v2220
      %v2222 = vpop.f32.mrb[0].mxu0
      %2223 = vdwg.mxu0
      %s2224 = scalar_lea.vmem %s199, 208
      %v2225 = vld [vmem:[%s2224] sm:$0xff]
      %v2227 = vsel %vm239, %v2225, 0
      %2229 = vmatprep.subr.mxu0 0.0
      %2230 = vmatpush1.msra.mxu0 %v227
      %2231 = vmatprep.subr.mxu0 0.0
      %2232 = vmatpush1.msra.mxu0 %v228
      %2233 = vmatprep.subr.mxu0 0.0
      %2234 = vmatpush1.msra.mxu0 %v229
      %2235 = vmatprep.subr.mxu0 0.0
      %2236 = vmatpush1.msra.mxu0 %v230
      %2237 = vmatprep.subr.mxu0 0.0
      %2238 = vmatpush1.msra.mxu0 0.0
      %2239 = vmatprep.subr.mxu0 0.0
      %2240 = vmatpush1.msra.mxu0 0.0
      %2241 = vmatprep.subr.mxu0 0.0
      %2242 = vmatpush1.msra.mxu0 0.0
      %2243 = vmatprep.subr.mxu0 0.0
      %2244 = vmatpush1.msra.mxu0 0.0
      %2245 = vmatprep.subr.mxu0 0.0
      %2246 = vmatpush1.msra.mxu0 0.0
      %2247 = vmatprep.subr.mxu0 0.0
      %2248 = vmatpush1.msra.mxu0 0.0
      %2249 = vmatprep.subr.mxu0 0.0
      %2250 = vmatpush1.msra.mxu0 0.0
      %2251 = vmatprep.subr.mxu0 0.0
      %2252 = vmatpush1.msra.mxu0 0.0
      %2253 = vmatprep.subr.mxu0 0.0
      %2254 = vmatpush1.msra.mxu0 0.0
      %2255 = vmatprep.subr.mxu0 0.0
      %2256 = vmatpush1.msra.mxu0 0.0
      %2257 = vmatprep.subr.mxu0 0.0
      %2258 = vmatpush1.msra.mxu0 0.0
      %2259 = vmatprep.subr.mxu0 0.0
      %2260 = vmatpush1.msra.mxu0 0.0
      %2261 = vmatprep.subr.mxu0 0.0
      %2262 = vmatpush1.msra.mxu0 0.0
      %2263 = vmatprep.subr.mxu0 0.0
      %2264 = vmatpush1.msra.mxu0 0.0
      %2265 = vmatprep.subr.mxu0 0.0
      %2266 = vmatpush1.msra.mxu0 0.0
      %2267 = vmatprep.subr.mxu0 0.0
      %2268 = vmatpush1.msra.mxu0 0.0
      %2269 = vmatprep.subr.mxu0 0.0
      %2270 = vmatpush1.msra.mxu0 0.0
      %2271 = vmatprep.subr.mxu0 0.0
      %2272 = vmatpush1.msra.mxu0 0.0
      %2273 = vmatprep.subr.mxu0 0.0
      %2274 = vmatpush1.msra.mxu0 0.0
      %2275 = vmatprep.subr.mxu0 0.0
      %2276 = vmatpush1.msra.mxu0 0.0
      %2277 = vmatprep.subr.mxu0 0.0
      %2278 = vmatpush1.msra.mxu0 0.0
      %2279 = vmatprep.subr.mxu0 0.0
      %2280 = vmatpush1.msra.mxu0 0.0
      %2281 = vmatprep.subr.mxu0 0.0
      %2282 = vmatpush1.msra.mxu0 0.0
      %2283 = vmatprep.subr.mxu0 0.0
      %2284 = vmatpush1.msra.mxu0 0.0
      %2285 = vmatprep.subr.mxu0 0.0
      %2286 = vmatpush1.msra.mxu0 0.0
      %2287 = vmatprep.subr.mxu0 0.0
      %2288 = vmatpush1.msra.mxu0 0.0
      %2289 = vmatprep.subr.mxu0 0.0
      %2290 = vmatpush1.msra.mxu0 0.0
      %2291 = vmatprep.subr.mxu0 0.0
      %2292 = vmatpush1.msra.mxu0 0.0
      %2293 = vmatprep.mubr.f32.mxu0 0.0
      %2294 = vmatmul.mubr.f32.gmra.mrb[0].mxu0 %v2227
      %v2295 = vpop.f32.mrb[0].mxu0
      %v2296 = vadd.f32 0.0, %v2295
      %v2297 = vpop.f32.mrb[0].mxu0
      %2298 = vdwg.mxu0
      %v2299 = vadd.f32 %v2221, %v2296
      %s2300 = scalar_lea.vmem %s199, 216
      %v2301 = vld [vmem:[%s2300] sm:$0xff]
      %v2303 = vsel %vm239, %v2301, 0
      %2305 = vmatprep.subr.mxu0 0.0
      %2306 = vmatpush1.msra.mxu0 %v232
      %2307 = vmatprep.subr.mxu0 0.0
      %2308 = vmatpush1.msra.mxu0 %v233
      %2309 = vmatprep.subr.mxu0 0.0
      %2310 = vmatpush1.msra.mxu0 %v234
      %2311 = vmatprep.subr.mxu0 0.0
      %2312 = vmatpush1.msra.mxu0 %v235
      %2313 = vmatprep.subr.mxu0 0.0
      %2314 = vmatpush1.msra.mxu0 0.0
      %2315 = vmatprep.subr.mxu0 0.0
      %2316 = vmatpush1.msra.mxu0 0.0
      %2317 = vmatprep.subr.mxu0 0.0
      %2318 = vmatpush1.msra.mxu0 0.0
      %2319 = vmatprep.subr.mxu0 0.0
      %2320 = vmatpush1.msra.mxu0 0.0
      %2321 = vmatprep.subr.mxu0 0.0
      %2322 = vmatpush1.msra.mxu0 0.0
      %2323 = vmatprep.subr.mxu0 0.0
      %2324 = vmatpush1.msra.mxu0 0.0
      %2325 = vmatprep.subr.mxu0 0.0
      %2326 = vmatpush1.msra.mxu0 0.0
      %2327 = vmatprep.subr.mxu0 0.0
      %2328 = vmatpush1.msra.mxu0 0.0
      %2329 = vmatprep.subr.mxu0 0.0
      %2330 = vmatpush1.msra.mxu0 0.0
      %2331 = vmatprep.subr.mxu0 0.0
      %2332 = vmatpush1.msra.mxu0 0.0
      %2333 = vmatprep.subr.mxu0 0.0
      %2334 = vmatpush1.msra.mxu0 0.0
      %2335 = vmatprep.subr.mxu0 0.0
      %2336 = vmatpush1.msra.mxu0 0.0
      %2337 = vmatprep.subr.mxu0 0.0
      %2338 = vmatpush1.msra.mxu0 0.0
      %2339 = vmatprep.subr.mxu0 0.0
      %2340 = vmatpush1.msra.mxu0 0.0
      %2341 = vmatprep.subr.mxu0 0.0
      %2342 = vmatpush1.msra.mxu0 0.0
      %2343 = vmatprep.subr.mxu0 0.0
      %2344 = vmatpush1.msra.mxu0 0.0
      %2345 = vmatprep.subr.mxu0 0.0
      %2346 = vmatpush1.msra.mxu0 0.0
      %2347 = vmatprep.subr.mxu0 0.0
      %2348 = vmatpush1.msra.mxu0 0.0
      %2349 = vmatprep.subr.mxu0 0.0
      %2350 = vmatpush1.msra.mxu0 0.0
      %2351 = vmatprep.subr.mxu0 0.0
      %2352 = vmatpush1.msra.mxu0 0.0
      %2353 = vmatprep.subr.mxu0 0.0
      %2354 = vmatpush1.msra.mxu0 0.0
      %2355 = vmatprep.subr.mxu0 0.0
      %2356 = vmatpush1.msra.mxu0 0.0
      %2357 = vmatprep.subr.mxu0 0.0
      %2358 = vmatpush1.msra.mxu0 0.0
      %2359 = vmatprep.subr.mxu0 0.0
      %2360 = vmatpush1.msra.mxu0 0.0
      %2361 = vmatprep.subr.mxu0 0.0
      %2362 = vmatpush1.msra.mxu0 0.0
      %2363 = vmatprep.subr.mxu0 0.0
      %2364 = vmatpush1.msra.mxu0 0.0
      %2365 = vmatprep.subr.mxu0 0.0
      %2366 = vmatpush1.msra.mxu0 0.0
      %2367 = vmatprep.subr.mxu0 0.0
      %2368 = vmatpush1.msra.mxu0 0.0
      %2369 = vmatprep.mubr.f32.mxu0 0.0
      %2370 = vmatmul.mubr.f32.gmra.mrb[0].mxu0 %v2303
      %v2371 = vpop.f32.mrb[0].mxu0
      %v2372 = vadd.f32 0.0, %v2371
      %v2373 = vpop.f32.mrb[0].mxu0
      %2374 = vdwg.mxu0
      %v2375 = vadd.f32 %v2299, %v2372
      %s2376 = scalar_lea.vmem %s214, 48
      %2377 = vst [vmem:[%s2376] sm:$0x3] %v2375
      %2378 = vst [vmem:[%s2376 + $0x2] sm:$0xc] %v2375
      %2379 = vst [vmem:[%s2376 + $0x4] sm:$0x30] %v2375
      %2380 = vst [vmem:[%s2376 + $0x6] sm:$0xc0] %v2375
      %s2381 = scalar_lea.vmem %s199, 224
      %v2382 = vld [vmem:[%s2381] sm:$0xff]
      %s2383 = scalar_lea.vmem %s199, 232
      %v2384 = vld [vmem:[%s2383] sm:$0xff]
      %v2386 = vsel %vm239, %v2384, 0
      %2388 = vmatprep.subr.mxu0 0.0
      %2389 = vmatpush1.msra.mxu0 %v222
      %2390 = vmatprep.subr.mxu0 0.0
      %2391 = vmatpush1.msra.mxu0 %v223
      %2392 = vmatprep.subr.mxu0 0.0
      %2393 = vmatpush1.msra.mxu0 %v224
      %2394 = vmatprep.subr.mxu0 0.0
      %2395 = vmatpush1.msra.mxu0 %v225
      %2396 = vmatprep.subr.mxu0 0.0
      %2397 = vmatpush1.msra.mxu0 0.0
      %2398 = vmatprep.subr.mxu0 0.0
      %2399 = vmatpush1.msra.mxu0 0.0
      %2400 = vmatprep.subr.mxu0 0.0
      %2401 = vmatpush1.msra.mxu0 0.0
      %2402 = vmatprep.subr.mxu0 0.0
      %2403 = vmatpush1.msra.mxu0 0.0
      %2404 = vmatprep.subr.mxu0 0.0
      %2405 = vmatpush1.msra.mxu0 0.0
      %2406 = vmatprep.subr.mxu0 0.0
      %2407 = vmatpush1.msra.mxu0 0.0
      %2408 = vmatprep.subr.mxu0 0.0
      %2409 = vmatpush1.msra.mxu0 0.0
      %2410 = vmatprep.subr.mxu0 0.0
      %2411 = vmatpush1.msra.mxu0 0.0
      %2412 = vmatprep.subr.mxu0 0.0
      %2413 = vmatpush1.msra.mxu0 0.0
      %2414 = vmatprep.subr.mxu0 0.0
      %2415 = vmatpush1.msra.mxu0 0.0
      %2416 = vmatprep.subr.mxu0 0.0
      %2417 = vmatpush1.msra.mxu0 0.0
      %2418 = vmatprep.subr.mxu0 0.0
      %2419 = vmatpush1.msra.mxu0 0.0
      %2420 = vmatprep.subr.mxu0 0.0
      %2421 = vmatpush1.msra.mxu0 0.0
      %2422 = vmatprep.subr.mxu0 0.0
      %2423 = vmatpush1.msra.mxu0 0.0
      %2424 = vmatprep.subr.mxu0 0.0
      %2425 = vmatpush1.msra.mxu0 0.0
      %2426 = vmatprep.subr.mxu0 0.0
      %2427 = vmatpush1.msra.mxu0 0.0
      %2428 = vmatprep.subr.mxu0 0.0
      %2429 = vmatpush1.msra.mxu0 0.0
      %2430 = vmatprep.subr.mxu0 0.0
      %2431 = vmatpush1.msra.mxu0 0.0
      %2432 = vmatprep.subr.mxu0 0.0
      %2433 = vmatpush1.msra.mxu0 0.0
      %2434 = vmatprep.subr.mxu0 0.0
      %2435 = vmatpush1.msra.mxu0 0.0
      %2436 = vmatprep.subr.mxu0 0.0
      %2437 = vmatpush1.msra.mxu0 0.0
      %2438 = vmatprep.subr.mxu0 0.0
      %2439 = vmatpush1.msra.mxu0 0.0
      %2440 = vmatprep.subr.mxu0 0.0
      %2441 = vmatpush1.msra.mxu0 0.0
      %2442 = vmatprep.subr.mxu0 0.0
      %2443 = vmatpush1.msra.mxu0 0.0
      %2444 = vmatprep.subr.mxu0 0.0
      %2445 = vmatpush1.msra.mxu0 0.0
      %2446 = vmatprep.subr.mxu0 0.0
      %2447 = vmatpush1.msra.mxu0 0.0
      %2448 = vmatprep.subr.mxu0 0.0
      %2449 = vmatpush1.msra.mxu0 0.0
      %2450 = vmatprep.subr.mxu0 0.0
      %2451 = vmatpush1.msra.mxu0 0.0
      %2452 = vmatprep.mubr.f32.mxu0 0.0
      %2453 = vmatmul.mubr.f32.gmra.mrb[0].mxu0 %v2386
      %v2454 = vpop.f32.mrb[0].mxu0
      %v2455 = vadd.f32 0.0, %v2454
      %v2456 = vpop.f32.mrb[0].mxu0
      %2457 = vdwg.mxu0
      %v2459 = vsel %vm239, %v2382, 0
      %2461 = vmatprep.subr.mxu0 0.0
      %2462 = vmatpush1.msra.mxu0 %v217
      %2463 = vmatprep.subr.mxu0 0.0
      %2464 = vmatpush1.msra.mxu0 %v218
      %2465 = vmatprep.subr.mxu0 0.0
      %2466 = vmatpush1.msra.mxu0 %v219
      %2467 = vmatprep.subr.mxu0 0.0
      %2468 = vmatpush1.msra.mxu0 %v220
      %2469 = vmatprep.subr.mxu0 0.0
      %2470 = vmatpush1.msra.mxu0 0.0
      %2471 = vmatprep.subr.mxu0 0.0
      %2472 = vmatpush1.msra.mxu0 0.0
      %2473 = vmatprep.subr.mxu0 0.0
      %2474 = vmatpush1.msra.mxu0 0.0
      %2475 = vmatprep.subr.mxu0 0.0
      %2476 = vmatpush1.msra.mxu0 0.0
      %2477 = vmatprep.subr.mxu0 0.0
      %2478 = vmatpush1.msra.mxu0 0.0
      %2479 = vmatprep.subr.mxu0 0.0
      %2480 = vmatpush1.msra.mxu0 0.0
      %2481 = vmatprep.subr.mxu0 0.0
      %2482 = vmatpush1.msra.mxu0 0.0
      %2483 = vmatprep.subr.mxu0 0.0
      %2484 = vmatpush1.msra.mxu0 0.0
      %2485 = vmatprep.subr.mxu0 0.0
      %2486 = vmatpush1.msra.mxu0 0.0
      %2487 = vmatprep.subr.mxu0 0.0
      %2488 = vmatpush1.msra.mxu0 0.0
      %2489 = vmatprep.subr.mxu0 0.0
      %2490 = vmatpush1.msra.mxu0 0.0
      %2491 = vmatprep.subr.mxu0 0.0
      %2492 = vmatpush1.msra.mxu0 0.0
      %2493 = vmatprep.subr.mxu0 0.0
      %2494 = vmatpush1.msra.mxu0 0.0
      %2495 = vmatprep.subr.mxu0 0.0
      %2496 = vmatpush1.msra.mxu0 0.0
      %2497 = vmatprep.subr.mxu0 0.0
      %2498 = vmatpush1.msra.mxu0 0.0
      %2499 = vmatprep.subr.mxu0 0.0
      %2500 = vmatpush1.msra.mxu0 0.0
      %2501 = vmatprep.subr.mxu0 0.0
      %2502 = vmatpush1.msra.mxu0 0.0
      %2503 = vmatprep.subr.mxu0 0.0
      %2504 = vmatpush1.msra.mxu0 0.0
      %2505 = vmatprep.subr.mxu0 0.0
      %2506 = vmatpush1.msra.mxu0 0.0
      %2507 = vmatprep.subr.mxu0 0.0
      %2508 = vmatpush1.msra.mxu0 0.0
      %2509 = vmatprep.subr.mxu0 0.0
      %2510 = vmatpush1.msra.mxu0 0.0
      %2511 = vmatprep.subr.mxu0 0.0
      %2512 = vmatpush1.msra.mxu0 0.0
      %2513 = vmatprep.subr.mxu0 0.0
      %2514 = vmatpush1.msra.mxu0 0.0
      %2515 = vmatprep.subr.mxu0 0.0
      %2516 = vmatpush1.msra.mxu0 0.0
      %2517 = vmatprep.subr.mxu0 0.0
      %2518 = vmatpush1.msra.mxu0 0.0
      %2519 = vmatprep.subr.mxu0 0.0
      %2520 = vmatpush1.msra.mxu0 0.0
      %2521 = vmatprep.subr.mxu0 0.0
      %2522 = vmatpush1.msra.mxu0 0.0
      %2523 = vmatprep.subr.mxu0 0.0
      %2524 = vmatpush1.msra.mxu0 0.0
      %2525 = vmatprep.mubr.f32.mxu0 0.0
      %2526 = vmatmul.mubr.f32.gmra.mrb[0].mxu0 %v2459
      %v2527 = vpop.f32.mrb[0].mxu0
      %v2528 = vadd.f32 %v2455, %v2527
      %v2529 = vpop.f32.mrb[0].mxu0
      %2530 = vdwg.mxu0
      %s2531 = scalar_lea.vmem %s199, 240
      %v2532 = vld [vmem:[%s2531] sm:$0xff]
      %v2534 = vsel %vm239, %v2532, 0
      %2536 = vmatprep.subr.mxu0 0.0
      %2537 = vmatpush1.msra.mxu0 %v227
      %2538 = vmatprep.subr.mxu0 0.0
      %2539 = vmatpush1.msra.mxu0 %v228
      %2540 = vmatprep.subr.mxu0 0.0
      %2541 = vmatpush1.msra.mxu0 %v229
      %2542 = vmatprep.subr.mxu0 0.0
      %2543 = vmatpush1.msra.mxu0 %v230
      %2544 = vmatprep.subr.mxu0 0.0
      %2545 = vmatpush1.msra.mxu0 0.0
      %2546 = vmatprep.subr.mxu0 0.0
      %2547 = vmatpush1.msra.mxu0 0.0
      %2548 = vmatprep.subr.mxu0 0.0
      %2549 = vmatpush1.msra.mxu0 0.0
      %2550 = vmatprep.subr.mxu0 0.0
      %2551 = vmatpush1.msra.mxu0 0.0
      %2552 = vmatprep.subr.mxu0 0.0
      %2553 = vmatpush1.msra.mxu0 0.0
      %2554 = vmatprep.subr.mxu0 0.0
      %2555 = vmatpush1.msra.mxu0 0.0
      %2556 = vmatprep.subr.mxu0 0.0
      %2557 = vmatpush1.msra.mxu0 0.0
      %2558 = vmatprep.subr.mxu0 0.0
      %2559 = vmatpush1.msra.mxu0 0.0
      %2560 = vmatprep.subr.mxu0 0.0
      %2561 = vmatpush1.msra.mxu0 0.0
      %2562 = vmatprep.subr.mxu0 0.0
      %2563 = vmatpush1.msra.mxu0 0.0
      %2564 = vmatprep.subr.mxu0 0.0
      %2565 = vmatpush1.msra.mxu0 0.0
      %2566 = vmatprep.subr.mxu0 0.0
      %2567 = vmatpush1.msra.mxu0 0.0
      %2568 = vmatprep.subr.mxu0 0.0
      %2569 = vmatpush1.msra.mxu0 0.0
      %2570 = vmatprep.subr.mxu0 0.0
      %2571 = vmatpush1.msra.mxu0 0.0
      %2572 = vmatprep.subr.mxu0 0.0
      %2573 = vmatpush1.msra.mxu0 0.0
      %2574 = vmatprep.subr.mxu0 0.0
      %2575 = vmatpush1.msra.mxu0 0.0
      %2576 = vmatprep.subr.mxu0 0.0
      %2577 = vmatpush1.msra.mxu0 0.0
      %2578 = vmatprep.subr.mxu0 0.0
      %2579 = vmatpush1.msra.mxu0 0.0
      %2580 = vmatprep.subr.mxu0 0.0
      %2581 = vmatpush1.msra.mxu0 0.0
      %2582 = vmatprep.subr.mxu0 0.0
      %2583 = vmatpush1.msra.mxu0 0.0
      %2584 = vmatprep.subr.mxu0 0.0
      %2585 = vmatpush1.msra.mxu0 0.0
      %2586 = vmatprep.subr.mxu0 0.0
      %2587 = vmatpush1.msra.mxu0 0.0
      %2588 = vmatprep.subr.mxu0 0.0
      %2589 = vmatpush1.msra.mxu0 0.0
      %2590 = vmatprep.subr.mxu0 0.0
      %2591 = vmatpush1.msra.mxu0 0.0
      %2592 = vmatprep.subr.mxu0 0.0
      %2593 = vmatpush1.msra.mxu0 0.0
      %2594 = vmatprep.subr.mxu0 0.0
      %2595 = vmatpush1.msra.mxu0 0.0
      %2596 = vmatprep.subr.mxu0 0.0
      %2597 = vmatpush1.msra.mxu0 0.0
      %2598 = vmatprep.subr.mxu0 0.0
      %2599 = vmatpush1.msra.mxu0 0.0
      %2600 = vmatprep.mubr.f32.mxu0 0.0
      %2601 = vmatmul.mubr.f32.gmra.mrb[0].mxu0 %v2534
      %v2602 = vpop.f32.mrb[0].mxu0
      %v2603 = vadd.f32 0.0, %v2602
      %v2604 = vpop.f32.mrb[0].mxu0
      %2605 = vdwg.mxu0
      %v2606 = vadd.f32 %v2528, %v2603
      %s2607 = scalar_lea.vmem %s199, 248
      %v2608 = vld [vmem:[%s2607] sm:$0xff]
      %v2610 = vsel %vm239, %v2608, 0
      %2612 = vmatprep.subr.mxu0 0.0
      %2613 = vmatpush1.msra.mxu0 %v232
      %2614 = vmatprep.subr.mxu0 0.0
      %2615 = vmatpush1.msra.mxu0 %v233
      %2616 = vmatprep.subr.mxu0 0.0
      %2617 = vmatpush1.msra.mxu0 %v234
      %2618 = vmatprep.subr.mxu0 0.0
      %2619 = vmatpush1.msra.mxu0 %v235
      %2620 = vmatprep.subr.mxu0 0.0
      %2621 = vmatpush1.msra.mxu0 0.0
      %2622 = vmatprep.subr.mxu0 0.0
      %2623 = vmatpush1.msra.mxu0 0.0
      %2624 = vmatprep.subr.mxu0 0.0
      %2625 = vmatpush1.msra.mxu0 0.0
      %2626 = vmatprep.subr.mxu0 0.0
      %2627 = vmatpush1.msra.mxu0 0.0
      %2628 = vmatprep.subr.mxu0 0.0
      %2629 = vmatpush1.msra.mxu0 0.0
      %2630 = vmatprep.subr.mxu0 0.0
      %2631 = vmatpush1.msra.mxu0 0.0
      %2632 = vmatprep.subr.mxu0 0.0
      %2633 = vmatpush1.msra.mxu0 0.0
      %2634 = vmatprep.subr.mxu0 0.0
      %2635 = vmatpush1.msra.mxu0 0.0
      %2636 = vmatprep.subr.mxu0 0.0
      %2637 = vmatpush1.msra.mxu0 0.0
      %2638 = vmatprep.subr.mxu0 0.0
      %2639 = vmatpush1.msra.mxu0 0.0
      %2640 = vmatprep.subr.mxu0 0.0
      %2641 = vmatpush1.msra.mxu0 0.0
      %2642 = vmatprep.subr.mxu0 0.0
      %2643 = vmatpush1.msra.mxu0 0.0
      %2644 = vmatprep.subr.mxu0 0.0
      %2645 = vmatpush1.msra.mxu0 0.0
      %2646 = vmatprep.subr.mxu0 0.0
      %2647 = vmatpush1.msra.mxu0 0.0
      %2648 = vmatprep.subr.mxu0 0.0
      %2649 = vmatpush1.msra.mxu0 0.0
      %2650 = vmatprep.subr.mxu0 0.0
      %2651 = vmatpush1.msra.mxu0 0.0
      %2652 = vmatprep.subr.mxu0 0.0
      %2653 = vmatpush1.msra.mxu0 0.0
      %2654 = vmatprep.subr.mxu0 0.0
      %2655 = vmatpush1.msra.mxu0 0.0
      %2656 = vmatprep.subr.mxu0 0.0
      %2657 = vmatpush1.msra.mxu0 0.0
      %2658 = vmatprep.subr.mxu0 0.0
      %2659 = vmatpush1.msra.mxu0 0.0
      %2660 = vmatprep.subr.mxu0 0.0
      %2661 = vmatpush1.msra.mxu0 0.0
      %2662 = vmatprep.subr.mxu0 0.0
      %2663 = vmatpush1.msra.mxu0 0.0
      %2664 = vmatprep.subr.mxu0 0.0
      %2665 = vmatpush1.msra.mxu0 0.0
      %2666 = vmatprep.subr.mxu0 0.0
      %2667 = vmatpush1.msra.mxu0 0.0
      %2668 = vmatprep.subr.mxu0 0.0
      %2669 = vmatpush1.msra.mxu0 0.0
      %2670 = vmatprep.subr.mxu0 0.0
      %2671 = vmatpush1.msra.mxu0 0.0
      %2672 = vmatprep.subr.mxu0 0.0
      %2673 = vmatpush1.msra.mxu0 0.0
      %2674 = vmatprep.subr.mxu0 0.0
      %2675 = vmatpush1.msra.mxu0 0.0
      %2676 = vmatprep.mubr.f32.mxu0 0.0
      %2677 = vmatmul.mubr.f32.gmra.mrb[0].mxu0 %v2610
      %v2678 = vpop.f32.mrb[0].mxu0
      %v2679 = vadd.f32 0.0, %v2678
      %v2680 = vpop.f32.mrb[0].mxu0
      %2681 = vdwg.mxu0
      %v2682 = vadd.f32 %v2606, %v2679
      %2683 = vst [vmem:[%s2376 + $0x2] sm:$0x3] %v2682
      %2684 = vst [vmem:[%s2376 + $0x4] sm:$0xc] %v2682
      %2685 = vst [vmem:[%s2376 + $0x6] sm:$0x30] %v2682
      %2686 = vst [vmem:[%s2376 + $0x8] sm:$0xc0] %v2682
      %s2687 = smul.u32 4, %s19
      %s2688 = smul.u32 2, %s20
      %p2689 = scmp.lt.s32.totalorder %s18, 1
      %s2690 = scalar_select %p2689, %s18, 1
      %p2691 = scmp.lt.s32.totalorder %s2687, 3
      %s2692 = scalar_select %p2691, %s2687, 3
      %p2693 = scmp.lt.s32.totalorder %s2688, 1
      %s2694 = scalar_select %p2693, %s2688, 1
      %s2695 = smul.addr %s2692, 2
      %s2696 = sadd.s32 %s2694, %s2695
      %s2697 = smul.addr %s2690, 8
      %s2698 = sadd.s32 %s2696, %s2697
      %s2699 = smul.addr %s2698, 8
      %s2700 = scalar_lea.vmem %s2, %s2699
      // Predicated region
      $region29: #{pixel_shuffle3d.1} parent=27 // pred_check
        %p2701 = pneg %p105
      $region30: #{pixel_shuffle3d.1} parent=27 // pred_check_branch
        %2703 = sbr.rel (%p2701) target = $region32
      $region31: #{pixel_shuffle3d.1} parent=27 // pred_region
        %s2704 = smul.u32 4, %s19
        %s2705 = smul.u32 2, %s20
      $region32: #{pixel_shuffle3d.1} parent=27 // pred_fallthru
        _
    $region28: #{pixel_shuffle3d.1} parent=5 // pred_fallthru
      _
    %p2706 = scmp.le.s32.totalorder 2, %s8
    // Predicated region
    $region33: #{pixel_shuffle3d.1} parent=5 // pred_check
      %p2707 = pneg %p2706
    $region34: #{pixel_shuffle3d.1} parent=5 // pred_check_branch
      %2709 = sbr.rel (%p2707) target = $region36
    $region35: #{pixel_shuffle3d.1} parent=5 // pred_region
      %s2710 = ssub.s32 %s8, 2
      // Predicated region
      $region37: #{pixel_shuffle3d.1} parent=35 // pred_check
        %p2711 = pneg %p111
      $region38: #{pixel_shuffle3d.1} parent=35 // pred_check_branch
        %2713 = sbr.rel (%p2711) target = $region40
      $region39: #{pixel_shuffle3d.1} parent=35 // pred_region
        %s2714 = smul.u32 4, %s22
        %s2715 = smul.u32 2, %s23
        %p2716 = scmp.lt.s32.totalorder %s21, 1
        %s2717 = scalar_select %p2716, %s21, 1
        %p2718 = scmp.lt.s32.totalorder %s2714, 3
        %s2719 = scalar_select %p2718, %s2714, 3
        %p2720 = scmp.lt.s32.totalorder %s2715, 1
        %s2721 = scalar_select %p2720, %s2715, 1
        %s2722 = smul.addr %s2719, 2
        %s2723 = sadd.s32 %s2721, %s2722
        %s2724 = smul.addr %s2717, 8
        %s2725 = sadd.s32 %s2723, %s2724
        %s2726 = smul.addr %s2725, 8
        %s2727 = scalar_lea.vmem %s2, %s2726
      $region40: #{pixel_shuffle3d.1} parent=35 // pred_fallthru
        _
    $region36: #{pixel_shuffle3d.1} parent=5 // pred_fallthru
      _
  $region6: #{pixel_shuffle3d.1} parent=0 // loop_footer
    %s12 = sadd.s32 1, %s8
  $region7: #{pixel_shuffle3d.1} parent=0 // loop_footer_branch
    %7 = sbr.rel target = $region3
  $region8: #{pixel_shuffle3d.1} parent=0 // loop_exit
    _

</llo_original>
